<compile_context>
chip_gen: v6e
topology: v6e:2x2x1
jax: 0.10.0
libtpu: 0.0.40
codegen_flags: <defaults>
</compile_context>

<pallas_src>
import functools

import jax
import jax.numpy as jnp
from jax.experimental import pallas as pl
from jax.experimental.pallas import tpu as pltpu


# ----------------------------------------------------------------------------
# Host-side layout plumbing: TF 'SAME' pad + stride-phase decomposition of the
# (small, pre-expansion) input.  Lw is rounded up to a multiple of 8 so the
# in-kernel (rows, C) -> (phases, Lh, Lw, C) un-flatten is layout-trivial.
# ----------------------------------------------------------------------------
def _same_pad_amounts(size, k, stride):
    out = (size + stride - 1) // stride          # TF 'SAME' output size
    pad = max(0, (out - 1) * stride + k - size)
    return out, pad // 2


def _pad_phase_decompose(x, k, stride):
    """x: [N,H,W,C] -> (xph2: [N, ss*Lh*Lw, C], dims dict)."""
    N, H, W, C = x.shape
    Ho, pt = _same_pad_amounts(H, k, stride)
    Wo, pleft = _same_pad_amounts(W, k, stride)
    Lh = Ho + (k - 1) // stride
    Lw = Wo + (k - 1) // stride
    Lw = ((Lw + 7) // 8) * 8                     # round to sublane multiple (extra cols are zero)
    x_pad = jnp.pad(
        x,
        ((0, 0),
         (pt, stride * Lh - H - pt),
         (pleft, stride * Lw - W - pleft),
         (0, 0)),
    )
    # x_pad[n, lh*stride + p, lw*stride + q, c] -> xph[n, p*stride + q, lh, lw, c]
    xph = x_pad.reshape(N, Lh, stride, Lw, stride, C).transpose(0, 2, 4, 1, 3, 5)
    xph2 = xph.reshape(N, stride * stride * Lh * Lw, C)
    return xph2, dict(Ho=Ho, Wo=Wo, Lh=Lh, Lw=Lw, ss=stride * stride)


# ----------------------------------------------------------------------------
# Fused MBConv kernel: expand 1x1 + BN + Swish -> depthwise kxk + BN + Swish
#                      -> Squeeze-Excite -> project 1x1 + BN -> (+ residual)
# One grid step = one image; everything stays on-chip between stages.
# ----------------------------------------------------------------------------
def _mbconv_kernel(*refs, k, stride, Ho, Wo, Lh, Lw, ss, has_expand, has_se, do_skip):
    it = iter(refs)
    xph_ref = next(it)           # (1, ss*Lh*Lw, Cin): padded + stride-phase-decomposed input
    mask_ref = next(it)          # (ss*Lh*Lw, 1): 1 on real pixels, 0 on SAME padding
    if has_expand:
        ew_ref, eb_ref = next(it), next(it)
    dw_ref, db_ref = next(it), next(it)
    if has_se:
        sw1_ref, sb1_ref, sw2_ref, sb2_ref = next(it), next(it), next(it), next(it)
    pw_ref, pb_ref = next(it), next(it)
    res_ref = next(it) if do_skip else None
    o_ref = next(it)

    # --- expand 1x1 conv (BN scale folded into weight) + Swish; per-pixel => layout agnostic ---
    x2 = xph_ref[0].astype(jnp.float32)                                   # (M2, Cin)
    if has_expand:
        e2 = jnp.dot(x2, ew_ref[...], preferred_element_type=jnp.float32) + eb_ref[...]
        e2 = e2 * jax.nn.sigmoid(e2)                                      # Swish
        e2 = e2 * mask_ref[...]                                           # re-zero padded positions
    else:
        e2 = x2                                                           # expand == 1: identity
    mid = e2.shape[-1]
    # Layout-trivial un-flatten: Lw % 8 == 0 and the channel (lane) dim is unchanged.
    e4 = e2.reshape(ss, Lh, Lw, mid)

    # --- depthwise kxk conv (stride handled by the phase decomposition) + BN + Swish ---
    acc = jnp.zeros((Ho, Wo, mid), jnp.float32)
    for kh in range(k):
        for kw in range(k):
            ph = (kh % stride) * stride + (kw % stride)
            dh, dw = kh // stride, kw // stride
            acc = acc + e4[ph, dh:dh + Ho, dw:dw + Wo, :] * dw_ref[kh * k + kw, :]
    y = acc + db_ref[0, :]
    y = y * jax.nn.sigmoid(y)                                             # Swish

    # --- Squeeze-and-Excite, fused (pool + two tiny FCs + sigmoid gate, in-register) ---
    if has_se:
        pooled = jnp.mean(y, axis=(0, 1)).reshape(1, mid)                 # AdaptiveAvgPool2d(1)
        s = jnp.dot(pooled, sw1_ref[...], preferred_element_type=jnp.float32) + sb1_ref[...]
        s = s * jax.nn.sigmoid(s)                                         # Swish
        s = jnp.dot(s, sw2_ref[...], preferred_element_type=jnp.float32) + sb2_ref[...]
        y = y * jax.nn.sigmoid(s).reshape(1, 1, mid)

    # --- project 1x1 conv + BN (no activation) + residual ---
    y2 = y.reshape(Ho * Wo, mid)
    out = jnp.dot(y2, pw_ref[...], preferred_element_type=jnp.float32) + pb_ref[...]
    if do_skip:
        out = out + res_ref[0].astype(jnp.float32)
    o_ref[0] = out.astype(o_ref.dtype)


def _bcast_spec(arr):
    """Full-array block, identical for every grid step (weights / biases / mask)."""
    return pl.BlockSpec(arr.shape, lambda n: (0, 0))


def mbconv_forward(x, p, *, kernel, stride, skip):
    """One fused MBConv layer.  x: [N,H,W,Cin] (NHWC, f32)."""
    N, H, W, Cin = x.shape
    Cout = p["proj_w"].shape[1]
    has_expand = "exp_w" in p
    has_se = "se_w1" in p
    do_skip = bool(skip and stride == 1 and Cin == Cout)

    xph2, d = _pad_phase_decompose(x, kernel, stride)
    Ho, Wo, Lh, Lw, ss = d["Ho"], d["Wo"], d["Lh"], d["Lw"], d["ss"]
    M2 = ss * Lh * Lw
    # Padding in the reference module is applied AFTER the expand conv, so padded positions
    # must be exactly zero in expanded-activation space -> mask of "real" positions.
    mask2 = _pad_phase_decompose(jnp.ones((1, H, W, 1), x.dtype), kernel, stride)[0][0]

    args, in_specs = [], []

    def add(a, spec):
        args.append(a)
        in_specs.append(spec)

    add(xph2, pl.BlockSpec((1, M2, Cin), lambda n: (n, 0, 0)))
    add(mask2, _bcast_spec(mask2))
    if has_expand:
        add(p["exp_w"], _bcast_spec(p["exp_w"]))
        add(p["exp_b"], _bcast_spec(p["exp_b"]))
    add(p["dw_w"], _bcast_spec(p["dw_w"]))
    add(p["dw_b"], _bcast_spec(p["dw_b"]))
    if has_se:
        for name in ("se_w1", "se_b1", "se_w2", "se_b2"):
            add(p[name], _bcast_spec(p[name]))
    add(p["proj_w"], _bcast_spec(p["proj_w"]))
    add(p["proj_b"], _bcast_spec(p["proj_b"]))
    if do_skip:
        add(x.reshape(N, H * W, Cin), pl.BlockSpec((1, H * W, Cin), lambda n: (n, 0, 0)))

    out2 = pl.pallas_call(
        functools.partial(
            _mbconv_kernel, k=kernel, stride=stride, Ho=Ho, Wo=Wo, Lh=Lh, Lw=Lw, ss=ss,
            has_expand=has_expand, has_se=has_se, do_skip=do_skip),
        out_shape=jax.ShapeDtypeStruct((N, Ho * Wo, Cout), x.dtype),
        grid=(N,),
        in_specs=in_specs,
        out_specs=pl.BlockSpec((1, Ho * Wo, Cout), lambda n: (n, 0, 0)),
        compiler_params=pltpu.CompilerParams(
            dimension_semantics=("parallel",),       # batch axis -> megacore / v7x 2-TC sharding
            vmem_limit_bytes=32 * 1024 * 1024,       # explicit budget; fits v7x's 64 MiB VMEM
        ),
    )(*args)
    return out2.reshape(N, Ho, Wo, Cout)


# ----------------------------------------------------------------------------
# Parameter init (deterministic, synthetic) with BN folded into the weights.
# ----------------------------------------------------------------------------
def _bn_fold(kg, kb, c, eps=1e-3):
    gamma = 1.0 + 0.1 * jax.random.normal(kg, (c,), jnp.float32)
    beta = 0.1 * jax.random.normal(kb, (c,), jnp.float32)
    running_mean = jnp.zeros((c,), jnp.float32)
    running_var = jnp.ones((c,), jnp.float32)
    scale = gamma / jnp.sqrt(running_var + eps)
    shift = beta - running_mean * scale
    return scale, shift


def init_mbconv(key, in_, out_, expand, kernel, se_ratio):
    mid = in_ * expand
    ks = jax.random.split(key, 13)
    p = {}
    if expand != 1:
        w = 0.1 * jax.random.normal(ks[0], (in_, mid), jnp.float32)
        scale, shift = _bn_fold(ks[1], ks[2], mid)
        p["exp_w"] = w * scale[None, :]             # BN scale folded into the weight
        p["exp_b"] = shift[None, :]                 # (1, mid)
    dw = 0.1 * jax.random.normal(ks[3], (kernel * kernel, mid), jnp.float32)
    scale, shift = _bn_fold(ks[4], ks[5], mid)
    p["dw_w"] = dw * scale[None, :]
    p["dw_b"] = shift[None, :]
    if se_ratio > 0:
        sq = int(in_ * se_ratio)
        p["se_w1"] = 0.1 * jax.random.normal(ks[6], (mid, sq), jnp.float32)
        p["se_b1"] = 0.01 * jax.random.normal(ks[7], (1, sq), jnp.float32)
        p["se_w2"] = 0.1 * jax.random.normal(ks[8], (sq, mid), jnp.float32)
        p["se_b2"] = 0.01 * jax.random.normal(ks[9], (1, mid), jnp.float32)
    pw = 0.1 * jax.random.normal(ks[10], (mid, out_), jnp.float32)
    scale, shift = _bn_fold(ks[11], ks[12], out_)
    p["proj_w"] = pw * scale[None, :]
    p["proj_b"] = shift[None, :]
    return p


def init_mbblock(key, in_, out_, expand, kernel, stride, num_repeat, se_ratio):
    keys = jax.random.split(key, num_repeat)
    params = [init_mbconv(keys[0], in_, out_, expand, kernel, se_ratio)]
    cfgs = [dict(kernel=kernel, stride=stride)]
    for i in range(1, num_repeat):
        params.append(init_mbconv(keys[i], out_, out_, expand, kernel, se_ratio))
        cfgs.append(dict(kernel=kernel, stride=1))
    return params, cfgs


def mbblock_forward(x_nchw, params, cfgs, *, skip):
    # PyTorch-facing NCHW -> internal NHWC (channels on the 128-lane axis) -> back to NCHW.
    x = jnp.transpose(x_nchw, (0, 2, 3, 1))
    for p, c in zip(params, cfgs):
        x = mbconv_forward(x, p, kernel=c["kernel"], stride=c["stride"], skip=skip)
    return jnp.transpose(x, (0, 3, 1, 2))


# ----------------------------------------------------------------------------
# Plain-JAX reference (same folded-BN parameters) for a correctness sanity check.
# ----------------------------------------------------------------------------
def _ref_mbconv(x, p, *, kernel, stride, skip):
    HI = jax.lax.Precision.HIGHEST
    inputs = x
    N, H, W, Cin = x.shape
    if "exp_w" in p:
        mid = p["exp_w"].shape[1]
        x = jnp.dot(x.reshape(-1, Cin), p["exp_w"], precision=HI).reshape(N, H, W, mid)
        x = x + p["exp_b"]
        x = x * jax.nn.sigmoid(x)
    C = x.shape[-1]

    def pad_amt(size):
        out = (size + stride - 1) // stride
        pad = max(0, (out - 1) * stride + kernel - size)
        return pad // 2, pad - pad // 2

    pt, pb = pad_amt(H)
    pw_, pr = pad_amt(W)
    xp = jnp.pad(x, ((0, 0), (pt, pb), (pw_, pr), (0, 0)))
    Ho = (H + pt + pb - kernel) // stride + 1
    Wo = (W + pw_ + pr - kernel) // stride + 1
    acc = jnp.zeros((N, Ho, Wo, C), jnp.float32)
    for kh in range(kernel):
        for kw in range(kernel):
            tap = xp[:, kh:kh + stride * (Ho - 1) + 1:stride,
                     kw:kw + stride * (Wo - 1) + 1:stride, :]
            acc = acc + tap * p["dw_w"][kh * kernel + kw]
    x = acc + p["dw_b"]
    x = x * jax.nn.sigmoid(x)
    if "se_w1" in p:
        s = jnp.mean(x, axis=(1, 2))
        s = jnp.dot(s, p["se_w1"], precision=HI) + p["se_b1"]
        s = s * jax.nn.sigmoid(s)
        s = jnp.dot(s, p["se_w2"], precision=HI) + p["se_b2"]
        x = x * jax.nn.sigmoid(s)[:, None, None, :]
    Cout = p["proj_w"].shape[1]
    x = jnp.dot(x.reshape(-1, C), p["proj_w"], precision=HI).reshape(N, Ho, Wo, Cout)
    x = x + p["proj_b"]
    if skip and stride == 1 and Cin == Cout:
        x = x + inputs
    return x


def _ref_mbblock(x_nchw, params, cfgs, *, skip):
    x = jnp.transpose(x_nchw, (0, 2, 3, 1))
    for p, c in zip(params, cfgs):
        x = _ref_mbconv(x, p, kernel=c["kernel"], stride=c["stride"], skip=skip)
    return jnp.transpose(x, (0, 3, 1, 2))


# ----------------------------------------------------------------------------
if __name__ == "__main__":
    key = jax.random.PRNGKey(0)
    k_in, k_par = jax.random.split(key)

    # MBBlock(in_=8, out_=8, expand=2, kernel=3, stride=2, num_repeat=2, skip=True, se_ratio=0.25)
    N, C_in, H, W = 2, 8, 16, 16
    C_out, expand, kernel, stride, num_repeat = 8, 2, 3, 2, 2
    skip, se_ratio = True, 0.25

    x = jax.random.normal(k_in, (N, C_in, H, W), jnp.float32)
    params, cfgs = init_mbblock(k_par, C_in, C_out, expand, kernel, stride,
                                num_repeat, se_ratio)

    fwd = jax.jit(lambda xx: mbblock_forward(xx, params, cfgs, skip=skip))
    out = jax.block_until_ready(fwd(x))
    assert out.shape == (N, C_out, H // stride, W // stride), out.shape

    # Sanity check against the plain-JAX reference of the same (folded-BN) module.
    ref = jax.block_until_ready(_ref_mbblock(x, params, cfgs, skip=skip))
    err = float(jnp.max(jnp.abs(out - ref)))
    assert err < 5e-3, f"max abs error vs reference: {err}"

    print("KERNEL_OK")
</pallas_src>

<mosaic_0001>
module attributes {stable_mosaic.version = 11 : i64} {
  func.func @_mbconv_kernel(%arg0: i32, %arg1: memref<1x576x8xf32, #tpu.memory_space<vmem>>, %arg2: memref<576x1xf32, #tpu.memory_space<vmem>>, %arg3: memref<8x16xf32, #tpu.memory_space<vmem>>, %arg4: memref<1x16xf32, #tpu.memory_space<vmem>>, %arg5: memref<9x16xf32, #tpu.memory_space<vmem>>, %arg6: memref<1x16xf32, #tpu.memory_space<vmem>>, %arg7: memref<16x2xf32, #tpu.memory_space<vmem>>, %arg8: memref<1x2xf32, #tpu.memory_space<vmem>>, %arg9: memref<2x16xf32, #tpu.memory_space<vmem>>, %arg10: memref<1x16xf32, #tpu.memory_space<vmem>>, %arg11: memref<16x8xf32, #tpu.memory_space<vmem>>, %arg12: memref<1x8xf32, #tpu.memory_space<vmem>>, %arg13: memref<1x64x8xf32, #tpu.memory_space<vmem>>) attributes {dimension_semantics = [#tpu.dimension_semantics<parallel>], iteration_bounds = array<i64: 2>, scalar_prefetch = 0 : i64, scratch_operands = 0 : i64, tpu.core_type = #tpu.core_type<tc>, window_params = [{transform_indices = @transform_0, window_bounds = array<i64: 1, 576, 8>}, {pipeline_mode = #tpu.pipeline_mode<synchronous>, transform_indices = @transform_1, window_bounds = array<i64: 576, 1>}, {pipeline_mode = #tpu.pipeline_mode<synchronous>, transform_indices = @transform_2, window_bounds = array<i64: 8, 16>}, {pipeline_mode = #tpu.pipeline_mode<synchronous>, transform_indices = @transform_3, window_bounds = array<i64: 1, 16>}, {pipeline_mode = #tpu.pipeline_mode<synchronous>, transform_indices = @transform_4, window_bounds = array<i64: 9, 16>}, {pipeline_mode = #tpu.pipeline_mode<synchronous>, transform_indices = @transform_5, window_bounds = array<i64: 1, 16>}, {pipeline_mode = #tpu.pipeline_mode<synchronous>, transform_indices = @transform_6, window_bounds = array<i64: 16, 2>}, {pipeline_mode = #tpu.pipeline_mode<synchronous>, transform_indices = @transform_7, window_bounds = array<i64: 1, 2>}, {pipeline_mode = #tpu.pipeline_mode<synchronous>, transform_indices = @transform_8, window_bounds = array<i64: 2, 16>}, {pipeline_mode = #tpu.pipeline_mode<synchronous>, transform_indices = @transform_9, window_bounds = array<i64: 1, 16>}, {pipeline_mode = #tpu.pipeline_mode<synchronous>, transform_indices = @transform_10, window_bounds = array<i64: 16, 8>}, {pipeline_mode = #tpu.pipeline_mode<synchronous>, transform_indices = @transform_11, window_bounds = array<i64: 1, 8>}, {transform_indices = @transform_12, window_bounds = array<i64: 1, 64, 8>}]} {
    %c0 = arith.constant 0 : index
    %c0_0 = arith.constant 0 : index
    %c0_1 = arith.constant 0 : index
    %0 = vector.load %arg1[%c0, %c0_0, %c0_1] : memref<1x576x8xf32, #tpu.memory_space<vmem>>, vector<1x576x8xf32>
    %1 = vector.shape_cast %0 : vector<1x576x8xf32> to vector<576x8xf32>
    %c0_2 = arith.constant 0 : index
    %c0_3 = arith.constant 0 : index
    %2 = vector.load %arg3[%c0_2, %c0_3] : memref<8x16xf32, #tpu.memory_space<vmem>>, vector<8x16xf32>
    %cst = arith.constant dense<0.000000e+00> : vector<576x16xf32>
    %3 = tpu.matmul %1, %2, %cst {dimension_numbers = #tpu.dot_dimension_numbers<[1], [0], [0], [1], [0, 0, 1, 1], [], []>} : vector<576x8xf32>, vector<8x16xf32>, vector<576x16xf32> -> vector<576x16xf32>
    %c0_4 = arith.constant 0 : index
    %c0_5 = arith.constant 0 : index
    %4 = vector.load %arg4[%c0_4, %c0_5] : memref<1x16xf32, #tpu.memory_space<vmem>>, vector<1x16xf32>
    %5 = vector.broadcast %4 : vector<1x16xf32> to vector<576x16xf32>
    %6 = arith.addf %3, %5 : vector<576x16xf32>
    %7 = arith.negf %6 : vector<576x16xf32>
    %8 = math.exp %7 : vector<576x16xf32>
    %cst_6 = arith.constant 1.000000e+00 : f32
    %9 = vector.broadcast %cst_6 : f32 to vector<576x16xf32>
    %10 = arith.addf %9, %8 : vector<576x16xf32>
    %11 = arith.divf %9, %10 : vector<576x16xf32>
    %12 = arith.mulf %6, %11 : vector<576x16xf32>
    %c0_7 = arith.constant 0 : index
    %c0_8 = arith.constant 0 : index
    %13 = vector.load %arg2[%c0_7, %c0_8] : memref<576x1xf32, #tpu.memory_space<vmem>>, vector<576x1xf32>
    %14 = vector.broadcast %13 : vector<576x1xf32> to vector<576x16xf32>
    %15 = arith.mulf %12, %14 : vector<576x16xf32>
    %16 = vector.shape_cast %15 : vector<576x16xf32> to vector<4x9x16x16xf32>
    %cst_9 = arith.constant 0.000000e+00 : f32
    %17 = vector.broadcast %cst_9 : f32 to vector<8x8x16xf32>
    %18 = vector.extract_strided_slice %16 {offsets = [0, 0, 0, 0], sizes = [1, 8, 8, 16], strides = [1, 1, 1, 1]} : vector<4x9x16x16xf32> to vector<1x8x8x16xf32>
    %19 = vector.shape_cast %18 : vector<1x8x8x16xf32> to vector<8x8x16xf32>
    %c0_10 = arith.constant 0 : index
    %c0_11 = arith.constant 0 : index
    %20 = vector.load %arg5[%c0_10, %c0_11] : memref<9x16xf32, #tpu.memory_space<vmem>>, vector<1x16xf32>
    %21 = vector.shape_cast %20 : vector<1x16xf32> to vector<16xf32>
    %22 = vector.shape_cast %21 : vector<16xf32> to vector<1x1x16xf32>
    %23 = vector.broadcast %22 : vector<1x1x16xf32> to vector<8x8x16xf32>
    %24 = arith.mulf %19, %23 : vector<8x8x16xf32>
    %25 = arith.addf %17, %24 : vector<8x8x16xf32>
    %26 = vector.extract_strided_slice %16 {offsets = [1, 0, 0, 0], sizes = [1, 8, 8, 16], strides = [1, 1, 1, 1]} : vector<4x9x16x16xf32> to vector<1x8x8x16xf32>
    %27 = vector.shape_cast %26 : vector<1x8x8x16xf32> to vector<8x8x16xf32>
    %c1 = arith.constant 1 : index
    %c0_12 = arith.constant 0 : index
    %28 = vector.load %arg5[%c1, %c0_12] : memref<9x16xf32, #tpu.memory_space<vmem>>, vector<1x16xf32>
    %29 = vector.shape_cast %28 : vector<1x16xf32> to vector<16xf32>
    %30 = vector.shape_cast %29 : vector<16xf32> to vector<1x1x16xf32>
    %31 = vector.broadcast %30 : vector<1x1x16xf32> to vector<8x8x16xf32>
    %32 = arith.mulf %27, %31 : vector<8x8x16xf32>
    %33 = arith.addf %25, %32 : vector<8x8x16xf32>
    %34 = vector.extract_strided_slice %16 {offsets = [0, 0, 1, 0], sizes = [1, 8, 8, 16], strides = [1, 1, 1, 1]} : vector<4x9x16x16xf32> to vector<1x8x8x16xf32>
    %35 = vector.shape_cast %34 : vector<1x8x8x16xf32> to vector<8x8x16xf32>
    %c2 = arith.constant 2 : index
    %c0_13 = arith.constant 0 : index
    %36 = vector.load %arg5[%c2, %c0_13] : memref<9x16xf32, #tpu.memory_space<vmem>>, vector<1x16xf32>
    %37 = vector.shape_cast %36 : vector<1x16xf32> to vector<16xf32>
    %38 = vector.shape_cast %37 : vector<16xf32> to vector<1x1x16xf32>
    %39 = vector.broadcast %38 : vector<1x1x16xf32> to vector<8x8x16xf32>
    %40 = arith.mulf %35, %39 : vector<8x8x16xf32>
    %41 = arith.addf %33, %40 : vector<8x8x16xf32>
    %42 = vector.extract_strided_slice %16 {offsets = [2, 0, 0, 0], sizes = [1, 8, 8, 16], strides = [1, 1, 1, 1]} : vector<4x9x16x16xf32> to vector<1x8x8x16xf32>
    %43 = vector.shape_cast %42 : vector<1x8x8x16xf32> to vector<8x8x16xf32>
    %c3 = arith.constant 3 : index
    %c0_14 = arith.constant 0 : index
    %44 = vector.load %arg5[%c3, %c0_14] : memref<9x16xf32, #tpu.memory_space<vmem>>, vector<1x16xf32>
    %45 = vector.shape_cast %44 : vector<1x16xf32> to vector<16xf32>
    %46 = vector.shape_cast %45 : vector<16xf32> to vector<1x1x16xf32>
    %47 = vector.broadcast %46 : vector<1x1x16xf32> to vector<8x8x16xf32>
    %48 = arith.mulf %43, %47 : vector<8x8x16xf32>
    %49 = arith.addf %41, %48 : vector<8x8x16xf32>
    %50 = vector.extract_strided_slice %16 {offsets = [3, 0, 0, 0], sizes = [1, 8, 8, 16], strides = [1, 1, 1, 1]} : vector<4x9x16x16xf32> to vector<1x8x8x16xf32>
    %51 = vector.shape_cast %50 : vector<1x8x8x16xf32> to vector<8x8x16xf32>
    %c4 = arith.constant 4 : index
    %c0_15 = arith.constant 0 : index
    %52 = vector.load %arg5[%c4, %c0_15] : memref<9x16xf32, #tpu.memory_space<vmem>>, vector<1x16xf32>
    %53 = vector.shape_cast %52 : vector<1x16xf32> to vector<16xf32>
    %54 = vector.shape_cast %53 : vector<16xf32> to vector<1x1x16xf32>
    %55 = vector.broadcast %54 : vector<1x1x16xf32> to vector<8x8x16xf32>
    %56 = arith.mulf %51, %55 : vector<8x8x16xf32>
    %57 = arith.addf %49, %56 : vector<8x8x16xf32>
    %58 = vector.extract_strided_slice %16 {offsets = [2, 0, 1, 0], sizes = [1, 8, 8, 16], strides = [1, 1, 1, 1]} : vector<4x9x16x16xf32> to vector<1x8x8x16xf32>
    %59 = vector.shape_cast %58 : vector<1x8x8x16xf32> to vector<8x8x16xf32>
    %c5 = arith.constant 5 : index
    %c0_16 = arith.constant 0 : index
    %60 = vector.load %arg5[%c5, %c0_16] : memref<9x16xf32, #tpu.memory_space<vmem>>, vector<1x16xf32>
    %61 = vector.shape_cast %60 : vector<1x16xf32> to vector<16xf32>
    %62 = vector.shape_cast %61 : vector<16xf32> to vector<1x1x16xf32>
    %63 = vector.broadcast %62 : vector<1x1x16xf32> to vector<8x8x16xf32>
    %64 = arith.mulf %59, %63 : vector<8x8x16xf32>
    %65 = arith.addf %57, %64 : vector<8x8x16xf32>
    %66 = vector.extract_strided_slice %16 {offsets = [0, 1, 0, 0], sizes = [1, 8, 8, 16], strides = [1, 1, 1, 1]} : vector<4x9x16x16xf32> to vector<1x8x8x16xf32>
    %67 = vector.shape_cast %66 : vector<1x8x8x16xf32> to vector<8x8x16xf32>
    %c6 = arith.constant 6 : index
    %c0_17 = arith.constant 0 : index
    %68 = vector.load %arg5[%c6, %c0_17] : memref<9x16xf32, #tpu.memory_space<vmem>>, vector<1x16xf32>
    %69 = vector.shape_cast %68 : vector<1x16xf32> to vector<16xf32>
    %70 = vector.shape_cast %69 : vector<16xf32> to vector<1x1x16xf32>
    %71 = vector.broadcast %70 : vector<1x1x16xf32> to vector<8x8x16xf32>
    %72 = arith.mulf %67, %71 : vector<8x8x16xf32>
    %73 = arith.addf %65, %72 : vector<8x8x16xf32>
    %74 = vector.extract_strided_slice %16 {offsets = [1, 1, 0, 0], sizes = [1, 8, 8, 16], strides = [1, 1, 1, 1]} : vector<4x9x16x16xf32> to vector<1x8x8x16xf32>
    %75 = vector.shape_cast %74 : vector<1x8x8x16xf32> to vector<8x8x16xf32>
    %c7 = arith.constant 7 : index
    %c0_18 = arith.constant 0 : index
    %76 = vector.load %arg5[%c7, %c0_18] : memref<9x16xf32, #tpu.memory_space<vmem>>, vector<1x16xf32>
    %77 = vector.shape_cast %76 : vector<1x16xf32> to vector<16xf32>
    %78 = vector.shape_cast %77 : vector<16xf32> to vector<1x1x16xf32>
    %79 = vector.broadcast %78 : vector<1x1x16xf32> to vector<8x8x16xf32>
    %80 = arith.mulf %75, %79 : vector<8x8x16xf32>
    %81 = arith.addf %73, %80 : vector<8x8x16xf32>
    %82 = vector.extract_strided_slice %16 {offsets = [0, 1, 1, 0], sizes = [1, 8, 8, 16], strides = [1, 1, 1, 1]} : vector<4x9x16x16xf32> to vector<1x8x8x16xf32>
    %83 = vector.shape_cast %82 : vector<1x8x8x16xf32> to vector<8x8x16xf32>
    %c8 = arith.constant 8 : index
    %c0_19 = arith.constant 0 : index
    %84 = vector.load %arg5[%c8, %c0_19] : memref<9x16xf32, #tpu.memory_space<vmem>>, vector<1x16xf32>
    %85 = vector.shape_cast %84 : vector<1x16xf32> to vector<16xf32>
    %86 = vector.shape_cast %85 : vector<16xf32> to vector<1x1x16xf32>
    %87 = vector.broadcast %86 : vector<1x1x16xf32> to vector<8x8x16xf32>
    %88 = arith.mulf %83, %87 : vector<8x8x16xf32>
    %89 = arith.addf %81, %88 : vector<8x8x16xf32>
    %c0_20 = arith.constant 0 : index
    %c0_21 = arith.constant 0 : index
    %90 = vector.load %arg6[%c0_20, %c0_21] : memref<1x16xf32, #tpu.memory_space<vmem>>, vector<1x16xf32>
    %91 = vector.shape_cast %90 : vector<1x16xf32> to vector<16xf32>
    %92 = vector.shape_cast %91 : vector<16xf32> to vector<1x1x16xf32>
    %93 = vector.broadcast %92 : vector<1x1x16xf32> to vector<8x8x16xf32>
    %94 = arith.addf %89, %93 : vector<8x8x16xf32>
    %95 = arith.negf %94 : vector<8x8x16xf32>
    %96 = math.exp %95 : vector<8x8x16xf32>
    %cst_22 = arith.constant 1.000000e+00 : f32
    %97 = vector.broadcast %cst_22 : f32 to vector<8x8x16xf32>
    %98 = arith.addf %97, %96 : vector<8x8x16xf32>
    %99 = arith.divf %97, %98 : vector<8x8x16xf32>
    %100 = arith.mulf %94, %99 : vector<8x8x16xf32>
    %cst_23 = arith.constant dense<0.000000e+00> : vector<16xf32>
    %101 = vector.multi_reduction <add>, %100, %cst_23 [0, 1] : vector<8x8x16xf32> to vector<16xf32>
    %cst_24 = arith.constant 6.400000e+01 : f32
    %102 = vector.broadcast %cst_24 : f32 to vector<16xf32>
    %103 = arith.divf %101, %102 : vector<16xf32>
    %104 = vector.shape_cast %103 : vector<16xf32> to vector<1x16xf32>
    %c0_25 = arith.constant 0 : index
    %c0_26 = arith.constant 0 : index
    %105 = vector.load %arg7[%c0_25, %c0_26] : memref<16x2xf32, #tpu.memory_space<vmem>>, vector<16x2xf32>
    %cst_27 = arith.constant dense<0.000000e+00> : vector<1x2xf32>
    %106 = tpu.matmul %104, %105, %cst_27 {dimension_numbers = #tpu.dot_dimension_numbers<[1], [0], [0], [1], [0, 0, 1, 1], [], []>} : vector<1x16xf32>, vector<16x2xf32>, vector<1x2xf32> -> vector<1x2xf32>
    %c0_28 = arith.constant 0 : index
    %c0_29 = arith.constant 0 : index
    %107 = vector.load %arg8[%c0_28, %c0_29] : memref<1x2xf32, #tpu.memory_space<vmem>>, vector<1x2xf32>
    %108 = arith.addf %106, %107 : vector<1x2xf32>
    %109 = arith.negf %108 : vector<1x2xf32>
    %110 = math.exp %109 : vector<1x2xf32>
    %cst_30 = arith.constant 1.000000e+00 : f32
    %111 = vector.broadcast %cst_30 : f32 to vector<1x2xf32>
    %112 = arith.addf %111, %110 : vector<1x2xf32>
    %113 = arith.divf %111, %112 : vector<1x2xf32>
    %114 = arith.mulf %108, %113 : vector<1x2xf32>
    %c0_31 = arith.constant 0 : index
    %c0_32 = arith.constant 0 : index
    %115 = vector.load %arg9[%c0_31, %c0_32] : memref<2x16xf32, #tpu.memory_space<vmem>>, vector<2x16xf32>
    %cst_33 = arith.constant dense<0.000000e+00> : vector<1x16xf32>
    %116 = tpu.matmul %114, %115, %cst_33 {dimension_numbers = #tpu.dot_dimension_numbers<[1], [0], [0], [1], [0, 0, 1, 1], [], []>} : vector<1x2xf32>, vector<2x16xf32>, vector<1x16xf32> -> vector<1x16xf32>
    %c0_34 = arith.constant 0 : index
    %c0_35 = arith.constant 0 : index
    %117 = vector.load %arg10[%c0_34, %c0_35] : memref<1x16xf32, #tpu.memory_space<vmem>>, vector<1x16xf32>
    %118 = arith.addf %116, %117 : vector<1x16xf32>
    %119 = arith.negf %118 : vector<1x16xf32>
    %120 = math.exp %119 : vector<1x16xf32>
    %cst_36 = arith.constant 1.000000e+00 : f32
    %121 = vector.broadcast %cst_36 : f32 to vector<1x16xf32>
    %122 = arith.addf %121, %120 : vector<1x16xf32>
    %123 = arith.divf %121, %122 : vector<1x16xf32>
    %124 = vector.shape_cast %123 : vector<1x16xf32> to vector<1x1x16xf32>
    %125 = vector.broadcast %124 : vector<1x1x16xf32> to vector<8x8x16xf32>
    %126 = arith.mulf %100, %125 : vector<8x8x16xf32>
    %127 = vector.shape_cast %126 : vector<8x8x16xf32> to vector<64x16xf32>
    %c0_37 = arith.constant 0 : index
    %c0_38 = arith.constant 0 : index
    %128 = vector.load %arg11[%c0_37, %c0_38] : memref<16x8xf32, #tpu.memory_space<vmem>>, vector<16x8xf32>
    %cst_39 = arith.constant dense<0.000000e+00> : vector<64x8xf32>
    %129 = tpu.matmul %127, %128, %cst_39 {dimension_numbers = #tpu.dot_dimension_numbers<[1], [0], [0], [1], [0, 0, 1, 1], [], []>} : vector<64x16xf32>, vector<16x8xf32>, vector<64x8xf32> -> vector<64x8xf32>
    %c0_40 = arith.constant 0 : index
    %c0_41 = arith.constant 0 : index
    %130 = vector.load %arg12[%c0_40, %c0_41] : memref<1x8xf32, #tpu.memory_space<vmem>>, vector<1x8xf32>
    %131 = vector.broadcast %130 : vector<1x8xf32> to vector<64x8xf32>
    %132 = arith.addf %129, %131 : vector<64x8xf32>
    %c0_42 = arith.constant 0 : index
    %c0_43 = arith.constant 0 : index
    %c0_44 = arith.constant 0 : index
    %133 = vector.load %arg13[%c0_42, %c0_43, %c0_44] : memref<1x64x8xf32, #tpu.memory_space<vmem>>, vector<1x64x8xf32>
    %134 = vector.shape_cast %133 : vector<1x64x8xf32> to vector<64x8xf32>
    %135 = vector.shape_cast %132 : vector<64x8xf32> to vector<1x64x8xf32>
    tpu.vector_store %arg13[%c0_42, %c0_43, %c0_44], %135 {strides = array<i32>} : memref<1x64x8xf32, #tpu.memory_space<vmem>>, vector<1x64x8xf32>,
    return
  }
  func.func @transform_0(%arg0: i32) -> (i32, i32, i32) {
    %c0_i32 = arith.constant 0 : i32
    %c0_i32_0 = arith.constant 0 : i32
    %c0_i32_1 = arith.constant 0 : i32
    return %arg0, %c0_i32, %c0_i32_0 : i32, i32, i32
  }
  func.func @transform_1(%arg0: i32) -> (i32, i32) {
    %c0_i32 = arith.constant 0 : i32
    %c0_i32_0 = arith.constant 0 : i32
    %c0_i32_1 = arith.constant 0 : i32
    return %c0_i32, %c0_i32_0 : i32, i32
  }
  func.func @transform_2(%arg0: i32) -> (i32, i32) {
    %c0_i32 = arith.constant 0 : i32
    %c0_i32_0 = arith.constant 0 : i32
    %c0_i32_1 = arith.constant 0 : i32
    return %c0_i32, %c0_i32_0 : i32, i32
  }
  func.func @transform_3(%arg0: i32) -> (i32, i32) {
    %c0_i32 = arith.constant 0 : i32
    %c0_i32_0 = arith.constant 0 : i32
    %c0_i32_1 = arith.constant 0 : i32
    return %c0_i32, %c0_i32_0 : i32, i32
  }
  func.func @transform_4(%arg0: i32) -> (i32, i32) {
    %c0_i32 = arith.constant 0 : i32
    %c0_i32_0 = arith.constant 0 : i32
    %c0_i32_1 = arith.constant 0 : i32
    return %c0_i32, %c0_i32_0 : i32, i32
  }
  func.func @transform_5(%arg0: i32) -> (i32, i32) {
    %c0_i32 = arith.constant 0 : i32
    %c0_i32_0 = arith.constant 0 : i32
    %c0_i32_1 = arith.constant 0 : i32
    return %c0_i32, %c0_i32_0 : i32, i32
  }
  func.func @transform_6(%arg0: i32) -> (i32, i32) {
    %c0_i32 = arith.constant 0 : i32
    %c0_i32_0 = arith.constant 0 : i32
    %c0_i32_1 = arith.constant 0 : i32
    return %c0_i32, %c0_i32_0 : i32, i32
  }
  func.func @transform_7(%arg0: i32) -> (i32, i32) {
    %c0_i32 = arith.constant 0 : i32
    %c0_i32_0 = arith.constant 0 : i32
    %c0_i32_1 = arith.constant 0 : i32
    return %c0_i32, %c0_i32_0 : i32, i32
  }
  func.func @transform_8(%arg0: i32) -> (i32, i32) {
    %c0_i32 = arith.constant 0 : i32
    %c0_i32_0 = arith.constant 0 : i32
    %c0_i32_1 = arith.constant 0 : i32
    return %c0_i32, %c0_i32_0 : i32, i32
  }
  func.func @transform_9(%arg0: i32) -> (i32, i32) {
    %c0_i32 = arith.constant 0 : i32
    %c0_i32_0 = arith.constant 0 : i32
    %c0_i32_1 = arith.constant 0 : i32
    return %c0_i32, %c0_i32_0 : i32, i32
  }
  func.func @transform_10(%arg0: i32) -> (i32, i32) {
    %c0_i32 = arith.constant 0 : i32
    %c0_i32_0 = arith.constant 0 : i32
    %c0_i32_1 = arith.constant 0 : i32
    return %c0_i32, %c0_i32_0 : i32, i32
  }
  func.func @transform_11(%arg0: i32) -> (i32, i32) {
    %c0_i32 = arith.constant 0 : i32
    %c0_i32_0 = arith.constant 0 : i32
    %c0_i32_1 = arith.constant 0 : i32
    return %c0_i32, %c0_i32_0 : i32, i32
  }
  func.func @transform_12(%arg0: i32) -> (i32, i32, i32) {
    %c0_i32 = arith.constant 0 : i32
    %c0_i32_0 = arith.constant 0 : i32
    %c0_i32_1 = arith.constant 0 : i32
    return %arg0, %c0_i32, %c0_i32_0 : i32, i32, i32
  }
}

module attributes {stable_mosaic.version = 11 : i64} {
  func.func @_mbconv_kernel(%arg0: i32, %arg1: memref<1x160x8xf32, #tpu.memory_space<vmem>>, %arg2: memref<160x1xf32, #tpu.memory_space<vmem>>, %arg3: memref<8x16xf32, #tpu.memory_space<vmem>>, %arg4: memref<1x16xf32, #tpu.memory_space<vmem>>, %arg5: memref<9x16xf32, #tpu.memory_space<vmem>>, %arg6: memref<1x16xf32, #tpu.memory_space<vmem>>, %arg7: memref<16x2xf32, #tpu.memory_space<vmem>>, %arg8: memref<1x2xf32, #tpu.memory_space<vmem>>, %arg9: memref<2x16xf32, #tpu.memory_space<vmem>>, %arg10: memref<1x16xf32, #tpu.memory_space<vmem>>, %arg11: memref<16x8xf32, #tpu.memory_space<vmem>>, %arg12: memref<1x8xf32, #tpu.memory_space<vmem>>, %arg13: memref<1x64x8xf32, #tpu.memory_space<vmem>>, %arg14: memref<1x64x8xf32, #tpu.memory_space<vmem>>) attributes {dimension_semantics = [#tpu.dimension_semantics<parallel>], iteration_bounds = array<i64: 2>, scalar_prefetch = 0 : i64, scratch_operands = 0 : i64, tpu.core_type = #tpu.core_type<tc>, window_params = [{transform_indices = @transform_0, window_bounds = array<i64: 1, 160, 8>}, {pipeline_mode = #tpu.pipeline_mode<synchronous>, transform_indices = @transform_1, window_bounds = array<i64: 160, 1>}, {pipeline_mode = #tpu.pipeline_mode<synchronous>, transform_indices = @transform_2, window_bounds = array<i64: 8, 16>}, {pipeline_mode = #tpu.pipeline_mode<synchronous>, transform_indices = @transform_3, window_bounds = array<i64: 1, 16>}, {pipeline_mode = #tpu.pipeline_mode<synchronous>, transform_indices = @transform_4, window_bounds = array<i64: 9, 16>}, {pipeline_mode = #tpu.pipeline_mode<synchronous>, transform_indices = @transform_5, window_bounds = array<i64: 1, 16>}, {pipeline_mode = #tpu.pipeline_mode<synchronous>, transform_indices = @transform_6, window_bounds = array<i64: 16, 2>}, {pipeline_mode = #tpu.pipeline_mode<synchronous>, transform_indices = @transform_7, window_bounds = array<i64: 1, 2>}, {pipeline_mode = #tpu.pipeline_mode<synchronous>, transform_indices = @transform_8, window_bounds = array<i64: 2, 16>}, {pipeline_mode = #tpu.pipeline_mode<synchronous>, transform_indices = @transform_9, window_bounds = array<i64: 1, 16>}, {pipeline_mode = #tpu.pipeline_mode<synchronous>, transform_indices = @transform_10, window_bounds = array<i64: 16, 8>}, {pipeline_mode = #tpu.pipeline_mode<synchronous>, transform_indices = @transform_11, window_bounds = array<i64: 1, 8>}, {transform_indices = @transform_12, window_bounds = array<i64: 1, 64, 8>}, {transform_indices = @transform_13, window_bounds = array<i64: 1, 64, 8>}]} {
    %c0 = arith.constant 0 : index
    %c0_0 = arith.constant 0 : index
    %c0_1 = arith.constant 0 : index
    %0 = vector.load %arg1[%c0, %c0_0, %c0_1] : memref<1x160x8xf32, #tpu.memory_space<vmem>>, vector<1x160x8xf32>
    %1 = vector.shape_cast %0 : vector<1x160x8xf32> to vector<160x8xf32>
    %c0_2 = arith.constant 0 : index
    %c0_3 = arith.constant 0 : index
    %2 = vector.load %arg3[%c0_2, %c0_3] : memref<8x16xf32, #tpu.memory_space<vmem>>, vector<8x16xf32>
    %cst = arith.constant dense<0.000000e+00> : vector<160x16xf32>
    %3 = tpu.matmul %1, %2, %cst {dimension_numbers = #tpu.dot_dimension_numbers<[1], [0], [0], [1], [0, 0, 1, 1], [], []>} : vector<160x8xf32>, vector<8x16xf32>, vector<160x16xf32> -> vector<160x16xf32>
    %c0_4 = arith.constant 0 : index
    %c0_5 = arith.constant 0 : index
    %4 = vector.load %arg4[%c0_4, %c0_5] : memref<1x16xf32, #tpu.memory_space<vmem>>, vector<1x16xf32>
    %5 = vector.broadcast %4 : vector<1x16xf32> to vector<160x16xf32>
    %6 = arith.addf %3, %5 : vector<160x16xf32>
    %7 = arith.negf %6 : vector<160x16xf32>
    %8 = math.exp %7 : vector<160x16xf32>
    %cst_6 = arith.constant 1.000000e+00 : f32
    %9 = vector.broadcast %cst_6 : f32 to vector<160x16xf32>
    %10 = arith.addf %9, %8 : vector<160x16xf32>
    %11 = arith.divf %9, %10 : vector<160x16xf32>
    %12 = arith.mulf %6, %11 : vector<160x16xf32>
    %c0_7 = arith.constant 0 : index
    %c0_8 = arith.constant 0 : index
    %13 = vector.load %arg2[%c0_7, %c0_8] : memref<160x1xf32, #tpu.memory_space<vmem>>, vector<160x1xf32>
    %14 = vector.broadcast %13 : vector<160x1xf32> to vector<160x16xf32>
    %15 = arith.mulf %12, %14 : vector<160x16xf32>
    %16 = vector.shape_cast %15 : vector<160x16xf32> to vector<1x10x16x16xf32>
    %cst_9 = arith.constant 0.000000e+00 : f32
    %17 = vector.broadcast %cst_9 : f32 to vector<8x8x16xf32>
    %18 = vector.extract_strided_slice %16 {offsets = [0, 0, 0, 0], sizes = [1, 8, 8, 16], strides = [1, 1, 1, 1]} : vector<1x10x16x16xf32> to vector<1x8x8x16xf32>
    %19 = vector.shape_cast %18 : vector<1x8x8x16xf32> to vector<8x8x16xf32>
    %c0_10 = arith.constant 0 : index
    %c0_11 = arith.constant 0 : index
    %20 = vector.load %arg5[%c0_10, %c0_11] : memref<9x16xf32, #tpu.memory_space<vmem>>, vector<1x16xf32>
    %21 = vector.shape_cast %20 : vector<1x16xf32> to vector<16xf32>
    %22 = vector.shape_cast %21 : vector<16xf32> to vector<1x1x16xf32>
    %23 = vector.broadcast %22 : vector<1x1x16xf32> to vector<8x8x16xf32>
    %24 = arith.mulf %19, %23 : vector<8x8x16xf32>
    %25 = arith.addf %17, %24 : vector<8x8x16xf32>
    %26 = vector.extract_strided_slice %16 {offsets = [0, 0, 1, 0], sizes = [1, 8, 8, 16], strides = [1, 1, 1, 1]} : vector<1x10x16x16xf32> to vector<1x8x8x16xf32>
    %27 = vector.shape_cast %26 : vector<1x8x8x16xf32> to vector<8x8x16xf32>
    %c1 = arith.constant 1 : index
    %c0_12 = arith.constant 0 : index
    %28 = vector.load %arg5[%c1, %c0_12] : memref<9x16xf32, #tpu.memory_space<vmem>>, vector<1x16xf32>
    %29 = vector.shape_cast %28 : vector<1x16xf32> to vector<16xf32>
    %30 = vector.shape_cast %29 : vector<16xf32> to vector<1x1x16xf32>
    %31 = vector.broadcast %30 : vector<1x1x16xf32> to vector<8x8x16xf32>
    %32 = arith.mulf %27, %31 : vector<8x8x16xf32>
    %33 = arith.addf %25, %32 : vector<8x8x16xf32>
    %34 = vector.extract_strided_slice %16 {offsets = [0, 0, 2, 0], sizes = [1, 8, 8, 16], strides = [1, 1, 1, 1]} : vector<1x10x16x16xf32> to vector<1x8x8x16xf32>
    %35 = vector.shape_cast %34 : vector<1x8x8x16xf32> to vector<8x8x16xf32>
    %c2 = arith.constant 2 : index
    %c0_13 = arith.constant 0 : index
    %36 = vector.load %arg5[%c2, %c0_13] : memref<9x16xf32, #tpu.memory_space<vmem>>, vector<1x16xf32>
    %37 = vector.shape_cast %36 : vector<1x16xf32> to vector<16xf32>
    %38 = vector.shape_cast %37 : vector<16xf32> to vector<1x1x16xf32>
    %39 = vector.broadcast %38 : vector<1x1x16xf32> to vector<8x8x16xf32>
    %40 = arith.mulf %35, %39 : vector<8x8x16xf32>
    %41 = arith.addf %33, %40 : vector<8x8x16xf32>
    %42 = vector.extract_strided_slice %16 {offsets = [0, 1, 0, 0], sizes = [1, 8, 8, 16], strides = [1, 1, 1, 1]} : vector<1x10x16x16xf32> to vector<1x8x8x16xf32>
    %43 = vector.shape_cast %42 : vector<1x8x8x16xf32> to vector<8x8x16xf32>
    %c3 = arith.constant 3 : index
    %c0_14 = arith.constant 0 : index
    %44 = vector.load %arg5[%c3, %c0_14] : memref<9x16xf32, #tpu.memory_space<vmem>>, vector<1x16xf32>
    %45 = vector.shape_cast %44 : vector<1x16xf32> to vector<16xf32>
    %46 = vector.shape_cast %45 : vector<16xf32> to vector<1x1x16xf32>
    %47 = vector.broadcast %46 : vector<1x1x16xf32> to vector<8x8x16xf32>
    %48 = arith.mulf %43, %47 : vector<8x8x16xf32>
    %49 = arith.addf %41, %48 : vector<8x8x16xf32>
    %50 = vector.extract_strided_slice %16 {offsets = [0, 1, 1, 0], sizes = [1, 8, 8, 16], strides = [1, 1, 1, 1]} : vector<1x10x16x16xf32> to vector<1x8x8x16xf32>
    %51 = vector.shape_cast %50 : vector<1x8x8x16xf32> to vector<8x8x16xf32>
    %c4 = arith.constant 4 : index
    %c0_15 = arith.constant 0 : index
    %52 = vector.load %arg5[%c4, %c0_15] : memref<9x16xf32, #tpu.memory_space<vmem>>, vector<1x16xf32>
    %53 = vector.shape_cast %52 : vector<1x16xf32> to vector<16xf32>
    %54 = vector.shape_cast %53 : vector<16xf32> to vector<1x1x16xf32>
    %55 = vector.broadcast %54 : vector<1x1x16xf32> to vector<8x8x16xf32>
    %56 = arith.mulf %51, %55 : vector<8x8x16xf32>
    %57 = arith.addf %49, %56 : vector<8x8x16xf32>
    %58 = vector.extract_strided_slice %16 {offsets = [0, 1, 2, 0], sizes = [1, 8, 8, 16], strides = [1, 1, 1, 1]} : vector<1x10x16x16xf32> to vector<1x8x8x16xf32>
    %59 = vector.shape_cast %58 : vector<1x8x8x16xf32> to vector<8x8x16xf32>
    %c5 = arith.constant 5 : index
    %c0_16 = arith.constant 0 : index
    %60 = vector.load %arg5[%c5, %c0_16] : memref<9x16xf32, #tpu.memory_space<vmem>>, vector<1x16xf32>
    %61 = vector.shape_cast %60 : vector<1x16xf32> to vector<16xf32>
    %62 = vector.shape_cast %61 : vector<16xf32> to vector<1x1x16xf32>
    %63 = vector.broadcast %62 : vector<1x1x16xf32> to vector<8x8x16xf32>
    %64 = arith.mulf %59, %63 : vector<8x8x16xf32>
    %65 = arith.addf %57, %64 : vector<8x8x16xf32>
    %66 = vector.extract_strided_slice %16 {offsets = [0, 2, 0, 0], sizes = [1, 8, 8, 16], strides = [1, 1, 1, 1]} : vector<1x10x16x16xf32> to vector<1x8x8x16xf32>
    %67 = vector.shape_cast %66 : vector<1x8x8x16xf32> to vector<8x8x16xf32>
    %c6 = arith.constant 6 : index
    %c0_17 = arith.constant 0 : index
    %68 = vector.load %arg5[%c6, %c0_17] : memref<9x16xf32, #tpu.memory_space<vmem>>, vector<1x16xf32>
    %69 = vector.shape_cast %68 : vector<1x16xf32> to vector<16xf32>
    %70 = vector.shape_cast %69 : vector<16xf32> to vector<1x1x16xf32>
    %71 = vector.broadcast %70 : vector<1x1x16xf32> to vector<8x8x16xf32>
    %72 = arith.mulf %67, %71 : vector<8x8x16xf32>
    %73 = arith.addf %65, %72 : vector<8x8x16xf32>
    %74 = vector.extract_strided_slice %16 {offsets = [0, 2, 1, 0], sizes = [1, 8, 8, 16], strides = [1, 1, 1, 1]} : vector<1x10x16x16xf32> to vector<1x8x8x16xf32>
    %75 = vector.shape_cast %74 : vector<1x8x8x16xf32> to vector<8x8x16xf32>
    %c7 = arith.constant 7 : index
    %c0_18 = arith.constant 0 : index
    %76 = vector.load %arg5[%c7, %c0_18] : memref<9x16xf32, #tpu.memory_space<vmem>>, vector<1x16xf32>
    %77 = vector.shape_cast %76 : vector<1x16xf32> to vector<16xf32>
    %78 = vector.shape_cast %77 : vector<16xf32> to vector<1x1x16xf32>
    %79 = vector.broadcast %78 : vector<1x1x16xf32> to vector<8x8x16xf32>
    %80 = arith.mulf %75, %79 : vector<8x8x16xf32>
    %81 = arith.addf %73, %80 : vector<8x8x16xf32>
    %82 = vector.extract_strided_slice %16 {offsets = [0, 2, 2, 0], sizes = [1, 8, 8, 16], strides = [1, 1, 1, 1]} : vector<1x10x16x16xf32> to vector<1x8x8x16xf32>
    %83 = vector.shape_cast %82 : vector<1x8x8x16xf32> to vector<8x8x16xf32>
    %c8 = arith.constant 8 : index
    %c0_19 = arith.constant 0 : index
    %84 = vector.load %arg5[%c8, %c0_19] : memref<9x16xf32, #tpu.memory_space<vmem>>, vector<1x16xf32>
    %85 = vector.shape_cast %84 : vector<1x16xf32> to vector<16xf32>
    %86 = vector.shape_cast %85 : vector<16xf32> to vector<1x1x16xf32>
    %87 = vector.broadcast %86 : vector<1x1x16xf32> to vector<8x8x16xf32>
    %88 = arith.mulf %83, %87 : vector<8x8x16xf32>
    %89 = arith.addf %81, %88 : vector<8x8x16xf32>
    %c0_20 = arith.constant 0 : index
    %c0_21 = arith.constant 0 : index
    %90 = vector.load %arg6[%c0_20, %c0_21] : memref<1x16xf32, #tpu.memory_space<vmem>>, vector<1x16xf32>
    %91 = vector.shape_cast %90 : vector<1x16xf32> to vector<16xf32>
    %92 = vector.shape_cast %91 : vector<16xf32> to vector<1x1x16xf32>
    %93 = vector.broadcast %92 : vector<1x1x16xf32> to vector<8x8x16xf32>
    %94 = arith.addf %89, %93 : vector<8x8x16xf32>
    %95 = arith.negf %94 : vector<8x8x16xf32>
    %96 = math.exp %95 : vector<8x8x16xf32>
    %cst_22 = arith.constant 1.000000e+00 : f32
    %97 = vector.broadcast %cst_22 : f32 to vector<8x8x16xf32>
    %98 = arith.addf %97, %96 : vector<8x8x16xf32>
    %99 = arith.divf %97, %98 : vector<8x8x16xf32>
    %100 = arith.mulf %94, %99 : vector<8x8x16xf32>
    %cst_23 = arith.constant dense<0.000000e+00> : vector<16xf32>
    %101 = vector.multi_reduction <add>, %100, %cst_23 [0, 1] : vector<8x8x16xf32> to vector<16xf32>
    %cst_24 = arith.constant 6.400000e+01 : f32
    %102 = vector.broadcast %cst_24 : f32 to vector<16xf32>
    %103 = arith.divf %101, %102 : vector<16xf32>
    %104 = vector.shape_cast %103 : vector<16xf32> to vector<1x16xf32>
    %c0_25 = arith.constant 0 : index
    %c0_26 = arith.constant 0 : index
    %105 = vector.load %arg7[%c0_25, %c0_26] : memref<16x2xf32, #tpu.memory_space<vmem>>, vector<16x2xf32>
    %cst_27 = arith.constant dense<0.000000e+00> : vector<1x2xf32>
    %106 = tpu.matmul %104, %105, %cst_27 {dimension_numbers = #tpu.dot_dimension_numbers<[1], [0], [0], [1], [0, 0, 1, 1], [], []>} : vector<1x16xf32>, vector<16x2xf32>, vector<1x2xf32> -> vector<1x2xf32>
    %c0_28 = arith.constant 0 : index
    %c0_29 = arith.constant 0 : index
    %107 = vector.load %arg8[%c0_28, %c0_29] : memref<1x2xf32, #tpu.memory_space<vmem>>, vector<1x2xf32>
    %108 = arith.addf %106, %107 : vector<1x2xf32>
    %109 = arith.negf %108 : vector<1x2xf32>
    %110 = math.exp %109 : vector<1x2xf32>
    %cst_30 = arith.constant 1.000000e+00 : f32
    %111 = vector.broadcast %cst_30 : f32 to vector<1x2xf32>
    %112 = arith.addf %111, %110 : vector<1x2xf32>
    %113 = arith.divf %111, %112 : vector<1x2xf32>
    %114 = arith.mulf %108, %113 : vector<1x2xf32>
    %c0_31 = arith.constant 0 : index
    %c0_32 = arith.constant 0 : index
    %115 = vector.load %arg9[%c0_31, %c0_32] : memref<2x16xf32, #tpu.memory_space<vmem>>, vector<2x16xf32>
    %cst_33 = arith.constant dense<0.000000e+00> : vector<1x16xf32>
    %116 = tpu.matmul %114, %115, %cst_33 {dimension_numbers = #tpu.dot_dimension_numbers<[1], [0], [0], [1], [0, 0, 1, 1], [], []>} : vector<1x2xf32>, vector<2x16xf32>, vector<1x16xf32> -> vector<1x16xf32>
    %c0_34 = arith.constant 0 : index
    %c0_35 = arith.constant 0 : index
    %117 = vector.load %arg10[%c0_34, %c0_35] : memref<1x16xf32, #tpu.memory_space<vmem>>, vector<1x16xf32>
    %118 = arith.addf %116, %117 : vector<1x16xf32>
    %119 = arith.negf %118 : vector<1x16xf32>
    %120 = math.exp %119 : vector<1x16xf32>
    %cst_36 = arith.constant 1.000000e+00 : f32
    %121 = vector.broadcast %cst_36 : f32 to vector<1x16xf32>
    %122 = arith.addf %121, %120 : vector<1x16xf32>
    %123 = arith.divf %121, %122 : vector<1x16xf32>
    %124 = vector.shape_cast %123 : vector<1x16xf32> to vector<1x1x16xf32>
    %125 = vector.broadcast %124 : vector<1x1x16xf32> to vector<8x8x16xf32>
    %126 = arith.mulf %100, %125 : vector<8x8x16xf32>
    %127 = vector.shape_cast %126 : vector<8x8x16xf32> to vector<64x16xf32>
    %c0_37 = arith.constant 0 : index
    %c0_38 = arith.constant 0 : index
    %128 = vector.load %arg11[%c0_37, %c0_38] : memref<16x8xf32, #tpu.memory_space<vmem>>, vector<16x8xf32>
    %cst_39 = arith.constant dense<0.000000e+00> : vector<64x8xf32>
    %129 = tpu.matmul %127, %128, %cst_39 {dimension_numbers = #tpu.dot_dimension_numbers<[1], [0], [0], [1], [0, 0, 1, 1], [], []>} : vector<64x16xf32>, vector<16x8xf32>, vector<64x8xf32> -> vector<64x8xf32>
    %c0_40 = arith.constant 0 : index
    %c0_41 = arith.constant 0 : index
    %130 = vector.load %arg12[%c0_40, %c0_41] : memref<1x8xf32, #tpu.memory_space<vmem>>, vector<1x8xf32>
    %131 = vector.broadcast %130 : vector<1x8xf32> to vector<64x8xf32>
    %132 = arith.addf %129, %131 : vector<64x8xf32>
    %c0_42 = arith.constant 0 : index
    %c0_43 = arith.constant 0 : index
    %c0_44 = arith.constant 0 : index
    %133 = vector.load %arg13[%c0_42, %c0_43, %c0_44] : memref<1x64x8xf32, #tpu.memory_space<vmem>>, vector<1x64x8xf32>
    %134 = vector.shape_cast %133 : vector<1x64x8xf32> to vector<64x8xf32>
    %135 = arith.addf %132, %134 : vector<64x8xf32>
    %c0_45 = arith.constant 0 : index
    %c0_46 = arith.constant 0 : index
    %c0_47 = arith.constant 0 : index
    %136 = vector.load %arg14[%c0_45, %c0_46, %c0_47] : memref<1x64x8xf32, #tpu.memory_space<vmem>>, vector<1x64x8xf32>
    %137 = vector.shape_cast %136 : vector<1x64x8xf32> to vector<64x8xf32>
    %138 = vector.shape_cast %135 : vector<64x8xf32> to vector<1x64x8xf32>
    tpu.vector_store %arg14[%c0_45, %c0_46, %c0_47], %138 {strides = array<i32>} : memref<1x64x8xf32, #tpu.memory_space<vmem>>, vector<1x64x8xf32>,
    return
  }
  func.func @transform_0(%arg0: i32) -> (i32, i32, i32) {
    %c0_i32 = arith.constant 0 : i32
    %c0_i32_0 = arith.constant 0 : i32
    %c0_i32_1 = arith.constant 0 : i32
    return %arg0, %c0_i32, %c0_i32_0 : i32, i32, i32
  }
  func.func @transform_1(%arg0: i32) -> (i32, i32) {
    %c0_i32 = arith.constant 0 : i32
    %c0_i32_0 = arith.constant 0 : i32
    %c0_i32_1 = arith.constant 0 : i32
    return %c0_i32, %c0_i32_0 : i32, i32
  }
  func.func @transform_2(%arg0: i32) -> (i32, i32) {
    %c0_i32 = arith.constant 0 : i32
    %c0_i32_0 = arith.constant 0 : i32
    %c0_i32_1 = arith.constant 0 : i32
    return %c0_i32, %c0_i32_0 : i32, i32
  }
  func.func @transform_3(%arg0: i32) -> (i32, i32) {
    %c0_i32 = arith.constant 0 : i32
    %c0_i32_0 = arith.constant 0 : i32
    %c0_i32_1 = arith.constant 0 : i32
    return %c0_i32, %c0_i32_0 : i32, i32
  }
  func.func @transform_4(%arg0: i32) -> (i32, i32) {
    %c0_i32 = arith.constant 0 : i32
    %c0_i32_0 = arith.constant 0 : i32
    %c0_i32_1 = arith.constant 0 : i32
    return %c0_i32, %c0_i32_0 : i32, i32
  }
  func.func @transform_5(%arg0: i32) -> (i32, i32) {
    %c0_i32 = arith.constant 0 : i32
    %c0_i32_0 = arith.constant 0 : i32
    %c0_i32_1 = arith.constant 0 : i32
    return %c0_i32, %c0_i32_0 : i32, i32
  }
  func.func @transform_6(%arg0: i32) -> (i32, i32) {
    %c0_i32 = arith.constant 0 : i32
    %c0_i32_0 = arith.constant 0 : i32
    %c0_i32_1 = arith.constant 0 : i32
    return %c0_i32, %c0_i32_0 : i32, i32
  }
  func.func @transform_7(%arg0: i32) -> (i32, i32) {
    %c0_i32 = arith.constant 0 : i32
    %c0_i32_0 = arith.constant 0 : i32
    %c0_i32_1 = arith.constant 0 : i32
    return %c0_i32, %c0_i32_0 : i32, i32
  }
  func.func @transform_8(%arg0: i32) -> (i32, i32) {
    %c0_i32 = arith.constant 0 : i32
    %c0_i32_0 = arith.constant 0 : i32
    %c0_i32_1 = arith.constant 0 : i32
    return %c0_i32, %c0_i32_0 : i32, i32
  }
  func.func @transform_9(%arg0: i32) -> (i32, i32) {
    %c0_i32 = arith.constant 0 : i32
    %c0_i32_0 = arith.constant 0 : i32
    %c0_i32_1 = arith.constant 0 : i32
    return %c0_i32, %c0_i32_0 : i32, i32
  }
  func.func @transform_10(%arg0: i32) -> (i32, i32) {
    %c0_i32 = arith.constant 0 : i32
    %c0_i32_0 = arith.constant 0 : i32
    %c0_i32_1 = arith.constant 0 : i32
    return %c0_i32, %c0_i32_0 : i32, i32
  }
  func.func @transform_11(%arg0: i32) -> (i32, i32) {
    %c0_i32 = arith.constant 0 : i32
    %c0_i32_0 = arith.constant 0 : i32
    %c0_i32_1 = arith.constant 0 : i32
    return %c0_i32, %c0_i32_0 : i32, i32
  }
  func.func @transform_12(%arg0: i32) -> (i32, i32, i32) {
    %c0_i32 = arith.constant 0 : i32
    %c0_i32_0 = arith.constant 0 : i32
    %c0_i32_1 = arith.constant 0 : i32
    return %arg0, %c0_i32, %c0_i32_0 : i32, i32, i32
  }
  func.func @transform_13(%arg0: i32) -> (i32, i32, i32) {
    %c0_i32 = arith.constant 0 : i32
    %c0_i32_0 = arith.constant 0 : i32
    %c0_i32_1 = arith.constant 0 : i32
    return %arg0, %c0_i32, %c0_i32_0 : i32, i32, i32
  }
}

</mosaic_0001>

<llo_original>
// kernel: _lambda_.3
$region0: #{_lambda_.3}
  #allocation0 [shape = 'u32[]', space=smem, size = 0x4, offset = 0x4, fixed_abs, tag = 'smem constant byte address 0x4 - core index']
  #allocation1 [shape = 'u32[144,128]{1,0:T(1,128)}', space=vmem, size = 0x12000, scoped, tag = 'internal scratch']
  %s0 = inlined_call_operand.vmem [shape: f32[2,160,8], index: 0, kind: input, shape index: {}]
  %s1 = inlined_call_operand.vmem [shape: f32[160,1], index: 1, kind: input, shape index: {}]
  %s2 = inlined_call_operand.vmem [shape: f32[8,16], index: 2, kind: input, shape index: {}]
  %s3 = inlined_call_operand.vmem [shape: f32[1,16], index: 3, kind: input, shape index: {}]
  %s4 = inlined_call_operand.vmem [shape: f32[9,16], index: 4, kind: input, shape index: {}]
  %s5 = inlined_call_operand.vmem [shape: f32[1,16], index: 5, kind: input, shape index: {}]
  %s6 = inlined_call_operand.vmem [shape: f32[16,2], index: 6, kind: input, shape index: {}]
  %s7 = inlined_call_operand.vmem [shape: f32[1,2], index: 7, kind: input, shape index: {}]
  %s8 = inlined_call_operand.vmem [shape: f32[2,16], index: 8, kind: input, shape index: {}]
  %s9 = inlined_call_operand.vmem [shape: f32[1,16], index: 9, kind: input, shape index: {}]
  %s10 = inlined_call_operand.vmem [shape: f32[16,8], index: 10, kind: input, shape index: {}]
  %s11 = inlined_call_operand.vmem [shape: f32[1,8], index: 11, kind: input, shape index: {}]
  %s12 = inlined_call_operand.vmem [shape: f32[2,64,8], index: 12, kind: input, shape index: {}]
  %s13 = inlined_call_operand.vmem [shape: f32[2,64,8], index: 13, kind: output, shape index: {}]
  %s14 = sld [smem:[#allocation0]]
  $region85: #{_lambda_.3} parent=0
    _
  %s16 = ssub.s32 1, %s14
  %s17 = scalar_select 0, %s16, %s14
  loop: start=0, step=1, limit=4
  $region2: #{_lambda_.3} parent=0 // loop_pre_header
    _
  $region3: #{_lambda_.3} parent=0 // loop_header
    %s19 = sphi 0, %s23
    %p20 = scmp.ge.s32.totalorder %s19, 4
    %s29 = sphi 0, %s31
    %s32 = sphi 0, %s29
    %s33 = sphi 0, %s32
    %s49 = sphi 0, %s33
    %s53 = sphi 0, %s53
    %s55 = sphi 0, %s53
    %s56 = sphi 0, %s55
    %s70 = sphi 0, %s56
    %s74 = sphi 0, %s74
    %s76 = sphi 0, %s74
    %s77 = sphi 0, %s76
    %s91 = sphi 0, %s77
    %s95 = sphi 0, %s95
    %s97 = sphi 0, %s95
    %s98 = sphi 0, %s97
    %s112 = sphi 0, %s98
    %s116 = sphi 0, %s116
    %s118 = sphi 0, %s116
    %s119 = sphi 0, %s118
    %s133 = sphi 0, %s119
    %s137 = sphi 0, %s137
    %s139 = sphi 0, %s137
    %s140 = sphi 0, %s139
    %s154 = sphi 0, %s140
    %s158 = sphi 0, %s158
    %s160 = sphi 0, %s158
    %s161 = sphi 0, %s160
    %s175 = sphi 0, %s161
    %s179 = sphi 0, %s179
    %s181 = sphi 0, %s179
    %s182 = sphi 0, %s181
    %s196 = sphi 0, %s182
    %s200 = sphi 0, %s200
    %s202 = sphi 0, %s200
    %s203 = sphi 0, %s202
    %s217 = sphi 0, %s203
    %s221 = sphi 0, %s221
    %s223 = sphi 0, %s221
    %s224 = sphi 0, %s223
    %s238 = sphi 0, %s224
    %s242 = sphi 0, %s242
    %s244 = sphi 0, %s242
    %s245 = sphi 0, %s244
    %s259 = sphi 0, %s245
    %s263 = sphi 0, %s263
    %s265 = sphi 0, %s263
    %s266 = sphi 0, %s265
    %s280 = sphi 0, %s266
    %s286 = sphi 0, %s288
    %s289 = sphi 0, %s286
    %s290 = sphi 0, %s289
    %s306 = sphi 0, %s290
    %s312 = sphi 0, %s314
    %s315 = sphi 0, %s312
    %s316 = sphi 0, %s315
    %s332 = sphi 0, %s316
  $region4: #{_lambda_.3} parent=0 // loop_header_branch
    %22 = sbr.rel (%p20) target = $region8
  $region5: #{_lambda_.3} parent=0 // loop_body
    %s24 = ssub.s32 %s19, 1
    %s25 = ssub.s32 %s19, 2
    %s26 = sadd.s32 %s19, 1
    %s27 = ssub.s32 %s19, %s26
    %p28 = scmp.eq.s32.totalorder %s27, 0
    %s30 = sadd.s32 %s29, 1
    %s31 = scalar_select %p28, %s29, %s30
    %p34 = pneg %p28
    %p35 = scmp.eq.s32.totalorder %s19, 1
    %p36 = por %p34, %p35
    %p37 = scmp.ne.s32.totalorder %s29, %s32
    %p38 = scmp.eq.s32.totalorder %s19, 0
    %p39 = por %p37, %p38
    %p40 = scmp.ne.s32.totalorder %s29, %s32
    %p41 = scmp.eq.s32.totalorder %s24, 1
    %p42 = por %p40, %p41
    %p43 = scmp.ne.s32.totalorder %s32, %s33
    %p44 = scmp.eq.s32.totalorder %s24, 0
    %p45 = por %p43, %p44
    %p46 = scmp.ne.s32.totalorder %s32, %s33
    %p47 = scmp.eq.s32.totalorder %s25, 1
    %p48 = por %p46, %p47
    %p50 = scmp.ne.s32.totalorder %s33, %s49
    %p51 = scmp.eq.s32.totalorder %s25, 0
    %p52 = por %p50, %p51
    %s54 = sadd.s32 %s53, 1
    %p57 = scmp.eq.s32.totalorder %s19, 1
    %p58 = scmp.ne.s32.totalorder %s53, %s55
    %p59 = scmp.eq.s32.totalorder %s19, 0
    %p60 = por %p58, %p59
    %p61 = scmp.ne.s32.totalorder %s53, %s55
    %p62 = scmp.eq.s32.totalorder %s24, 1
    %p63 = por %p61, %p62
    %p64 = scmp.ne.s32.totalorder %s55, %s56
    %p65 = scmp.eq.s32.totalorder %s24, 0
    %p66 = por %p64, %p65
    %p67 = scmp.ne.s32.totalorder %s55, %s56
    %p68 = scmp.eq.s32.totalorder %s25, 1
    %p69 = por %p67, %p68
    %p71 = scmp.ne.s32.totalorder %s56, %s70
    %p72 = scmp.eq.s32.totalorder %s25, 0
    %p73 = por %p71, %p72
    %s75 = sadd.s32 %s74, 1
    %p78 = scmp.eq.s32.totalorder %s19, 1
    %p79 = scmp.ne.s32.totalorder %s74, %s76
    %p80 = scmp.eq.s32.totalorder %s19, 0
    %p81 = por %p79, %p80
    %p82 = scmp.ne.s32.totalorder %s74, %s76
    %p83 = scmp.eq.s32.totalorder %s24, 1
    %p84 = por %p82, %p83
    %p85 = scmp.ne.s32.totalorder %s76, %s77
    %p86 = scmp.eq.s32.totalorder %s24, 0
    %p87 = por %p85, %p86
    %p88 = scmp.ne.s32.totalorder %s76, %s77
    %p89 = scmp.eq.s32.totalorder %s25, 1
    %p90 = por %p88, %p89
    %p92 = scmp.ne.s32.totalorder %s77, %s91
    %p93 = scmp.eq.s32.totalorder %s25, 0
    %p94 = por %p92, %p93
    %s96 = sadd.s32 %s95, 1
    %p99 = scmp.eq.s32.totalorder %s19, 1
    %p100 = scmp.ne.s32.totalorder %s95, %s97
    %p101 = scmp.eq.s32.totalorder %s19, 0
    %p102 = por %p100, %p101
    %p103 = scmp.ne.s32.totalorder %s95, %s97
    %p104 = scmp.eq.s32.totalorder %s24, 1
    %p105 = por %p103, %p104
    %p106 = scmp.ne.s32.totalorder %s97, %s98
    %p107 = scmp.eq.s32.totalorder %s24, 0
    %p108 = por %p106, %p107
    %p109 = scmp.ne.s32.totalorder %s97, %s98
    %p110 = scmp.eq.s32.totalorder %s25, 1
    %p111 = por %p109, %p110
    %p113 = scmp.ne.s32.totalorder %s98, %s112
    %p114 = scmp.eq.s32.totalorder %s25, 0
    %p115 = por %p113, %p114
    %s117 = sadd.s32 %s116, 1
    %p120 = scmp.eq.s32.totalorder %s19, 1
    %p121 = scmp.ne.s32.totalorder %s116, %s118
    %p122 = scmp.eq.s32.totalorder %s19, 0
    %p123 = por %p121, %p122
    %p124 = scmp.ne.s32.totalorder %s116, %s118
    %p125 = scmp.eq.s32.totalorder %s24, 1
    %p126 = por %p124, %p125
    %p127 = scmp.ne.s32.totalorder %s118, %s119
    %p128 = scmp.eq.s32.totalorder %s24, 0
    %p129 = por %p127, %p128
    %p130 = scmp.ne.s32.totalorder %s118, %s119
    %p131 = scmp.eq.s32.totalorder %s25, 1
    %p132 = por %p130, %p131
    %p134 = scmp.ne.s32.totalorder %s119, %s133
    %p135 = scmp.eq.s32.totalorder %s25, 0
    %p136 = por %p134, %p135
    %s138 = sadd.s32 %s137, 1
    %p141 = scmp.eq.s32.totalorder %s19, 1
    %p142 = scmp.ne.s32.totalorder %s137, %s139
    %p143 = scmp.eq.s32.totalorder %s19, 0
    %p144 = por %p142, %p143
    %p145 = scmp.ne.s32.totalorder %s137, %s139
    %p146 = scmp.eq.s32.totalorder %s24, 1
    %p147 = por %p145, %p146
    %p148 = scmp.ne.s32.totalorder %s139, %s140
    %p149 = scmp.eq.s32.totalorder %s24, 0
    %p150 = por %p148, %p149
    %p151 = scmp.ne.s32.totalorder %s139, %s140
    %p152 = scmp.eq.s32.totalorder %s25, 1
    %p153 = por %p151, %p152
    %p155 = scmp.ne.s32.totalorder %s140, %s154
    %p156 = scmp.eq.s32.totalorder %s25, 0
    %p157 = por %p155, %p156
    %s159 = sadd.s32 %s158, 1
    %p162 = scmp.eq.s32.totalorder %s19, 1
    %p163 = scmp.ne.s32.totalorder %s158, %s160
    %p164 = scmp.eq.s32.totalorder %s19, 0
    %p165 = por %p163, %p164
    %p166 = scmp.ne.s32.totalorder %s158, %s160
    %p167 = scmp.eq.s32.totalorder %s24, 1
    %p168 = por %p166, %p167
    %p169 = scmp.ne.s32.totalorder %s160, %s161
    %p170 = scmp.eq.s32.totalorder %s24, 0
    %p171 = por %p169, %p170
    %p172 = scmp.ne.s32.totalorder %s160, %s161
    %p173 = scmp.eq.s32.totalorder %s25, 1
    %p174 = por %p172, %p173
    %p176 = scmp.ne.s32.totalorder %s161, %s175
    %p177 = scmp.eq.s32.totalorder %s25, 0
    %p178 = por %p176, %p177
    %s180 = sadd.s32 %s179, 1
    %p183 = scmp.eq.s32.totalorder %s19, 1
    %p184 = scmp.ne.s32.totalorder %s179, %s181
    %p185 = scmp.eq.s32.totalorder %s19, 0
    %p186 = por %p184, %p185
    %p187 = scmp.ne.s32.totalorder %s179, %s181
    %p188 = scmp.eq.s32.totalorder %s24, 1
    %p189 = por %p187, %p188
    %p190 = scmp.ne.s32.totalorder %s181, %s182
    %p191 = scmp.eq.s32.totalorder %s24, 0
    %p192 = por %p190, %p191
    %p193 = scmp.ne.s32.totalorder %s181, %s182
    %p194 = scmp.eq.s32.totalorder %s25, 1
    %p195 = por %p193, %p194
    %p197 = scmp.ne.s32.totalorder %s182, %s196
    %p198 = scmp.eq.s32.totalorder %s25, 0
    %p199 = por %p197, %p198
    %s201 = sadd.s32 %s200, 1
    %p204 = scmp.eq.s32.totalorder %s19, 1
    %p205 = scmp.ne.s32.totalorder %s200, %s202
    %p206 = scmp.eq.s32.totalorder %s19, 0
    %p207 = por %p205, %p206
    %p208 = scmp.ne.s32.totalorder %s200, %s202
    %p209 = scmp.eq.s32.totalorder %s24, 1
    %p210 = por %p208, %p209
    %p211 = scmp.ne.s32.totalorder %s202, %s203
    %p212 = scmp.eq.s32.totalorder %s24, 0
    %p213 = por %p211, %p212
    %p214 = scmp.ne.s32.totalorder %s202, %s203
    %p215 = scmp.eq.s32.totalorder %s25, 1
    %p216 = por %p214, %p215
    %p218 = scmp.ne.s32.totalorder %s203, %s217
    %p219 = scmp.eq.s32.totalorder %s25, 0
    %p220 = por %p218, %p219
    %s222 = sadd.s32 %s221, 1
    %p225 = scmp.eq.s32.totalorder %s19, 1
    %p226 = scmp.ne.s32.totalorder %s221, %s223
    %p227 = scmp.eq.s32.totalorder %s19, 0
    %p228 = por %p226, %p227
    %p229 = scmp.ne.s32.totalorder %s221, %s223
    %p230 = scmp.eq.s32.totalorder %s24, 1
    %p231 = por %p229, %p230
    %p232 = scmp.ne.s32.totalorder %s223, %s224
    %p233 = scmp.eq.s32.totalorder %s24, 0
    %p234 = por %p232, %p233
    %p235 = scmp.ne.s32.totalorder %s223, %s224
    %p236 = scmp.eq.s32.totalorder %s25, 1
    %p237 = por %p235, %p236
    %p239 = scmp.ne.s32.totalorder %s224, %s238
    %p240 = scmp.eq.s32.totalorder %s25, 0
    %p241 = por %p239, %p240
    %s243 = sadd.s32 %s242, 1
    %p246 = scmp.eq.s32.totalorder %s19, 1
    %p247 = scmp.ne.s32.totalorder %s242, %s244
    %p248 = scmp.eq.s32.totalorder %s19, 0
    %p249 = por %p247, %p248
    %p250 = scmp.ne.s32.totalorder %s242, %s244
    %p251 = scmp.eq.s32.totalorder %s24, 1
    %p252 = por %p250, %p251
    %p253 = scmp.ne.s32.totalorder %s244, %s245
    %p254 = scmp.eq.s32.totalorder %s24, 0
    %p255 = por %p253, %p254
    %p256 = scmp.ne.s32.totalorder %s244, %s245
    %p257 = scmp.eq.s32.totalorder %s25, 1
    %p258 = por %p256, %p257
    %p260 = scmp.ne.s32.totalorder %s245, %s259
    %p261 = scmp.eq.s32.totalorder %s25, 0
    %p262 = por %p260, %p261
    %s264 = sadd.s32 %s263, 1
    %p267 = scmp.eq.s32.totalorder %s19, 1
    %p268 = scmp.ne.s32.totalorder %s263, %s265
    %p269 = scmp.eq.s32.totalorder %s19, 0
    %p270 = por %p268, %p269
    %p271 = scmp.ne.s32.totalorder %s263, %s265
    %p272 = scmp.eq.s32.totalorder %s24, 1
    %p273 = por %p271, %p272
    %p274 = scmp.ne.s32.totalorder %s265, %s266
    %p275 = scmp.eq.s32.totalorder %s24, 0
    %p276 = por %p274, %p275
    %p277 = scmp.ne.s32.totalorder %s265, %s266
    %p278 = scmp.eq.s32.totalorder %s25, 1
    %p279 = por %p277, %p278
    %p281 = scmp.ne.s32.totalorder %s266, %s280
    %p282 = scmp.eq.s32.totalorder %s25, 0
    %p283 = por %p281, %p282
    %s284 = ssub.s32 %s19, %s26
    %p285 = scmp.eq.s32.totalorder %s284, 0
    %s287 = sadd.s32 %s286, 1
    %s288 = scalar_select %p285, %s286, %s287
    %p291 = pneg %p285
    %p292 = scmp.eq.s32.totalorder %s19, 1
    %p293 = por %p291, %p292
    %p294 = scmp.ne.s32.totalorder %s286, %s289
    %p295 = scmp.eq.s32.totalorder %s19, 0
    %p296 = por %p294, %p295
    %p297 = scmp.ne.s32.totalorder %s286, %s289
    %p298 = scmp.eq.s32.totalorder %s24, 1
    %p299 = por %p297, %p298
    %p300 = scmp.ne.s32.totalorder %s289, %s290
    %p301 = scmp.eq.s32.totalorder %s24, 0
    %p302 = por %p300, %p301
    %p303 = scmp.ne.s32.totalorder %s289, %s290
    %p304 = scmp.eq.s32.totalorder %s25, 1
    %p305 = por %p303, %p304
    %p307 = scmp.ne.s32.totalorder %s290, %s306
    %p308 = scmp.eq.s32.totalorder %s25, 0
    %p309 = por %p307, %p308
    %s310 = ssub.s32 %s19, %s26
    %p311 = scmp.eq.s32.totalorder %s310, 0
    %s313 = sadd.s32 %s312, 1
    %s314 = scalar_select %p311, %s312, %s313
    %p317 = pneg %p311
    %p318 = scmp.eq.s32.totalorder %s19, 1
    %p319 = por %p317, %p318
    %p320 = scmp.ne.s32.totalorder %s312, %s315
    %p321 = scmp.eq.s32.totalorder %s19, 0
    %p322 = por %p320, %p321
    %p323 = scmp.ne.s32.totalorder %s312, %s315
    %p324 = scmp.eq.s32.totalorder %s24, 1
    %p325 = por %p323, %p324
    %p326 = scmp.ne.s32.totalorder %s315, %s316
    %p327 = scmp.eq.s32.totalorder %s24, 0
    %p328 = por %p326, %p327
    %p329 = scmp.ne.s32.totalorder %s315, %s316
    %p330 = scmp.eq.s32.totalorder %s25, 1
    %p331 = por %p329, %p330
    %p333 = scmp.ne.s32.totalorder %s316, %s332
    %p334 = scmp.eq.s32.totalorder %s25, 0
    %p335 = por %p333, %p334
    %p336 = scmp.le.s32.totalorder 1, %s19
    %p337 = scmp.lt.s32.totalorder %s19, 3
    %p338 = pnand %p336, %p337
    %p339 = pneg %p338
    // Predicated region
    $region9: #{_lambda_.3} parent=5 // pred_check
      _
    $region10: #{_lambda_.3} parent=5 // pred_check_branch
      %341 = sbr.rel (%p338) target = $region12
    $region11: #{_lambda_.3} parent=5 // pred_region
      %s342 = ssub.s32 %s19, 1
      // Predicated region
      $region13: #{_lambda_.3} parent=11 // pred_check
        %p343 = pneg %p66
      $region14: #{_lambda_.3} parent=11 // pred_check_branch
        %345 = sbr.rel (%p343) target = $region16
      $region15: #{_lambda_.3} parent=11 // pred_region
        _
      $region16: #{_lambda_.3} parent=11 // pred_fallthru
        _
      // Predicated region
      $region17: #{_lambda_.3} parent=11 // pred_check
        %p346 = pneg %p87
      $region18: #{_lambda_.3} parent=11 // pred_check_branch
        %348 = sbr.rel (%p346) target = $region20
      $region19: #{_lambda_.3} parent=11 // pred_region
        _
      $region20: #{_lambda_.3} parent=11 // pred_fallthru
        _
      // Predicated region
      $region21: #{_lambda_.3} parent=11 // pred_check
        %p349 = pneg %p108
      $region22: #{_lambda_.3} parent=11 // pred_check_branch
        %351 = sbr.rel (%p349) target = $region24
      $region23: #{_lambda_.3} parent=11 // pred_region
        _
      $region24: #{_lambda_.3} parent=11 // pred_fallthru
        _
      // Predicated region
      $region25: #{_lambda_.3} parent=11 // pred_check
        %p352 = pneg %p129
      $region26: #{_lambda_.3} parent=11 // pred_check_branch
        %354 = sbr.rel (%p352) target = $region28
      $region27: #{_lambda_.3} parent=11 // pred_region
        _
      $region28: #{_lambda_.3} parent=11 // pred_fallthru
        _
      // Predicated region
      $region29: #{_lambda_.3} parent=11 // pred_check
        %p355 = pneg %p150
      $region30: #{_lambda_.3} parent=11 // pred_check_branch
        %357 = sbr.rel (%p355) target = $region32
      $region31: #{_lambda_.3} parent=11 // pred_region
        _
      $region32: #{_lambda_.3} parent=11 // pred_fallthru
        _
      // Predicated region
      $region33: #{_lambda_.3} parent=11 // pred_check
        %p358 = pneg %p171
      $region34: #{_lambda_.3} parent=11 // pred_check_branch
        %360 = sbr.rel (%p358) target = $region36
      $region35: #{_lambda_.3} parent=11 // pred_region
        _
      $region36: #{_lambda_.3} parent=11 // pred_fallthru
        _
      // Predicated region
      $region37: #{_lambda_.3} parent=11 // pred_check
        %p361 = pneg %p192
      $region38: #{_lambda_.3} parent=11 // pred_check_branch
        %363 = sbr.rel (%p361) target = $region40
      $region39: #{_lambda_.3} parent=11 // pred_region
        _
      $region40: #{_lambda_.3} parent=11 // pred_fallthru
        _
      // Predicated region
      $region41: #{_lambda_.3} parent=11 // pred_check
        %p364 = pneg %p213
      $region42: #{_lambda_.3} parent=11 // pred_check_branch
        %366 = sbr.rel (%p364) target = $region44
      $region43: #{_lambda_.3} parent=11 // pred_region
        _
      $region44: #{_lambda_.3} parent=11 // pred_fallthru
        _
      // Predicated region
      $region45: #{_lambda_.3} parent=11 // pred_check
        %p367 = pneg %p234
      $region46: #{_lambda_.3} parent=11 // pred_check_branch
        %369 = sbr.rel (%p367) target = $region48
      $region47: #{_lambda_.3} parent=11 // pred_region
        _
      $region48: #{_lambda_.3} parent=11 // pred_fallthru
        _
      // Predicated region
      $region49: #{_lambda_.3} parent=11 // pred_check
        %p370 = pneg %p255
      $region50: #{_lambda_.3} parent=11 // pred_check_branch
        %372 = sbr.rel (%p370) target = $region52
      $region51: #{_lambda_.3} parent=11 // pred_region
        _
      $region52: #{_lambda_.3} parent=11 // pred_fallthru
        _
      // Predicated region
      $region53: #{_lambda_.3} parent=11 // pred_check
        %p373 = pneg %p276
      $region54: #{_lambda_.3} parent=11 // pred_check_branch
        %375 = sbr.rel (%p373) target = $region56
      $region55: #{_lambda_.3} parent=11 // pred_region
        _
      $region56: #{_lambda_.3} parent=11 // pred_fallthru
        _
    $region12: #{_lambda_.3} parent=5 // pred_fallthru
      _
    %p376 = scmp.lt.s32.totalorder %s19, 2
    // Predicated region
    $region57: #{_lambda_.3} parent=5 // pred_check
      %p377 = pneg %p376
    $region58: #{_lambda_.3} parent=5 // pred_check_branch
      %379 = sbr.rel (%p377) target = $region60
    $region59: #{_lambda_.3} parent=5 // pred_region
      // Predicated region
      $region61: #{_lambda_.3} parent=59 // pred_check
        %p380 = pneg %p39
      $region62: #{_lambda_.3} parent=59 // pred_check_branch
        %382 = sbr.rel (%p380) target = $region64
      $region63: #{_lambda_.3} parent=59 // pred_region
        %p383 = scmp.lt.s32.totalorder %s19, 1
        %s384 = scalar_select %p383, %s19, 1
        %s385 = smul.addr %s384, 20
        %s386 = smul.addr %s385, 8
        %s387 = scalar_lea.vmem %s0, %s386
      $region64: #{_lambda_.3} parent=59 // pred_fallthru
        _
      // Predicated region
      $region65: #{_lambda_.3} parent=59 // pred_check
        %p388 = pneg %p296
      $region66: #{_lambda_.3} parent=59 // pred_check_branch
        %390 = sbr.rel (%p388) target = $region68
      $region67: #{_lambda_.3} parent=59 // pred_region
        %p391 = scmp.lt.s32.totalorder %s19, 1
        %s392 = scalar_select %p391, %s19, 1
        %s393 = smul.addr %s392, 8
        %s394 = smul.addr %s393, 8
        %s395 = scalar_lea.vmem %s12, %s394
      $region68: #{_lambda_.3} parent=59 // pred_fallthru
        _
    $region60: #{_lambda_.3} parent=5 // pred_fallthru
      _
    %p396 = scmp.le.s32.totalorder 1, %s19
    %p397 = scmp.lt.s32.totalorder %s19, 3
    %p398 = pnand %p396, %p397
    %p399 = pneg %p398
    // Predicated region
    $region69: #{_lambda_.3} parent=5 // pred_check
      _
    $region70: #{_lambda_.3} parent=5 // pred_check_branch
      %401 = sbr.rel (%p398) target = $region72
    $region71: #{_lambda_.3} parent=5 // pred_region
      %s402 = ssub.s32 %s19, 1
      %p403 = scmp.lt.s32.totalorder %s24, 1
      %s404 = scalar_select %p403, %s24, 1
      %s405 = smul.addr %s404, 20
      %s406 = smul.addr %s405, 8
      %s407 = scalar_lea.vmem %s0, %s406
      %p408 = pneg %p45
      %p409 = pneg %p42
      %p410 = pneg %p66
      %p411 = pneg %p63
      %p412 = pneg %p87
      %p413 = pneg %p84
      %p414 = pneg %p108
      %p415 = pneg %p105
      %p416 = pneg %p129
      %p417 = pneg %p126
      %p418 = pneg %p150
      %p419 = pneg %p147
      %p420 = pneg %p171
      %p421 = pneg %p168
      %p422 = pneg %p192
      %p423 = pneg %p189
      %p424 = pneg %p213
      %p425 = pneg %p210
      %p426 = pneg %p234
      %p427 = pneg %p231
      %p428 = pneg %p255
      %p429 = pneg %p252
      %p430 = pneg %p276
      %p431 = pneg %p273
      %p432 = scmp.lt.s32.totalorder %s24, 1
      %s433 = scalar_select %p432, %s24, 1
      %s434 = smul.addr %s433, 8
      %s435 = smul.addr %s434, 8
      %s436 = scalar_lea.vmem %s12, %s435
      %p437 = pneg %p302
      %p438 = pneg %p299
      %p439 = pneg %p328
      %p440 = pneg %p325
      %p441 = scmp.lt.s32.totalorder %s24, 1
      %s442 = scalar_select %p441, %s24, 1
      %s443 = smul.addr %s442, 8
      %s444 = smul.addr %s443, 8
      %s445 = scalar_lea.vmem %s13, %s444
      %p446 = scmp.lt.s32.totalorder %s24, 1
      %s447 = scalar_select %p446, %s24, 1
      %s448 = smul.addr %s447, 20
      %s449 = smul.addr %s448, 8
      %s450 = scalar_lea.vmem %s0, %s449
      %p451 = scmp.lt.s32.totalorder %s24, 1
      %s452 = scalar_select %p451, %s24, 1
      %s453 = smul.addr %s452, 8
      %s454 = smul.addr %s453, 8
      %s455 = scalar_lea.vmem %s12, %s454
      %p456 = scmp.lt.s32.totalorder %s24, 1
      %s457 = scalar_select %p456, %s24, 1
      %s458 = smul.addr %s457, 8
      %s459 = smul.addr %s458, 8
      %s460 = scalar_lea.vmem %s13, %s459
      %v461 = vld [vmem:[%s450] sm:$0xff]
      %v462 = vld [vmem:[%s450 + $0x8] sm:$0xff]
      %v463 = vld [vmem:[%s450 + $0x10] sm:$0xff]
      %v464 = vld [vmem:[%s450 + $0x18] sm:$0xff]
      %v465 = vld [vmem:[%s450 + $0x20] sm:$0xff]
      %v466 = vld [vmem:[%s450 + $0x28] sm:$0xff]
      %v467 = vld [vmem:[%s450 + $0x30] sm:$0xff]
      %v468 = vld [vmem:[%s450 + $0x38] sm:$0xff]
      %v469 = vld [vmem:[%s450 + $0x40] sm:$0xff]
      %v470 = vld [vmem:[%s450 + $0x48] sm:$0xff]
      %v471 = vld [vmem:[%s450 + $0x50] sm:$0xff]
      %v472 = vld [vmem:[%s450 + $0x58] sm:$0xff]
      %v473 = vld [vmem:[%s450 + $0x60] sm:$0xff]
      %v474 = vld [vmem:[%s450 + $0x68] sm:$0xff]
      %v475 = vld [vmem:[%s450 + $0x70] sm:$0xff]
      %v476 = vld [vmem:[%s450 + $0x78] sm:$0xff]
      %v477 = vld [vmem:[%s450 + $0x80] sm:$0xff]
      %v478 = vld [vmem:[%s450 + $0x88] sm:$0xff]
      %v479 = vld [vmem:[%s450 + $0x90] sm:$0xff]
      %v480 = vld [vmem:[%s450 + $0x98] sm:$0xff]
      %v481 = vld [vmem:[%s2] sm:$0xff]
      %v482 = vld [vmem:[%s3] sm:$0x1]
      %v484 = vlaneseq
      %v485 = vshrl.u32 %v484, 7
      %v486 = vsub.s32 0, %v485
      %v487 = vrot.slane %v482, %v486
      %vm489 = vcmask 64512
      %v491 = vsel %vm489, %v461, 0
      %v494 = vsel %vm489, %v462, 0
      %v497 = vsel %vm489, %v463, 0
      %v500 = vsel %vm489, %v464, 0
      %v503 = vsel %vm489, %v465, 0
      %v506 = vsel %vm489, %v466, 0
      %v509 = vsel %vm489, %v467, 0
      %v512 = vsel %vm489, %v468, 0
      %v515 = vsel %vm489, %v469, 0
      %v518 = vsel %vm489, %v470, 0
      %v521 = vsel %vm489, %v471, 0
      %v524 = vsel %vm489, %v472, 0
      %v527 = vsel %vm489, %v473, 0
      %v530 = vsel %vm489, %v474, 0
      %v533 = vsel %vm489, %v475, 0
      %v536 = vsel %vm489, %v476, 0
      %v539 = vsel %vm489, %v477, 0
      %v542 = vsel %vm489, %v478, 0
      %v545 = vsel %vm489, %v479, 0
      %v548 = vsel %vm489, %v480, 0
      %550 = vmatprep.subr.mxu0 0.0
      %551 = vmatpush1.msra.mxu0 0.0
      %552 = vmatprep.subr.mxu0 0.0
      %553 = vmatpush1.msra.mxu0 0.0
      %554 = vmatprep.subr.mxu0 0.0
      %555 = vmatpush1.msra.mxu0 0.0
      %556 = vmatprep.subr.mxu0 0.0
      %557 = vmatpush1.msra.mxu0 0.0
      %558 = vmatprep.subr.mxu0 0.0
      %559 = vmatpush1.msra.mxu0 0.0
      %560 = vmatprep.subr.mxu0 0.0
      %561 = vmatpush1.msra.mxu0 0.0
      %562 = vmatprep.subr.mxu0 0.0
      %563 = vmatpush1.msra.mxu0 0.0
      %564 = vmatprep.subr.mxu0 0.0
      %565 = vmatpush1.msra.mxu0 0.0
      %566 = vmatprep.subr.mxu0 0.0
      %567 = vmatpush1.msra.mxu0 0.0
      %568 = vmatprep.subr.mxu0 0.0
      %569 = vmatpush1.msra.mxu0 0.0
      %570 = vmatprep.subr.mxu0 0.0
      %571 = vmatpush1.msra.mxu0 0.0
      %572 = vmatprep.subr.mxu0 0.0
      %573 = vmatpush1.msra.mxu0 0.0
      %574 = vmatprep.subr.mxu0 0.0
      %575 = vmatpush1.msra.mxu0 0.0
      %576 = vmatprep.subr.mxu0 0.0
      %577 = vmatpush1.msra.mxu0 0.0
      %578 = vmatprep.subr.mxu0 0.0
      %579 = vmatpush1.msra.mxu0 0.0
      %580 = vmatprep.subr.mxu0 0.0
      %581 = vmatpush1.msra.mxu0 %v481
      %582 = vmatprep.subr.mxu0 0.0
      %583 = vmatpush2.msra.mxu0 0.0
      %584 = vmatprep.subr.mxu0 0.0
      %585 = vmatpush2.msra.mxu0 0.0
      %586 = vmatprep.subr.mxu0 0.0
      %587 = vmatpush2.msra.mxu0 0.0
      %588 = vmatprep.subr.mxu0 0.0
      %589 = vmatpush2.msra.mxu0 0.0
      %590 = vmatprep.subr.mxu0 0.0
      %591 = vmatpush2.msra.mxu0 0.0
      %592 = vmatprep.subr.mxu0 0.0
      %593 = vmatpush2.msra.mxu0 0.0
      %594 = vmatprep.subr.mxu0 0.0
      %595 = vmatpush2.msra.mxu0 0.0
      %596 = vmatprep.subr.mxu0 0.0
      %597 = vmatpush2.msra.mxu0 0.0
      %598 = vmatprep.subr.mxu0 0.0
      %599 = vmatpush2.msra.mxu0 0.0
      %600 = vmatprep.subr.mxu0 0.0
      %601 = vmatpush2.msra.mxu0 0.0
      %602 = vmatprep.subr.mxu0 0.0
      %603 = vmatpush2.msra.mxu0 0.0
      %604 = vmatprep.subr.mxu0 0.0
      %605 = vmatpush2.msra.mxu0 0.0
      %606 = vmatprep.subr.mxu0 0.0
      %607 = vmatpush2.msra.mxu0 0.0
      %608 = vmatprep.subr.mxu0 0.0
      %609 = vmatpush2.msra.mxu0 0.0
      %610 = vmatprep.subr.mxu0 0.0
      %611 = vmatpush2.msra.mxu0 0.0
      %612 = vmatprep.subr.mxu0 0.0
      %613 = vmatpush2.msra.mxu0 0.0
      %614 = vmatprep.mubr.f32.mxu0 0.0
      %615 = vmatmul.mubr.f32.gmra.mxu0 %v491
      %v616 = vpop.f32.mrf.mxu0
      %v617 = vadd.f32 %v487, %v616
      %v618 = vpop.f32.mrf.mxu0
      %619 = vmatprep.mubr.f32.mxu0 0.0
      %620 = vmatmul.mubr.f32.gmra.mxu0 %v494
      %v621 = vpop.f32.mrf.mxu0
      %v622 = vadd.f32 %v487, %v621
      %v623 = vpop.f32.mrf.mxu0
      %624 = vmatprep.mubr.f32.mxu0 0.0
      %625 = vmatmul.mubr.f32.gmra.mxu0 %v497
      %v626 = vpop.f32.mrf.mxu0
      %v627 = vadd.f32 %v487, %v626
      %v628 = vpop.f32.mrf.mxu0
      %629 = vmatprep.mubr.f32.mxu0 0.0
      %630 = vmatmul.mubr.f32.gmra.mxu0 %v500
      %v631 = vpop.f32.mrf.mxu0
      %v632 = vadd.f32 %v487, %v631
      %v633 = vpop.f32.mrf.mxu0
      %634 = vmatprep.mubr.f32.mxu0 0.0
      %635 = vmatmul.mubr.f32.gmra.mxu0 %v503
      %v636 = vpop.f32.mrf.mxu0
      %v637 = vadd.f32 %v487, %v636
      %v638 = vpop.f32.mrf.mxu0
      %639 = vmatprep.mubr.f32.mxu0 0.0
      %640 = vmatmul.mubr.f32.gmra.mxu0 %v506
      %v641 = vpop.f32.mrf.mxu0
      %v642 = vadd.f32 %v487, %v641
      %v643 = vpop.f32.mrf.mxu0
      %644 = vmatprep.mubr.f32.mxu0 0.0
      %645 = vmatmul.mubr.f32.gmra.mxu0 %v509
      %v646 = vpop.f32.mrf.mxu0
      %v647 = vadd.f32 %v487, %v646
      %v648 = vpop.f32.mrf.mxu0
      %649 = vmatprep.mubr.f32.mxu0 0.0
      %650 = vmatmul.mubr.f32.gmra.mxu0 %v512
      %v651 = vpop.f32.mrf.mxu0
      %v652 = vadd.f32 %v487, %v651
      %v653 = vpop.f32.mrf.mxu0
      %654 = vmatprep.mubr.f32.mxu0 0.0
      %655 = vmatmul.mubr.f32.gmra.mxu0 %v515
      %v656 = vpop.f32.mrf.mxu0
      %v657 = vadd.f32 %v487, %v656
      %v658 = vpop.f32.mrf.mxu0
      %659 = vmatprep.mubr.f32.mxu0 0.0
      %660 = vmatmul.mubr.f32.gmra.mxu0 %v518
      %v661 = vpop.f32.mrf.mxu0
      %v662 = vadd.f32 %v487, %v661
      %v663 = vpop.f32.mrf.mxu0
      %664 = vmatprep.mubr.f32.mxu0 0.0
      %665 = vmatmul.mubr.f32.gmra.mxu0 %v521
      %v666 = vpop.f32.mrf.mxu0
      %v667 = vadd.f32 %v487, %v666
      %v668 = vpop.f32.mrf.mxu0
      %669 = vmatprep.mubr.f32.mxu0 0.0
      %670 = vmatmul.mubr.f32.gmra.mxu0 %v524
      %v671 = vpop.f32.mrf.mxu0
      %v672 = vadd.f32 %v487, %v671
      %v673 = vpop.f32.mrf.mxu0
      %674 = vmatprep.mubr.f32.mxu0 0.0
      %675 = vmatmul.mubr.f32.gmra.mxu0 %v527
      %v676 = vpop.f32.mrf.mxu0
      %v677 = vadd.f32 %v487, %v676
      %v678 = vpop.f32.mrf.mxu0
      %679 = vmatprep.mubr.f32.mxu0 0.0
      %680 = vmatmul.mubr.f32.gmra.mxu0 %v530
      %v681 = vpop.f32.mrf.mxu0
      %v682 = vadd.f32 %v487, %v681
      %v683 = vpop.f32.mrf.mxu0
      %684 = vmatprep.mubr.f32.mxu0 0.0
      %685 = vmatmul.mubr.f32.gmra.mxu0 %v533
      %v686 = vpop.f32.mrf.mxu0
      %v687 = vadd.f32 %v487, %v686
      %v688 = vpop.f32.mrf.mxu0
      %689 = vmatprep.mubr.f32.mxu0 0.0
      %690 = vmatmul.mubr.f32.gmra.mxu0 %v536
      %v691 = vpop.f32.mrf.mxu0
      %v692 = vadd.f32 %v487, %v691
      %v693 = vpop.f32.mrf.mxu0
      %694 = vmatprep.mubr.f32.mxu0 0.0
      %695 = vmatmul.mubr.f32.gmra.mxu0 %v539
      %v696 = vpop.f32.mrf.mxu0
      %v697 = vadd.f32 %v487, %v696
      %v698 = vpop.f32.mrf.mxu0
      %699 = vmatprep.mubr.f32.mxu0 0.0
      %700 = vmatmul.mubr.f32.gmra.mxu0 %v542
      %v701 = vpop.f32.mrf.mxu0
      %v702 = vadd.f32 %v487, %v701
      %v703 = vpop.f32.mrf.mxu0
      %704 = vmatprep.mubr.f32.mxu0 0.0
      %705 = vmatmul.mubr.f32.gmra.mxu0 %v545
      %v706 = vpop.f32.mrf.mxu0
      %v707 = vadd.f32 %v487, %v706
      %v708 = vpop.f32.mrf.mxu0
      %709 = vmatprep.mubr.f32.mxu0 0.0
      %710 = vmatmul.mubr.f32.gmra.mxu0 %v548
      %v711 = vpop.f32.mrf.mxu0
      %v712 = vadd.f32 %v487, %v711
      %v713 = vpop.f32.mrf.mxu0
      %714 = vdwg.mxu0
      %v715 = vxor.u32 %v617, 2147483648
      %v716 = vxor.u32 %v622, 2147483648
      %v717 = vxor.u32 %v627, 2147483648
      %v718 = vxor.u32 %v632, 2147483648
      %v719 = vxor.u32 %v637, 2147483648
      %v720 = vxor.u32 %v642, 2147483648
      %v721 = vxor.u32 %v647, 2147483648
      %v722 = vxor.u32 %v652, 2147483648
      %v723 = vxor.u32 %v657, 2147483648
      %v724 = vxor.u32 %v662, 2147483648
      %v725 = vxor.u32 %v667, 2147483648
      %v726 = vxor.u32 %v672, 2147483648
      %v727 = vxor.u32 %v677, 2147483648
      %v728 = vxor.u32 %v682, 2147483648
      %v729 = vxor.u32 %v687, 2147483648
      %v730 = vxor.u32 %v692, 2147483648
      %v731 = vxor.u32 %v697, 2147483648
      %v732 = vxor.u32 %v702, 2147483648
      %v733 = vxor.u32 %v707, 2147483648
      %v734 = vxor.u32 %v712, 2147483648
      %v735 = vmul.f32 %v715, 1.442695
      %v736 = vpow.pop %v735
      %v737 = vmul.f32 %v716, 1.442695
      %v738 = vpow.pop %v737
      %v739 = vmul.f32 %v717, 1.442695
      %v740 = vpow.pop %v739
      %v741 = vmul.f32 %v718, 1.442695
      %v742 = vpow.pop %v741
      %v743 = vmul.f32 %v719, 1.442695
      %v744 = vpow.pop %v743
      %v745 = vmul.f32 %v720, 1.442695
      %v746 = vpow.pop %v745
      %v747 = vmul.f32 %v721, 1.442695
      %v748 = vpow.pop %v747
      %v749 = vmul.f32 %v722, 1.442695
      %v750 = vpow.pop %v749
      %v751 = vmul.f32 %v723, 1.442695
      %v752 = vpow.pop %v751
      %v753 = vmul.f32 %v724, 1.442695
      %v754 = vpow.pop %v753
      %v755 = vmul.f32 %v725, 1.442695
      %v756 = vpow.pop %v755
      %v757 = vmul.f32 %v726, 1.442695
      %v758 = vpow.pop %v757
      %v759 = vmul.f32 %v727, 1.442695
      %v760 = vpow.pop %v759
      %v761 = vmul.f32 %v728, 1.442695
      %v762 = vpow.pop %v761
      %v763 = vmul.f32 %v729, 1.442695
      %v764 = vpow.pop %v763
      %v765 = vmul.f32 %v730, 1.442695
      %v766 = vpow.pop %v765
      %v767 = vmul.f32 %v731, 1.442695
      %v768 = vpow.pop %v767
      %v769 = vmul.f32 %v732, 1.442695
      %v770 = vpow.pop %v769
      %v771 = vmul.f32 %v733, 1.442695
      %v772 = vpow.pop %v771
      %v773 = vmul.f32 %v734, 1.442695
      %v774 = vpow.pop %v773
      %v775 = vadd.f32 %v736, 1.0
      %v776 = vadd.f32 %v738, 1.0
      %v777 = vadd.f32 %v740, 1.0
      %v778 = vadd.f32 %v742, 1.0
      %v779 = vadd.f32 %v744, 1.0
      %v780 = vadd.f32 %v746, 1.0
      %v781 = vadd.f32 %v748, 1.0
      %v782 = vadd.f32 %v750, 1.0
      %v783 = vadd.f32 %v752, 1.0
      %v784 = vadd.f32 %v754, 1.0
      %v785 = vadd.f32 %v756, 1.0
      %v786 = vadd.f32 %v758, 1.0
      %v787 = vadd.f32 %v760, 1.0
      %v788 = vadd.f32 %v762, 1.0
      %v789 = vadd.f32 %v764, 1.0
      %v790 = vadd.f32 %v766, 1.0
      %v791 = vadd.f32 %v768, 1.0
      %v792 = vadd.f32 %v770, 1.0
      %v793 = vadd.f32 %v772, 1.0
      %v794 = vadd.f32 %v774, 1.0
      %v795 = vrcp.pop %v775
      %v796 = vmul.f32 1.0, %v795
      %v797 = vrcp.pop %v776
      %v798 = vmul.f32 1.0, %v797
      %v799 = vrcp.pop %v777
      %v800 = vmul.f32 1.0, %v799
      %v801 = vrcp.pop %v778
      %v802 = vmul.f32 1.0, %v801
      %v803 = vrcp.pop %v779
      %v804 = vmul.f32 1.0, %v803
      %v805 = vrcp.pop %v780
      %v806 = vmul.f32 1.0, %v805
      %v807 = vrcp.pop %v781
      %v808 = vmul.f32 1.0, %v807
      %v809 = vrcp.pop %v782
      %v810 = vmul.f32 1.0, %v809
      %v811 = vrcp.pop %v783
      %v812 = vmul.f32 1.0, %v811
      %v813 = vrcp.pop %v784
      %v814 = vmul.f32 1.0, %v813
      %v815 = vrcp.pop %v785
      %v816 = vmul.f32 1.0, %v815
      %v817 = vrcp.pop %v786
      %v818 = vmul.f32 1.0, %v817
      %v819 = vrcp.pop %v787
      %v820 = vmul.f32 1.0, %v819
      %v821 = vrcp.pop %v788
      %v822 = vmul.f32 1.0, %v821
      %v823 = vrcp.pop %v789
      %v824 = vmul.f32 1.0, %v823
      %v825 = vrcp.pop %v790
      %v826 = vmul.f32 1.0, %v825
      %v827 = vrcp.pop %v791
      %v828 = vmul.f32 1.0, %v827
      %v829 = vrcp.pop %v792
      %v830 = vmul.f32 1.0, %v829
      %v831 = vrcp.pop %v793
      %v832 = vmul.f32 1.0, %v831
      %v833 = vrcp.pop %v794
      %v834 = vmul.f32 1.0, %v833
      %v835 = vmul.f32 %v617, %v796
      %v836 = vmul.f32 %v622, %v798
      %v837 = vmul.f32 %v627, %v800
      %v838 = vmul.f32 %v632, %v802
      %v839 = vmul.f32 %v637, %v804
      %v840 = vmul.f32 %v642, %v806
      %v841 = vmul.f32 %v647, %v808
      %v842 = vmul.f32 %v652, %v810
      %v843 = vmul.f32 %v657, %v812
      %v844 = vmul.f32 %v662, %v814
      %v845 = vmul.f32 %v667, %v816
      %v846 = vmul.f32 %v672, %v818
      %v847 = vmul.f32 %v677, %v820
      %v848 = vmul.f32 %v682, %v822
      %v849 = vmul.f32 %v687, %v824
      %v850 = vmul.f32 %v692, %v826
      %v851 = vmul.f32 %v697, %v828
      %v852 = vmul.f32 %v702, %v830
      %v853 = vmul.f32 %v707, %v832
      %v854 = vmul.f32 %v712, %v834
      %v855 = vld [vmem:[%s1] sm:$0xff]
      %v856 = vld [vmem:[%s1 + $0x8] sm:$0xff]
      %v857 = vld [vmem:[%s1 + $0x10] sm:$0xff]
      %v858 = vld [vmem:[%s1 + $0x18] sm:$0xff]
      %v859 = vld [vmem:[%s1 + $0x20] sm:$0xff]
      %v860 = vld [vmem:[%s1 + $0x28] sm:$0xff]
      %v861 = vld [vmem:[%s1 + $0x30] sm:$0xff]
      %v862 = vld [vmem:[%s1 + $0x38] sm:$0xff]
      %v863 = vld [vmem:[%s1 + $0x40] sm:$0xff]
      %v864 = vld [vmem:[%s1 + $0x48] sm:$0xff]
      %v865 = vld [vmem:[%s1 + $0x50] sm:$0xff]
      %v866 = vld [vmem:[%s1 + $0x58] sm:$0xff]
      %v867 = vld [vmem:[%s1 + $0x60] sm:$0xff]
      %v868 = vld [vmem:[%s1 + $0x68] sm:$0xff]
      %v869 = vld [vmem:[%s1 + $0x70] sm:$0xff]
      %v870 = vld [vmem:[%s1 + $0x78] sm:$0xff]
      %v871 = vld [vmem:[%s1 + $0x80] sm:$0xff]
      %v872 = vld [vmem:[%s1 + $0x88] sm:$0xff]
      %v873 = vld [vmem:[%s1 + $0x90] sm:$0xff]
      %v874 = vld [vmem:[%s1 + $0x98] sm:$0xff]
      %876 = vset.pattern.permute.xlu0 0
      %877 = vperm.xlu0 %876, %v855
      %v878 = vpop.permute.xlu0 %877
      %881 = vset.pattern.permute.xlu0 0
      %882 = vperm.xlu0 %881, %v856
      %v883 = vpop.permute.xlu0 %882
      %886 = vset.pattern.permute.xlu0 0
      %887 = vperm.xlu0 %886, %v857
      %v888 = vpop.permute.xlu0 %887
      %891 = vset.pattern.permute.xlu0 0
      %892 = vperm.xlu0 %891, %v858
      %v893 = vpop.permute.xlu0 %892
      %896 = vset.pattern.permute.xlu0 0
      %897 = vperm.xlu0 %896, %v859
      %v898 = vpop.permute.xlu0 %897
      %901 = vset.pattern.permute.xlu0 0
      %902 = vperm.xlu0 %901, %v860
      %v903 = vpop.permute.xlu0 %902
      %906 = vset.pattern.permute.xlu0 0
      %907 = vperm.xlu0 %906, %v861
      %v908 = vpop.permute.xlu0 %907
      %911 = vset.pattern.permute.xlu0 0
      %912 = vperm.xlu0 %911, %v862
      %v913 = vpop.permute.xlu0 %912
      %916 = vset.pattern.permute.xlu0 0
      %917 = vperm.xlu0 %916, %v863
      %v918 = vpop.permute.xlu0 %917
      %921 = vset.pattern.permute.xlu0 0
      %922 = vperm.xlu0 %921, %v864
      %v923 = vpop.permute.xlu0 %922
      %926 = vset.pattern.permute.xlu0 0
      %927 = vperm.xlu0 %926, %v865
      %v928 = vpop.permute.xlu0 %927
      %931 = vset.pattern.permute.xlu0 0
      %932 = vperm.xlu0 %931, %v866
      %v933 = vpop.permute.xlu0 %932
      %936 = vset.pattern.permute.xlu0 0
      %937 = vperm.xlu0 %936, %v867
      %v938 = vpop.permute.xlu0 %937
      %941 = vset.pattern.permute.xlu0 0
      %942 = vperm.xlu0 %941, %v868
      %v943 = vpop.permute.xlu0 %942
      %946 = vset.pattern.permute.xlu0 0
      %947 = vperm.xlu0 %946, %v869
      %v948 = vpop.permute.xlu0 %947
      %951 = vset.pattern.permute.xlu0 0
      %952 = vperm.xlu0 %951, %v870
      %v953 = vpop.permute.xlu0 %952
      %956 = vset.pattern.permute.xlu0 0
      %957 = vperm.xlu0 %956, %v871
      %v958 = vpop.permute.xlu0 %957
      %961 = vset.pattern.permute.xlu0 0
      %962 = vperm.xlu0 %961, %v872
      %v963 = vpop.permute.xlu0 %962
      %966 = vset.pattern.permute.xlu0 0
      %967 = vperm.xlu0 %966, %v873
      %v968 = vpop.permute.xlu0 %967
      %971 = vset.pattern.permute.xlu0 0
      %972 = vperm.xlu0 %971, %v874
      %v973 = vpop.permute.xlu0 %972
      %v975 = vmul.f32 %v835, %v878
      %v976 = vmul.f32 %v836, %v883
      %v977 = vmul.f32 %v837, %v888
      %v978 = vmul.f32 %v838, %v893
      %v979 = vmul.f32 %v839, %v898
      %v980 = vmul.f32 %v840, %v903
      %v981 = vmul.f32 %v841, %v908
      %v982 = vmul.f32 %v842, %v913
      %v983 = vmul.f32 %v843, %v918
      %v984 = vmul.f32 %v844, %v923
      %v985 = vmul.f32 %v845, %v928
      %v986 = vmul.f32 %v846, %v933
      %v987 = vmul.f32 %v847, %v938
      %v988 = vmul.f32 %v848, %v943
      %v989 = vmul.f32 %v849, %v948
      %v990 = vmul.f32 %v850, %v953
      %v991 = vmul.f32 %v851, %v958
      %v992 = vmul.f32 %v852, %v963
      %v993 = vmul.f32 %v853, %v968
      %v994 = vmul.f32 %v854, %v973
      %v995 = vld [vmem:[%s4] sm:$0x1]
      %v996 = vlaneseq
      %v997 = vshrl.u32 %v996, 7
      %v998 = vsub.s32 0, %v997
      %v999 = vrot.slane %v995, %v998
      %v1000 = vmul.f32 %v975, %v999
      %v1001 = vmul.f32 %v977, %v999
      %v1002 = vmul.f32 %v979, %v999
      %v1003 = vmul.f32 %v981, %v999
      %v1004 = vmul.f32 %v983, %v999
      %v1005 = vmul.f32 %v985, %v999
      %v1006 = vmul.f32 %v987, %v999
      %v1007 = vmul.f32 %v989, %v999
      %v1008 = vadd.f32 %v1000, 0.0
      %v1009 = vadd.f32 %v1001, 0.0
      %v1010 = vadd.f32 %v1002, 0.0
      %v1011 = vadd.f32 %v1003, 0.0
      %v1012 = vadd.f32 %v1004, 0.0
      %v1013 = vadd.f32 %v1005, 0.0
      %v1014 = vadd.f32 %v1006, 0.0
      %v1015 = vadd.f32 %v1007, 0.0
      %v1016 = vld [vmem:[%s4 + $0x1] sm:$0x1]
      %v1017 = vlaneseq
      %v1018 = vshrl.u32 %v1017, 7
      %v1019 = vsub.s32 0, %v1018
      %v1020 = vrot.slane %v1016, %v1019
      %v1021 = vmul.f32 %v975, %v1020
      %v1022 = vmul.f32 %v976, %v1020
      %v1023 = vmul.f32 %v977, %v1020
      %v1024 = vmul.f32 %v978, %v1020
      %v1025 = vmul.f32 %v979, %v1020
      %v1026 = vmul.f32 %v980, %v1020
      %v1027 = vmul.f32 %v981, %v1020
      %v1028 = vmul.f32 %v982, %v1020
      %v1029 = vmul.f32 %v983, %v1020
      %v1030 = vmul.f32 %v984, %v1020
      %v1031 = vmul.f32 %v985, %v1020
      %v1032 = vmul.f32 %v986, %v1020
      %v1033 = vmul.f32 %v987, %v1020
      %v1034 = vmul.f32 %v988, %v1020
      %v1035 = vmul.f32 %v989, %v1020
      %v1036 = vmul.f32 %v990, %v1020
      %vm1053 = vcmask 1046528
      %v1054 = vrot.slane %v1021, 1
      %v1055 = vrot.slane %v1022, 1
      %v1056 = vsel %vm1053, %v1054, %v1055
      %v1057 = vrot.slane %v1023, 1
      %v1058 = vrot.slane %v1024, 1
      %v1059 = vsel %vm1053, %v1057, %v1058
      %v1060 = vrot.slane %v1025, 1
      %v1061 = vrot.slane %v1026, 1
      %v1062 = vsel %vm1053, %v1060, %v1061
      %v1063 = vrot.slane %v1027, 1
      %v1064 = vrot.slane %v1028, 1
      %v1065 = vsel %vm1053, %v1063, %v1064
      %v1066 = vrot.slane %v1029, 1
      %v1067 = vrot.slane %v1030, 1
      %v1068 = vsel %vm1053, %v1066, %v1067
      %v1069 = vrot.slane %v1031, 1
      %v1070 = vrot.slane %v1032, 1
      %v1071 = vsel %vm1053, %v1069, %v1070
      %v1072 = vrot.slane %v1033, 1
      %v1073 = vrot.slane %v1034, 1
      %v1074 = vsel %vm1053, %v1072, %v1073
      %v1075 = vrot.slane %v1035, 1
      %v1076 = vrot.slane %v1036, 1
      %v1077 = vsel %vm1053, %v1075, %v1076
      %v1086 = vadd.f32 %v1008, %v1056
      %v1087 = vadd.f32 %v1009, %v1059
      %v1088 = vadd.f32 %v1010, %v1062
      %v1089 = vadd.f32 %v1011, %v1065
      %v1090 = vadd.f32 %v1012, %v1068
      %v1091 = vadd.f32 %v1013, %v1071
      %v1092 = vadd.f32 %v1014, %v1074
      %v1093 = vadd.f32 %v1015, %v1077
      %v1094 = vld [vmem:[%s4 + $0x2] sm:$0x1]
      %v1095 = vlaneseq
      %v1096 = vshrl.u32 %v1095, 7
      %v1097 = vsub.s32 0, %v1096
      %v1098 = vrot.slane %v1094, %v1097
      %v1099 = vmul.f32 %v975, %v1098
      %v1100 = vmul.f32 %v976, %v1098
      %v1101 = vmul.f32 %v977, %v1098
      %v1102 = vmul.f32 %v978, %v1098
      %v1103 = vmul.f32 %v979, %v1098
      %v1104 = vmul.f32 %v980, %v1098
      %v1105 = vmul.f32 %v981, %v1098
      %v1106 = vmul.f32 %v982, %v1098
      %v1107 = vmul.f32 %v983, %v1098
      %v1108 = vmul.f32 %v984, %v1098
      %v1109 = vmul.f32 %v985, %v1098
      %v1110 = vmul.f32 %v986, %v1098
      %v1111 = vmul.f32 %v987, %v1098
      %v1112 = vmul.f32 %v988, %v1098
      %v1113 = vmul.f32 %v989, %v1098
      %v1114 = vmul.f32 %v990, %v1098
      %vm1131 = vcmask 1045504
      %v1132 = vrot.slane %v1099, 2
      %v1133 = vrot.slane %v1100, 2
      %v1134 = vsel %vm1131, %v1132, %v1133
      %v1135 = vrot.slane %v1101, 2
      %v1136 = vrot.slane %v1102, 2
      %v1137 = vsel %vm1131, %v1135, %v1136
      %v1138 = vrot.slane %v1103, 2
      %v1139 = vrot.slane %v1104, 2
      %v1140 = vsel %vm1131, %v1138, %v1139
      %v1141 = vrot.slane %v1105, 2
      %v1142 = vrot.slane %v1106, 2
      %v1143 = vsel %vm1131, %v1141, %v1142
      %v1144 = vrot.slane %v1107, 2
      %v1145 = vrot.slane %v1108, 2
      %v1146 = vsel %vm1131, %v1144, %v1145
      %v1147 = vrot.slane %v1109, 2
      %v1148 = vrot.slane %v1110, 2
      %v1149 = vsel %vm1131, %v1147, %v1148
      %v1150 = vrot.slane %v1111, 2
      %v1151 = vrot.slane %v1112, 2
      %v1152 = vsel %vm1131, %v1150, %v1151
      %v1153 = vrot.slane %v1113, 2
      %v1154 = vrot.slane %v1114, 2
      %v1155 = vsel %vm1131, %v1153, %v1154
      %v1164 = vadd.f32 %v1086, %v1134
      %v1165 = vadd.f32 %v1087, %v1137
      %v1166 = vadd.f32 %v1088, %v1140
      %v1167 = vadd.f32 %v1089, %v1143
      %v1168 = vadd.f32 %v1090, %v1146
      %v1169 = vadd.f32 %v1091, %v1149
      %v1170 = vadd.f32 %v1092, %v1152
      %v1171 = vadd.f32 %v1093, %v1155
      %v1172 = vld [vmem:[%s4 + $0x3] sm:$0x1]
      %v1173 = vlaneseq
      %v1174 = vshrl.u32 %v1173, 7
      %v1175 = vsub.s32 0, %v1174
      %v1176 = vrot.slane %v1172, %v1175
      %v1177 = vmul.f32 %v977, %v1176
      %v1178 = vmul.f32 %v979, %v1176
      %v1179 = vmul.f32 %v981, %v1176
      %v1180 = vmul.f32 %v983, %v1176
      %v1181 = vmul.f32 %v985, %v1176
      %v1182 = vmul.f32 %v987, %v1176
      %v1183 = vmul.f32 %v989, %v1176
      %v1184 = vmul.f32 %v991, %v1176
      %v1185 = vadd.f32 %v1164, %v1177
      %v1186 = vadd.f32 %v1165, %v1178
      %v1187 = vadd.f32 %v1166, %v1179
      %v1188 = vadd.f32 %v1167, %v1180
      %v1189 = vadd.f32 %v1168, %v1181
      %v1190 = vadd.f32 %v1169, %v1182
      %v1191 = vadd.f32 %v1170, %v1183
      %v1192 = vadd.f32 %v1171, %v1184
      %v1193 = vld [vmem:[%s4 + $0x4] sm:$0x1]
      %v1194 = vlaneseq
      %v1195 = vshrl.u32 %v1194, 7
      %v1196 = vsub.s32 0, %v1195
      %v1197 = vrot.slane %v1193, %v1196
      %v1198 = vmul.f32 %v977, %v1197
      %v1199 = vmul.f32 %v978, %v1197
      %v1200 = vmul.f32 %v979, %v1197
      %v1201 = vmul.f32 %v980, %v1197
      %v1202 = vmul.f32 %v981, %v1197
      %v1203 = vmul.f32 %v982, %v1197
      %v1204 = vmul.f32 %v983, %v1197
      %v1205 = vmul.f32 %v984, %v1197
      %v1206 = vmul.f32 %v985, %v1197
      %v1207 = vmul.f32 %v986, %v1197
      %v1208 = vmul.f32 %v987, %v1197
      %v1209 = vmul.f32 %v988, %v1197
      %v1210 = vmul.f32 %v989, %v1197
      %v1211 = vmul.f32 %v990, %v1197
      %v1212 = vmul.f32 %v991, %v1197
      %v1213 = vmul.f32 %v992, %v1197
      %v1230 = vrot.slane %v1198, 1
      %v1231 = vrot.slane %v1199, 1
      %v1232 = vsel %vm1053, %v1230, %v1231
      %v1233 = vrot.slane %v1200, 1
      %v1234 = vrot.slane %v1201, 1
      %v1235 = vsel %vm1053, %v1233, %v1234
      %v1236 = vrot.slane %v1202, 1
      %v1237 = vrot.slane %v1203, 1
      %v1238 = vsel %vm1053, %v1236, %v1237
      %v1239 = vrot.slane %v1204, 1
      %v1240 = vrot.slane %v1205, 1
      %v1241 = vsel %vm1053, %v1239, %v1240
      %v1242 = vrot.slane %v1206, 1
      %v1243 = vrot.slane %v1207, 1
      %v1244 = vsel %vm1053, %v1242, %v1243
      %v1245 = vrot.slane %v1208, 1
      %v1246 = vrot.slane %v1209, 1
      %v1247 = vsel %vm1053, %v1245, %v1246
      %v1248 = vrot.slane %v1210, 1
      %v1249 = vrot.slane %v1211, 1
      %v1250 = vsel %vm1053, %v1248, %v1249
      %v1251 = vrot.slane %v1212, 1
      %v1252 = vrot.slane %v1213, 1
      %v1253 = vsel %vm1053, %v1251, %v1252
      %v1262 = vadd.f32 %v1185, %v1232
      %v1263 = vadd.f32 %v1186, %v1235
      %v1264 = vadd.f32 %v1187, %v1238
      %v1265 = vadd.f32 %v1188, %v1241
      %v1266 = vadd.f32 %v1189, %v1244
      %v1267 = vadd.f32 %v1190, %v1247
      %v1268 = vadd.f32 %v1191, %v1250
      %v1269 = vadd.f32 %v1192, %v1253
      %v1270 = vld [vmem:[%s4 + $0x5] sm:$0x1]
      %v1271 = vlaneseq
      %v1272 = vshrl.u32 %v1271, 7
      %v1273 = vsub.s32 0, %v1272
      %v1274 = vrot.slane %v1270, %v1273
      %v1275 = vmul.f32 %v977, %v1274
      %v1276 = vmul.f32 %v978, %v1274
      %v1277 = vmul.f32 %v979, %v1274
      %v1278 = vmul.f32 %v980, %v1274
      %v1279 = vmul.f32 %v981, %v1274
      %v1280 = vmul.f32 %v982, %v1274
      %v1281 = vmul.f32 %v983, %v1274
      %v1282 = vmul.f32 %v984, %v1274
      %v1283 = vmul.f32 %v985, %v1274
      %v1284 = vmul.f32 %v986, %v1274
      %v1285 = vmul.f32 %v987, %v1274
      %v1286 = vmul.f32 %v988, %v1274
      %v1287 = vmul.f32 %v989, %v1274
      %v1288 = vmul.f32 %v990, %v1274
      %v1289 = vmul.f32 %v991, %v1274
      %v1290 = vmul.f32 %v992, %v1274
      %v1307 = vrot.slane %v1275, 2
      %v1308 = vrot.slane %v1276, 2
      %v1309 = vsel %vm1131, %v1307, %v1308
      %v1310 = vrot.slane %v1277, 2
      %v1311 = vrot.slane %v1278, 2
      %v1312 = vsel %vm1131, %v1310, %v1311
      %v1313 = vrot.slane %v1279, 2
      %v1314 = vrot.slane %v1280, 2
      %v1315 = vsel %vm1131, %v1313, %v1314
      %v1316 = vrot.slane %v1281, 2
      %v1317 = vrot.slane %v1282, 2
      %v1318 = vsel %vm1131, %v1316, %v1317
      %v1319 = vrot.slane %v1283, 2
      %v1320 = vrot.slane %v1284, 2
      %v1321 = vsel %vm1131, %v1319, %v1320
      %v1322 = vrot.slane %v1285, 2
      %v1323 = vrot.slane %v1286, 2
      %v1324 = vsel %vm1131, %v1322, %v1323
      %v1325 = vrot.slane %v1287, 2
      %v1326 = vrot.slane %v1288, 2
      %v1327 = vsel %vm1131, %v1325, %v1326
      %v1328 = vrot.slane %v1289, 2
      %v1329 = vrot.slane %v1290, 2
      %v1330 = vsel %vm1131, %v1328, %v1329
      %v1339 = vadd.f32 %v1262, %v1309
      %v1340 = vadd.f32 %v1263, %v1312
      %v1341 = vadd.f32 %v1264, %v1315
      %v1342 = vadd.f32 %v1265, %v1318
      %v1343 = vadd.f32 %v1266, %v1321
      %v1344 = vadd.f32 %v1267, %v1324
      %v1345 = vadd.f32 %v1268, %v1327
      %v1346 = vadd.f32 %v1269, %v1330
      %v1347 = vld [vmem:[%s4 + $0x6] sm:$0x1]
      %v1348 = vlaneseq
      %v1349 = vshrl.u32 %v1348, 7
      %v1350 = vsub.s32 0, %v1349
      %v1351 = vrot.slane %v1347, %v1350
      %v1352 = vmul.f32 %v979, %v1351
      %v1353 = vmul.f32 %v981, %v1351
      %v1354 = vmul.f32 %v983, %v1351
      %v1355 = vmul.f32 %v985, %v1351
      %v1356 = vmul.f32 %v987, %v1351
      %v1357 = vmul.f32 %v989, %v1351
      %v1358 = vmul.f32 %v991, %v1351
      %v1359 = vmul.f32 %v993, %v1351
      %v1360 = vadd.f32 %v1339, %v1352
      %v1361 = vadd.f32 %v1340, %v1353
      %v1362 = vadd.f32 %v1341, %v1354
      %v1363 = vadd.f32 %v1342, %v1355
      %v1364 = vadd.f32 %v1343, %v1356
      %v1365 = vadd.f32 %v1344, %v1357
      %v1366 = vadd.f32 %v1345, %v1358
      %v1367 = vadd.f32 %v1346, %v1359
      %v1368 = vld [vmem:[%s4 + $0x7] sm:$0x1]
      %v1369 = vlaneseq
      %v1370 = vshrl.u32 %v1369, 7
      %v1371 = vsub.s32 0, %v1370
      %v1372 = vrot.slane %v1368, %v1371
      %v1373 = vmul.f32 %v979, %v1372
      %v1374 = vmul.f32 %v980, %v1372
      %v1375 = vmul.f32 %v981, %v1372
      %v1376 = vmul.f32 %v982, %v1372
      %v1377 = vmul.f32 %v983, %v1372
      %v1378 = vmul.f32 %v984, %v1372
      %v1379 = vmul.f32 %v985, %v1372
      %v1380 = vmul.f32 %v986, %v1372
      %v1381 = vmul.f32 %v987, %v1372
      %v1382 = vmul.f32 %v988, %v1372
      %v1383 = vmul.f32 %v989, %v1372
      %v1384 = vmul.f32 %v990, %v1372
      %v1385 = vmul.f32 %v991, %v1372
      %v1386 = vmul.f32 %v992, %v1372
      %v1387 = vmul.f32 %v993, %v1372
      %v1388 = vmul.f32 %v994, %v1372
      %v1405 = vrot.slane %v1373, 1
      %v1406 = vrot.slane %v1374, 1
      %v1407 = vsel %vm1053, %v1405, %v1406
      %v1408 = vrot.slane %v1375, 1
      %v1409 = vrot.slane %v1376, 1
      %v1410 = vsel %vm1053, %v1408, %v1409
      %v1411 = vrot.slane %v1377, 1
      %v1412 = vrot.slane %v1378, 1
      %v1413 = vsel %vm1053, %v1411, %v1412
      %v1414 = vrot.slane %v1379, 1
      %v1415 = vrot.slane %v1380, 1
      %v1416 = vsel %vm1053, %v1414, %v1415
      %v1417 = vrot.slane %v1381, 1
      %v1418 = vrot.slane %v1382, 1
      %v1419 = vsel %vm1053, %v1417, %v1418
      %v1420 = vrot.slane %v1383, 1
      %v1421 = vrot.slane %v1384, 1
      %v1422 = vsel %vm1053, %v1420, %v1421
      %v1423 = vrot.slane %v1385, 1
      %v1424 = vrot.slane %v1386, 1
      %v1425 = vsel %vm1053, %v1423, %v1424
      %v1426 = vrot.slane %v1387, 1
      %v1427 = vrot.slane %v1388, 1
      %v1428 = vsel %vm1053, %v1426, %v1427
      %v1437 = vadd.f32 %v1360, %v1407
      %v1438 = vadd.f32 %v1361, %v1410
      %v1439 = vadd.f32 %v1362, %v1413
      %v1440 = vadd.f32 %v1363, %v1416
      %v1441 = vadd.f32 %v1364, %v1419
      %v1442 = vadd.f32 %v1365, %v1422
      %v1443 = vadd.f32 %v1366, %v1425
      %v1444 = vadd.f32 %v1367, %v1428
      %v1445 = vld [vmem:[%s4 + $0x8] sm:$0x1]
      %v1446 = vlaneseq
      %v1447 = vshrl.u32 %v1446, 7
      %v1448 = vsub.s32 0, %v1447
      %v1449 = vrot.slane %v1445, %v1448
      %v1450 = vmul.f32 %v979, %v1449
      %v1451 = vmul.f32 %v980, %v1449
      %v1452 = vmul.f32 %v981, %v1449
      %v1453 = vmul.f32 %v982, %v1449
      %v1454 = vmul.f32 %v983, %v1449
      %v1455 = vmul.f32 %v984, %v1449
      %v1456 = vmul.f32 %v985, %v1449
      %v1457 = vmul.f32 %v986, %v1449
      %v1458 = vmul.f32 %v987, %v1449
      %v1459 = vmul.f32 %v988, %v1449
      %v1460 = vmul.f32 %v989, %v1449
      %v1461 = vmul.f32 %v990, %v1449
      %v1462 = vmul.f32 %v991, %v1449
      %v1463 = vmul.f32 %v992, %v1449
      %v1464 = vmul.f32 %v993, %v1449
      %v1465 = vmul.f32 %v994, %v1449
      %v1482 = vrot.slane %v1450, 2
      %v1483 = vrot.slane %v1451, 2
      %v1484 = vsel %vm1131, %v1482, %v1483
      %v1485 = vrot.slane %v1452, 2
      %v1486 = vrot.slane %v1453, 2
      %v1487 = vsel %vm1131, %v1485, %v1486
      %v1488 = vrot.slane %v1454, 2
      %v1489 = vrot.slane %v1455, 2
      %v1490 = vsel %vm1131, %v1488, %v1489
      %v1491 = vrot.slane %v1456, 2
      %v1492 = vrot.slane %v1457, 2
      %v1493 = vsel %vm1131, %v1491, %v1492
      %v1494 = vrot.slane %v1458, 2
      %v1495 = vrot.slane %v1459, 2
      %v1496 = vsel %vm1131, %v1494, %v1495
      %v1497 = vrot.slane %v1460, 2
      %v1498 = vrot.slane %v1461, 2
      %v1499 = vsel %vm1131, %v1497, %v1498
      %v1500 = vrot.slane %v1462, 2
      %v1501 = vrot.slane %v1463, 2
      %v1502 = vsel %vm1131, %v1500, %v1501
      %v1503 = vrot.slane %v1464, 2
      %v1504 = vrot.slane %v1465, 2
      %v1505 = vsel %vm1131, %v1503, %v1504
      %v1514 = vadd.f32 %v1437, %v1484
      %v1515 = vadd.f32 %v1438, %v1487
      %v1516 = vadd.f32 %v1439, %v1490
      %v1517 = vadd.f32 %v1440, %v1493
      %v1518 = vadd.f32 %v1441, %v1496
      %v1519 = vadd.f32 %v1442, %v1499
      %v1520 = vadd.f32 %v1443, %v1502
      %v1521 = vadd.f32 %v1444, %v1505
      %v1522 = vld [vmem:[%s5] sm:$0x1]
      %v1524 = vlaneseq
      %v1525 = vshrl.u32 %v1524, 7
      %v1526 = vsub.s32 0, %v1525
      %v1527 = vrot.slane %v1522, %v1526
      %v1529 = vadd.f32 %v1514, %v1527
      %v1530 = vadd.f32 %v1515, %v1527
      %v1531 = vadd.f32 %v1516, %v1527
      %v1532 = vadd.f32 %v1517, %v1527
      %v1533 = vadd.f32 %v1518, %v1527
      %v1534 = vadd.f32 %v1519, %v1527
      %v1535 = vadd.f32 %v1520, %v1527
      %v1536 = vadd.f32 %v1521, %v1527
      %v1537 = vxor.u32 %v1529, 2147483648
      %v1538 = vxor.u32 %v1530, 2147483648
      %v1539 = vxor.u32 %v1531, 2147483648
      %v1540 = vxor.u32 %v1532, 2147483648
      %v1541 = vxor.u32 %v1533, 2147483648
      %v1542 = vxor.u32 %v1534, 2147483648
      %v1543 = vxor.u32 %v1535, 2147483648
      %v1544 = vxor.u32 %v1536, 2147483648
      %v1545 = vmul.f32 %v1537, 1.442695
      %v1546 = vpow.pop %v1545
      %v1547 = vmul.f32 %v1538, 1.442695
      %v1548 = vpow.pop %v1547
      %v1549 = vmul.f32 %v1539, 1.442695
      %v1550 = vpow.pop %v1549
      %v1551 = vmul.f32 %v1540, 1.442695
      %v1552 = vpow.pop %v1551
      %v1553 = vmul.f32 %v1541, 1.442695
      %v1554 = vpow.pop %v1553
      %v1555 = vmul.f32 %v1542, 1.442695
      %v1556 = vpow.pop %v1555
      %v1557 = vmul.f32 %v1543, 1.442695
      %v1558 = vpow.pop %v1557
      %v1559 = vmul.f32 %v1544, 1.442695
      %v1560 = vpow.pop %v1559
      %v1561 = vadd.f32 %v1546, 1.0
      %v1562 = vadd.f32 %v1548, 1.0
      %v1563 = vadd.f32 %v1550, 1.0
      %v1564 = vadd.f32 %v1552, 1.0
      %v1565 = vadd.f32 %v1554, 1.0
      %v1566 = vadd.f32 %v1556, 1.0
      %v1567 = vadd.f32 %v1558, 1.0
      %v1568 = vadd.f32 %v1560, 1.0
      %v1569 = vrcp.pop %v1561
      %v1570 = vmul.f32 1.0, %v1569
      %v1571 = vrcp.pop %v1562
      %v1572 = vmul.f32 1.0, %v1571
      %v1573 = vrcp.pop %v1563
      %v1574 = vmul.f32 1.0, %v1573
      %v1575 = vrcp.pop %v1564
      %v1576 = vmul.f32 1.0, %v1575
      %v1577 = vrcp.pop %v1565
      %v1578 = vmul.f32 1.0, %v1577
      %v1579 = vrcp.pop %v1566
      %v1580 = vmul.f32 1.0, %v1579
      %v1581 = vrcp.pop %v1567
      %v1582 = vmul.f32 1.0, %v1581
      %v1583 = vrcp.pop %v1568
      %v1584 = vmul.f32 1.0, %v1583
      %v1585 = vmul.f32 %v1529, %v1570
      %v1586 = vmul.f32 %v1530, %v1572
      %v1587 = vmul.f32 %v1531, %v1574
      %v1588 = vmul.f32 %v1532, %v1576
      %v1589 = vmul.f32 %v1533, %v1578
      %v1590 = vmul.f32 %v1534, %v1580
      %v1591 = vmul.f32 %v1535, %v1582
      %v1592 = vmul.f32 %v1536, %v1584
      %vm1593 = vcmask 130048
      %v1594 = vsel %vm1593, %v1585, 0.0
      %v1595 = vsel %vm1593, %v1586, 0.0
      %v1596 = vadd.f32 %v1594, %v1595
      %v1597 = vsel %vm1593, %v1587, 0.0
      %v1598 = vadd.f32 %v1596, %v1597
      %v1599 = vsel %vm1593, %v1588, 0.0
      %v1600 = vadd.f32 %v1598, %v1599
      %v1601 = vsel %vm1593, %v1589, 0.0
      %v1602 = vadd.f32 %v1600, %v1601
      %v1603 = vsel %vm1593, %v1590, 0.0
      %v1604 = vadd.f32 %v1602, %v1603
      %v1605 = vsel %vm1593, %v1591, 0.0
      %v1606 = vadd.f32 %v1604, %v1605
      %v1607 = vsel %vm1593, %v1592, 0.0
      %v1608 = vadd.f32 %v1606, %v1607
      %v1609 = vrot.slane %v1608, 4
      %v1610 = vadd.f32 %v1608, %v1609
      %v1611 = vrot.slane %v1610, 2
      %v1612 = vadd.f32 %v1610, %v1611
      %v1613 = vrot.slane %v1612, 1
      %v1614 = vadd.f32 %v1612, %v1613
      %v1615 = vrcp.pop 64.0
      %v1616 = vmul.f32 %v1614, %v1615
      %v1617 = vld [vmem:[%s6] sm:$0xff]
      %v1618 = vld [vmem:[%s6 + $0x8] sm:$0xff]
      %v1619 = vld [vmem:[%s7] sm:$0x1]
      %v1621 = vsel %vm1593, %v1616, 0
      %1623 = vmatprep.subr.mxu0 0.0
      %1624 = vmatpush1.msra.mxu0 0.0
      %1625 = vmatprep.subr.mxu0 0.0
      %1626 = vmatpush1.msra.mxu0 0.0
      %1627 = vmatprep.subr.mxu0 0.0
      %1628 = vmatpush1.msra.mxu0 0.0
      %1629 = vmatprep.subr.mxu0 0.0
      %1630 = vmatpush1.msra.mxu0 0.0
      %1631 = vmatprep.subr.mxu0 0.0
      %1632 = vmatpush1.msra.mxu0 0.0
      %1633 = vmatprep.subr.mxu0 0.0
      %1634 = vmatpush1.msra.mxu0 0.0
      %1635 = vmatprep.subr.mxu0 0.0
      %1636 = vmatpush1.msra.mxu0 0.0
      %1637 = vmatprep.subr.mxu0 0.0
      %1638 = vmatpush1.msra.mxu0 0.0
      %1639 = vmatprep.subr.mxu0 0.0
      %1640 = vmatpush1.msra.mxu0 0.0
      %1641 = vmatprep.subr.mxu0 0.0
      %1642 = vmatpush1.msra.mxu0 0.0
      %1643 = vmatprep.subr.mxu0 0.0
      %1644 = vmatpush1.msra.mxu0 0.0
      %1645 = vmatprep.subr.mxu0 0.0
      %1646 = vmatpush1.msra.mxu0 0.0
      %1647 = vmatprep.subr.mxu0 0.0
      %1648 = vmatpush1.msra.mxu0 0.0
      %1649 = vmatprep.subr.mxu0 0.0
      %1650 = vmatpush1.msra.mxu0 0.0
      %1651 = vmatprep.subr.mxu0 0.0
      %1652 = vmatpush1.msra.mxu0 %v1618
      %1653 = vmatprep.subr.mxu0 0.0
      %1654 = vmatpush1.msra.mxu0 %v1617
      %1655 = vmatprep.subr.mxu0 0.0
      %1656 = vmatpush2.msra.mxu0 0.0
      %1657 = vmatprep.subr.mxu0 0.0
      %1658 = vmatpush2.msra.mxu0 0.0
      %1659 = vmatprep.subr.mxu0 0.0
      %1660 = vmatpush2.msra.mxu0 0.0
      %1661 = vmatprep.subr.mxu0 0.0
      %1662 = vmatpush2.msra.mxu0 0.0
      %1663 = vmatprep.subr.mxu0 0.0
      %1664 = vmatpush2.msra.mxu0 0.0
      %1665 = vmatprep.subr.mxu0 0.0
      %1666 = vmatpush2.msra.mxu0 0.0
      %1667 = vmatprep.subr.mxu0 0.0
      %1668 = vmatpush2.msra.mxu0 0.0
      %1669 = vmatprep.subr.mxu0 0.0
      %1670 = vmatpush2.msra.mxu0 0.0
      %1671 = vmatprep.subr.mxu0 0.0
      %1672 = vmatpush2.msra.mxu0 0.0
      %1673 = vmatprep.subr.mxu0 0.0
      %1674 = vmatpush2.msra.mxu0 0.0
      %1675 = vmatprep.subr.mxu0 0.0
      %1676 = vmatpush2.msra.mxu0 0.0
      %1677 = vmatprep.subr.mxu0 0.0
      %1678 = vmatpush2.msra.mxu0 0.0
      %1679 = vmatprep.subr.mxu0 0.0
      %1680 = vmatpush2.msra.mxu0 0.0
      %1681 = vmatprep.subr.mxu0 0.0
      %1682 = vmatpush2.msra.mxu0 0.0
      %1683 = vmatprep.subr.mxu0 0.0
      %1684 = vmatpush2.msra.mxu0 0.0
      %1685 = vmatprep.subr.mxu0 0.0
      %1686 = vmatpush2.msra.mxu0 0.0
      %1687 = vmatprep.mubr.f32.mxu0 0.0
      %1688 = vmatmul.mubr.f32.gmra.mxu0 %v1621
      %v1689 = vpop.f32.mrf.mxu0
      %v1690 = vadd.f32 %v1619, %v1689
      %v1691 = vpop.f32.mrf.mxu0
      %1692 = vdwg.mxu0
      %v1693 = vxor.u32 %v1690, 2147483648
      %v1694 = vmul.f32 %v1693, 1.442695
      %v1695 = vpow.pop %v1694
      %v1696 = vadd.f32 %v1695, 1.0
      %v1697 = vrcp.pop %v1696
      %v1698 = vmul.f32 1.0, %v1697
      %v1699 = vmul.f32 %v1690, %v1698
      %v1700 = vld [vmem:[%s8] sm:$0x3]
      %v1701 = vld [vmem:[%s9] sm:$0x1]
      %vm1702 = vcmask 15360
      %v1704 = vsel %vm1702, %v1699, 0
      %vm1706 = vcmask 1041408
      %v1708 = vsel %vm1706, %v1700, 0
      %1710 = vmatprep.subr.mxu0 0.0
      %1711 = vmatpush1.msra.mxu0 0.0
      %1712 = vmatprep.subr.mxu0 0.0
      %1713 = vmatpush1.msra.mxu0 0.0
      %1714 = vmatprep.subr.mxu0 0.0
      %1715 = vmatpush1.msra.mxu0 0.0
      %1716 = vmatprep.subr.mxu0 0.0
      %1717 = vmatpush1.msra.mxu0 0.0
      %1718 = vmatprep.subr.mxu0 0.0
      %1719 = vmatpush1.msra.mxu0 0.0
      %1720 = vmatprep.subr.mxu0 0.0
      %1721 = vmatpush1.msra.mxu0 0.0
      %1722 = vmatprep.subr.mxu0 0.0
      %1723 = vmatpush1.msra.mxu0 0.0
      %1724 = vmatprep.subr.mxu0 0.0
      %1725 = vmatpush1.msra.mxu0 0.0
      %1726 = vmatprep.subr.mxu0 0.0
      %1727 = vmatpush1.msra.mxu0 0.0
      %1728 = vmatprep.subr.mxu0 0.0
      %1729 = vmatpush1.msra.mxu0 0.0
      %1730 = vmatprep.subr.mxu0 0.0
      %1731 = vmatpush1.msra.mxu0 0.0
      %1732 = vmatprep.subr.mxu0 0.0
      %1733 = vmatpush1.msra.mxu0 0.0
      %1734 = vmatprep.subr.mxu0 0.0
      %1735 = vmatpush1.msra.mxu0 0.0
      %1736 = vmatprep.subr.mxu0 0.0
      %1737 = vmatpush1.msra.mxu0 0.0
      %1738 = vmatprep.subr.mxu0 0.0
      %1739 = vmatpush1.msra.mxu0 0.0
      %1740 = vmatprep.subr.mxu0 0.0
      %1741 = vmatpush1.msra.mxu0 %v1708
      %1742 = vmatprep.subr.mxu0 0.0
      %1743 = vmatpush2.msra.mxu0 0.0
      %1744 = vmatprep.subr.mxu0 0.0
      %1745 = vmatpush2.msra.mxu0 0.0
      %1746 = vmatprep.subr.mxu0 0.0
      %1747 = vmatpush2.msra.mxu0 0.0
      %1748 = vmatprep.subr.mxu0 0.0
      %1749 = vmatpush2.msra.mxu0 0.0
      %1750 = vmatprep.subr.mxu0 0.0
      %1751 = vmatpush2.msra.mxu0 0.0
      %1752 = vmatprep.subr.mxu0 0.0
      %1753 = vmatpush2.msra.mxu0 0.0
      %1754 = vmatprep.subr.mxu0 0.0
      %1755 = vmatpush2.msra.mxu0 0.0
      %1756 = vmatprep.subr.mxu0 0.0
      %1757 = vmatpush2.msra.mxu0 0.0
      %1758 = vmatprep.subr.mxu0 0.0
      %1759 = vmatpush2.msra.mxu0 0.0
      %1760 = vmatprep.subr.mxu0 0.0
      %1761 = vmatpush2.msra.mxu0 0.0
      %1762 = vmatprep.subr.mxu0 0.0
      %1763 = vmatpush2.msra.mxu0 0.0
      %1764 = vmatprep.subr.mxu0 0.0
      %1765 = vmatpush2.msra.mxu0 0.0
      %1766 = vmatprep.subr.mxu0 0.0
      %1767 = vmatpush2.msra.mxu0 0.0
      %1768 = vmatprep.subr.mxu0 0.0
      %1769 = vmatpush2.msra.mxu0 0.0
      %1770 = vmatprep.subr.mxu0 0.0
      %1771 = vmatpush2.msra.mxu0 0.0
      %1772 = vmatprep.subr.mxu0 0.0
      %1773 = vmatpush2.msra.mxu0 0.0
      %1774 = vmatprep.mubr.f32.mxu0 0.0
      %1775 = vmatmul.mubr.f32.gmra.mxu0 %v1704
      %v1776 = vpop.f32.mrf.mxu0
      %v1777 = vadd.f32 %v1701, %v1776
      %v1778 = vpop.f32.mrf.mxu0
      %1779 = vdwg.mxu0
      %v1780 = vxor.u32 %v1777, 2147483648
      %v1781 = vmul.f32 %v1780, 1.442695
      %v1782 = vpow.pop %v1781
      %v1783 = vadd.f32 %v1782, 1.0
      %v1784 = vrcp.pop %v1783
      %v1785 = vmul.f32 1.0, %v1784
      %v1786 = vlaneseq
      %v1787 = vshrl.u32 %v1786, 7
      %v1788 = vsub.s32 0, %v1787
      %v1789 = vrot.slane %v1785, %v1788
      %v1790 = vmul.f32 %v1585, %v1789
      %v1791 = vmul.f32 %v1586, %v1789
      %v1792 = vmul.f32 %v1587, %v1789
      %v1793 = vmul.f32 %v1588, %v1789
      %v1794 = vmul.f32 %v1589, %v1789
      %v1795 = vmul.f32 %v1590, %v1789
      %v1796 = vmul.f32 %v1591, %v1789
      %v1797 = vmul.f32 %v1592, %v1789
      %v1798 = vld [vmem:[%s10] sm:$0xff]
      %v1799 = vld [vmem:[%s10 + $0x8] sm:$0xff]
      %v1800 = vld [vmem:[%s11] sm:$0x1]
      %v1802 = vlaneseq
      %v1803 = vshrl.u32 %v1802, 7
      %v1804 = vsub.s32 0, %v1803
      %v1805 = vrot.slane %v1800, %v1804
      %v1808 = vsel %vm1593, %v1790, 0
      %v1811 = vsel %vm1593, %v1791, 0
      %v1814 = vsel %vm1593, %v1792, 0
      %v1817 = vsel %vm1593, %v1793, 0
      %v1820 = vsel %vm1593, %v1794, 0
      %v1823 = vsel %vm1593, %v1795, 0
      %v1826 = vsel %vm1593, %v1796, 0
      %v1829 = vsel %vm1593, %v1797, 0
      %1831 = vmatprep.subr.mxu0 0.0
      %1832 = vmatpush1.msra.mxu0 0.0
      %1833 = vmatprep.subr.mxu0 0.0
      %1834 = vmatpush1.msra.mxu0 0.0
      %1835 = vmatprep.subr.mxu0 0.0
      %1836 = vmatpush1.msra.mxu0 0.0
      %1837 = vmatprep.subr.mxu0 0.0
      %1838 = vmatpush1.msra.mxu0 0.0
      %1839 = vmatprep.subr.mxu0 0.0
      %1840 = vmatpush1.msra.mxu0 0.0
      %1841 = vmatprep.subr.mxu0 0.0
      %1842 = vmatpush1.msra.mxu0 0.0
      %1843 = vmatprep.subr.mxu0 0.0
      %1844 = vmatpush1.msra.mxu0 0.0
      %1845 = vmatprep.subr.mxu0 0.0
      %1846 = vmatpush1.msra.mxu0 0.0
      %1847 = vmatprep.subr.mxu0 0.0
      %1848 = vmatpush1.msra.mxu0 0.0
      %1849 = vmatprep.subr.mxu0 0.0
      %1850 = vmatpush1.msra.mxu0 0.0
      %1851 = vmatprep.subr.mxu0 0.0
      %1852 = vmatpush1.msra.mxu0 0.0
      %1853 = vmatprep.subr.mxu0 0.0
      %1854 = vmatpush1.msra.mxu0 0.0
      %1855 = vmatprep.subr.mxu0 0.0
      %1856 = vmatpush1.msra.mxu0 0.0
      %1857 = vmatprep.subr.mxu0 0.0
      %1858 = vmatpush1.msra.mxu0 0.0
      %1859 = vmatprep.subr.mxu0 0.0
      %1860 = vmatpush1.msra.mxu0 %v1799
      %1861 = vmatprep.subr.mxu0 0.0
      %1862 = vmatpush1.msra.mxu0 %v1798
      %1863 = vmatprep.subr.mxu0 0.0
      %1864 = vmatpush2.msra.mxu0 0.0
      %1865 = vmatprep.subr.mxu0 0.0
      %1866 = vmatpush2.msra.mxu0 0.0
      %1867 = vmatprep.subr.mxu0 0.0
      %1868 = vmatpush2.msra.mxu0 0.0
      %1869 = vmatprep.subr.mxu0 0.0
      %1870 = vmatpush2.msra.mxu0 0.0
      %1871 = vmatprep.subr.mxu0 0.0
      %1872 = vmatpush2.msra.mxu0 0.0
      %1873 = vmatprep.subr.mxu0 0.0
      %1874 = vmatpush2.msra.mxu0 0.0
      %1875 = vmatprep.subr.mxu0 0.0
      %1876 = vmatpush2.msra.mxu0 0.0
      %1877 = vmatprep.subr.mxu0 0.0
      %1878 = vmatpush2.msra.mxu0 0.0
      %1879 = vmatprep.subr.mxu0 0.0
      %1880 = vmatpush2.msra.mxu0 0.0
      %1881 = vmatprep.subr.mxu0 0.0
      %1882 = vmatpush2.msra.mxu0 0.0
      %1883 = vmatprep.subr.mxu0 0.0
      %1884 = vmatpush2.msra.mxu0 0.0
      %1885 = vmatprep.subr.mxu0 0.0
      %1886 = vmatpush2.msra.mxu0 0.0
      %1887 = vmatprep.subr.mxu0 0.0
      %1888 = vmatpush2.msra.mxu0 0.0
      %1889 = vmatprep.subr.mxu0 0.0
      %1890 = vmatpush2.msra.mxu0 0.0
      %1891 = vmatprep.subr.mxu0 0.0
      %1892 = vmatpush2.msra.mxu0 0.0
      %1893 = vmatprep.subr.mxu0 0.0
      %1894 = vmatpush2.msra.mxu0 0.0
      %1895 = vmatprep.mubr.f32.mxu0 0.0
      %1896 = vmatmul.mubr.f32.gmra.mxu0 %v1808
      %v1897 = vpop.f32.mrf.mxu0
      %v1898 = vadd.f32 %v1805, %v1897
      %v1899 = vpop.f32.mrf.mxu0
      %1900 = vmatprep.mubr.f32.mxu0 0.0
      %1901 = vmatmul.mubr.f32.gmra.mxu0 %v1811
      %v1902 = vpop.f32.mrf.mxu0
      %v1903 = vadd.f32 %v1805, %v1902
      %v1904 = vpop.f32.mrf.mxu0
      %1905 = vmatprep.mubr.f32.mxu0 0.0
      %1906 = vmatmul.mubr.f32.gmra.mxu0 %v1814
      %v1907 = vpop.f32.mrf.mxu0
      %v1908 = vadd.f32 %v1805, %v1907
      %v1909 = vpop.f32.mrf.mxu0
      %1910 = vmatprep.mubr.f32.mxu0 0.0
      %1911 = vmatmul.mubr.f32.gmra.mxu0 %v1817
      %v1912 = vpop.f32.mrf.mxu0
      %v1913 = vadd.f32 %v1805, %v1912
      %v1914 = vpop.f32.mrf.mxu0
      %1915 = vmatprep.mubr.f32.mxu0 0.0
      %1916 = vmatmul.mubr.f32.gmra.mxu0 %v1820
      %v1917 = vpop.f32.mrf.mxu0
      %v1918 = vadd.f32 %v1805, %v1917
      %v1919 = vpop.f32.mrf.mxu0
      %1920 = vmatprep.mubr.f32.mxu0 0.0
      %1921 = vmatmul.mubr.f32.gmra.mxu0 %v1823
      %v1922 = vpop.f32.mrf.mxu0
      %v1923 = vadd.f32 %v1805, %v1922
      %v1924 = vpop.f32.mrf.mxu0
      %1925 = vmatprep.mubr.f32.mxu0 0.0
      %1926 = vmatmul.mubr.f32.gmra.mxu0 %v1826
      %v1927 = vpop.f32.mrf.mxu0
      %v1928 = vadd.f32 %v1805, %v1927
      %v1929 = vpop.f32.mrf.mxu0
      %1930 = vmatprep.mubr.f32.mxu0 0.0
      %1931 = vmatmul.mubr.f32.gmra.mxu0 %v1829
      %v1932 = vpop.f32.mrf.mxu0
      %v1933 = vadd.f32 %v1805, %v1932
      %v1934 = vpop.f32.mrf.mxu0
      %1935 = vdwg.mxu0
      %v1936 = vld [vmem:[%s455] sm:$0xff]
      %v1937 = vld [vmem:[%s455 + $0x8] sm:$0xff]
      %v1938 = vld [vmem:[%s455 + $0x10] sm:$0xff]
      %v1939 = vld [vmem:[%s455 + $0x18] sm:$0xff]
      %v1940 = vld [vmem:[%s455 + $0x20] sm:$0xff]
      %v1941 = vld [vmem:[%s455 + $0x28] sm:$0xff]
      %v1942 = vld [vmem:[%s455 + $0x30] sm:$0xff]
      %v1943 = vld [vmem:[%s455 + $0x38] sm:$0xff]
      %v1944 = vadd.f32 %v1898, %v1936
      %v1945 = vadd.f32 %v1903, %v1937
      %v1946 = vadd.f32 %v1908, %v1938
      %v1947 = vadd.f32 %v1913, %v1939
      %v1948 = vadd.f32 %v1918, %v1940
      %v1949 = vadd.f32 %v1923, %v1941
      %v1950 = vadd.f32 %v1928, %v1942
      %v1951 = vadd.f32 %v1933, %v1943
      %1952 = vst.msk [vmem:[%s460] sm:$0xff] %vm489, %v1944
      %1953 = vst.msk [vmem:[%s460 + $0x8] sm:$0xff] %vm489, %v1945
      %1954 = vst.msk [vmem:[%s460 + $0x10] sm:$0xff] %vm489, %v1946
      %1955 = vst.msk [vmem:[%s460 + $0x18] sm:$0xff] %vm489, %v1947
      %1956 = vst.msk [vmem:[%s460 + $0x20] sm:$0xff] %vm489, %v1948
      %1957 = vst.msk [vmem:[%s460 + $0x28] sm:$0xff] %vm489, %v1949
      %1958 = vst.msk [vmem:[%s460 + $0x30] sm:$0xff] %vm489, %v1950
      %1959 = vst.msk [vmem:[%s460 + $0x38] sm:$0xff] %vm489, %v1951
      %p1960 = scmp.lt.s32.totalorder %s24, 1
      %s1961 = scalar_select %p1960, %s24, 1
      %s1962 = smul.addr %s1961, 8
      %s1963 = smul.addr %s1962, 8
      %s1964 = scalar_lea.vmem %s13, %s1963
      // Predicated region
      $region73: #{_lambda_.3} parent=71 // pred_check
        %p1965 = pneg %p325
      $region74: #{_lambda_.3} parent=71 // pred_check_branch
        %1967 = sbr.rel (%p1965) target = $region76
      $region75: #{_lambda_.3} parent=71 // pred_region
        _
      $region76: #{_lambda_.3} parent=71 // pred_fallthru
        _
    $region72: #{_lambda_.3} parent=5 // pred_fallthru
      _
    %p1968 = scmp.le.s32.totalorder 2, %s19
    // Predicated region
    $region77: #{_lambda_.3} parent=5 // pred_check
      %p1969 = pneg %p1968
    $region78: #{_lambda_.3} parent=5 // pred_check_branch
      %1971 = sbr.rel (%p1969) target = $region80
    $region79: #{_lambda_.3} parent=5 // pred_region
      %s1972 = ssub.s32 %s19, 2
      // Predicated region
      $region81: #{_lambda_.3} parent=79 // pred_check
        %p1973 = pneg %p331
      $region82: #{_lambda_.3} parent=79 // pred_check_branch
        %1975 = sbr.rel (%p1973) target = $region84
      $region83: #{_lambda_.3} parent=79 // pred_region
        %p1976 = scmp.lt.s32.totalorder %s25, 1
        %s1977 = scalar_select %p1976, %s25, 1
        %s1978 = smul.addr %s1977, 8
        %s1979 = smul.addr %s1978, 8
        %s1980 = scalar_lea.vmem %s13, %s1979
      $region84: #{_lambda_.3} parent=79 // pred_fallthru
        _
    $region80: #{_lambda_.3} parent=5 // pred_fallthru
      _
  $region6: #{_lambda_.3} parent=0 // loop_footer
    %s23 = sadd.s32 1, %s19
  $region7: #{_lambda_.3} parent=0 // loop_footer_branch
    %18 = sbr.rel target = $region3
  $region8: #{_lambda_.3} parent=0 // loop_exit
    _

// kernel: _lambda_.2
$region0: #{_lambda_.2}
  #allocation0 [shape = 'u32[]', space=smem, size = 0x4, offset = 0x4, fixed_abs, tag = 'smem constant byte address 0x4 - core index']
  #allocation1 [shape = 'u32[144,128]{1,0:T(1,128)}', space=vmem, size = 0x12000, scoped, tag = 'internal scratch']
  %s0 = inlined_call_operand.vmem [shape: f32[2,576,8], index: 0, kind: input, shape index: {}]
  %s1 = inlined_call_operand.vmem [shape: f32[576,1], index: 1, kind: input, shape index: {}]
  %s2 = inlined_call_operand.vmem [shape: f32[8,16], index: 2, kind: input, shape index: {}]
  %s3 = inlined_call_operand.vmem [shape: f32[1,16], index: 3, kind: input, shape index: {}]
  %s4 = inlined_call_operand.vmem [shape: f32[9,16], index: 4, kind: input, shape index: {}]
  %s5 = inlined_call_operand.vmem [shape: f32[1,16], index: 5, kind: input, shape index: {}]
  %s6 = inlined_call_operand.vmem [shape: f32[16,2], index: 6, kind: input, shape index: {}]
  %s7 = inlined_call_operand.vmem [shape: f32[1,2], index: 7, kind: input, shape index: {}]
  %s8 = inlined_call_operand.vmem [shape: f32[2,16], index: 8, kind: input, shape index: {}]
  %s9 = inlined_call_operand.vmem [shape: f32[1,16], index: 9, kind: input, shape index: {}]
  %s10 = inlined_call_operand.vmem [shape: f32[16,8], index: 10, kind: input, shape index: {}]
  %s11 = inlined_call_operand.vmem [shape: f32[1,8], index: 11, kind: input, shape index: {}]
  %s12 = inlined_call_operand.vmem [shape: f32[2,64,8], index: 12, kind: output, shape index: {}]
  %s13 = sld [smem:[#allocation0]]
  $region81: #{_lambda_.2} parent=0
    _
  %s15 = ssub.s32 1, %s13
  %s16 = scalar_select 0, %s15, %s13
  loop: start=0, step=1, limit=4
  $region2: #{_lambda_.2} parent=0 // loop_pre_header
    _
  $region3: #{_lambda_.2} parent=0 // loop_header
    %s18 = sphi 0, %s22
    %p19 = scmp.ge.s32.totalorder %s18, 4
    %s28 = sphi 0, %s30
    %s31 = sphi 0, %s28
    %s32 = sphi 0, %s31
    %s48 = sphi 0, %s32
    %s52 = sphi 0, %s52
    %s54 = sphi 0, %s52
    %s55 = sphi 0, %s54
    %s69 = sphi 0, %s55
    %s73 = sphi 0, %s73
    %s75 = sphi 0, %s73
    %s76 = sphi 0, %s75
    %s90 = sphi 0, %s76
    %s94 = sphi 0, %s94
    %s96 = sphi 0, %s94
    %s97 = sphi 0, %s96
    %s111 = sphi 0, %s97
    %s115 = sphi 0, %s115
    %s117 = sphi 0, %s115
    %s118 = sphi 0, %s117
    %s132 = sphi 0, %s118
    %s136 = sphi 0, %s136
    %s138 = sphi 0, %s136
    %s139 = sphi 0, %s138
    %s153 = sphi 0, %s139
    %s157 = sphi 0, %s157
    %s159 = sphi 0, %s157
    %s160 = sphi 0, %s159
    %s174 = sphi 0, %s160
    %s178 = sphi 0, %s178
    %s180 = sphi 0, %s178
    %s181 = sphi 0, %s180
    %s195 = sphi 0, %s181
    %s199 = sphi 0, %s199
    %s201 = sphi 0, %s199
    %s202 = sphi 0, %s201
    %s216 = sphi 0, %s202
    %s220 = sphi 0, %s220
    %s222 = sphi 0, %s220
    %s223 = sphi 0, %s222
    %s237 = sphi 0, %s223
    %s241 = sphi 0, %s241
    %s243 = sphi 0, %s241
    %s244 = sphi 0, %s243
    %s258 = sphi 0, %s244
    %s262 = sphi 0, %s262
    %s264 = sphi 0, %s262
    %s265 = sphi 0, %s264
    %s279 = sphi 0, %s265
    %s285 = sphi 0, %s287
    %s288 = sphi 0, %s285
    %s289 = sphi 0, %s288
    %s305 = sphi 0, %s289
  $region4: #{_lambda_.2} parent=0 // loop_header_branch
    %21 = sbr.rel (%p19) target = $region8
  $region5: #{_lambda_.2} parent=0 // loop_body
    %s23 = ssub.s32 %s18, 1
    %s24 = ssub.s32 %s18, 2
    %s25 = sadd.s32 %s18, 1
    %s26 = ssub.s32 %s18, %s25
    %p27 = scmp.eq.s32.totalorder %s26, 0
    %s29 = sadd.s32 %s28, 1
    %s30 = scalar_select %p27, %s28, %s29
    %p33 = pneg %p27
    %p34 = scmp.eq.s32.totalorder %s18, 1
    %p35 = por %p33, %p34
    %p36 = scmp.ne.s32.totalorder %s28, %s31
    %p37 = scmp.eq.s32.totalorder %s18, 0
    %p38 = por %p36, %p37
    %p39 = scmp.ne.s32.totalorder %s28, %s31
    %p40 = scmp.eq.s32.totalorder %s23, 1
    %p41 = por %p39, %p40
    %p42 = scmp.ne.s32.totalorder %s31, %s32
    %p43 = scmp.eq.s32.totalorder %s23, 0
    %p44 = por %p42, %p43
    %p45 = scmp.ne.s32.totalorder %s31, %s32
    %p46 = scmp.eq.s32.totalorder %s24, 1
    %p47 = por %p45, %p46
    %p49 = scmp.ne.s32.totalorder %s32, %s48
    %p50 = scmp.eq.s32.totalorder %s24, 0
    %p51 = por %p49, %p50
    %s53 = sadd.s32 %s52, 1
    %p56 = scmp.eq.s32.totalorder %s18, 1
    %p57 = scmp.ne.s32.totalorder %s52, %s54
    %p58 = scmp.eq.s32.totalorder %s18, 0
    %p59 = por %p57, %p58
    %p60 = scmp.ne.s32.totalorder %s52, %s54
    %p61 = scmp.eq.s32.totalorder %s23, 1
    %p62 = por %p60, %p61
    %p63 = scmp.ne.s32.totalorder %s54, %s55
    %p64 = scmp.eq.s32.totalorder %s23, 0
    %p65 = por %p63, %p64
    %p66 = scmp.ne.s32.totalorder %s54, %s55
    %p67 = scmp.eq.s32.totalorder %s24, 1
    %p68 = por %p66, %p67
    %p70 = scmp.ne.s32.totalorder %s55, %s69
    %p71 = scmp.eq.s32.totalorder %s24, 0
    %p72 = por %p70, %p71
    %s74 = sadd.s32 %s73, 1
    %p77 = scmp.eq.s32.totalorder %s18, 1
    %p78 = scmp.ne.s32.totalorder %s73, %s75
    %p79 = scmp.eq.s32.totalorder %s18, 0
    %p80 = por %p78, %p79
    %p81 = scmp.ne.s32.totalorder %s73, %s75
    %p82 = scmp.eq.s32.totalorder %s23, 1
    %p83 = por %p81, %p82
    %p84 = scmp.ne.s32.totalorder %s75, %s76
    %p85 = scmp.eq.s32.totalorder %s23, 0
    %p86 = por %p84, %p85
    %p87 = scmp.ne.s32.totalorder %s75, %s76
    %p88 = scmp.eq.s32.totalorder %s24, 1
    %p89 = por %p87, %p88
    %p91 = scmp.ne.s32.totalorder %s76, %s90
    %p92 = scmp.eq.s32.totalorder %s24, 0
    %p93 = por %p91, %p92
    %s95 = sadd.s32 %s94, 1
    %p98 = scmp.eq.s32.totalorder %s18, 1
    %p99 = scmp.ne.s32.totalorder %s94, %s96
    %p100 = scmp.eq.s32.totalorder %s18, 0
    %p101 = por %p99, %p100
    %p102 = scmp.ne.s32.totalorder %s94, %s96
    %p103 = scmp.eq.s32.totalorder %s23, 1
    %p104 = por %p102, %p103
    %p105 = scmp.ne.s32.totalorder %s96, %s97
    %p106 = scmp.eq.s32.totalorder %s23, 0
    %p107 = por %p105, %p106
    %p108 = scmp.ne.s32.totalorder %s96, %s97
    %p109 = scmp.eq.s32.totalorder %s24, 1
    %p110 = por %p108, %p109
    %p112 = scmp.ne.s32.totalorder %s97, %s111
    %p113 = scmp.eq.s32.totalorder %s24, 0
    %p114 = por %p112, %p113
    %s116 = sadd.s32 %s115, 1
    %p119 = scmp.eq.s32.totalorder %s18, 1
    %p120 = scmp.ne.s32.totalorder %s115, %s117
    %p121 = scmp.eq.s32.totalorder %s18, 0
    %p122 = por %p120, %p121
    %p123 = scmp.ne.s32.totalorder %s115, %s117
    %p124 = scmp.eq.s32.totalorder %s23, 1
    %p125 = por %p123, %p124
    %p126 = scmp.ne.s32.totalorder %s117, %s118
    %p127 = scmp.eq.s32.totalorder %s23, 0
    %p128 = por %p126, %p127
    %p129 = scmp.ne.s32.totalorder %s117, %s118
    %p130 = scmp.eq.s32.totalorder %s24, 1
    %p131 = por %p129, %p130
    %p133 = scmp.ne.s32.totalorder %s118, %s132
    %p134 = scmp.eq.s32.totalorder %s24, 0
    %p135 = por %p133, %p134
    %s137 = sadd.s32 %s136, 1
    %p140 = scmp.eq.s32.totalorder %s18, 1
    %p141 = scmp.ne.s32.totalorder %s136, %s138
    %p142 = scmp.eq.s32.totalorder %s18, 0
    %p143 = por %p141, %p142
    %p144 = scmp.ne.s32.totalorder %s136, %s138
    %p145 = scmp.eq.s32.totalorder %s23, 1
    %p146 = por %p144, %p145
    %p147 = scmp.ne.s32.totalorder %s138, %s139
    %p148 = scmp.eq.s32.totalorder %s23, 0
    %p149 = por %p147, %p148
    %p150 = scmp.ne.s32.totalorder %s138, %s139
    %p151 = scmp.eq.s32.totalorder %s24, 1
    %p152 = por %p150, %p151
    %p154 = scmp.ne.s32.totalorder %s139, %s153
    %p155 = scmp.eq.s32.totalorder %s24, 0
    %p156 = por %p154, %p155
    %s158 = sadd.s32 %s157, 1
    %p161 = scmp.eq.s32.totalorder %s18, 1
    %p162 = scmp.ne.s32.totalorder %s157, %s159
    %p163 = scmp.eq.s32.totalorder %s18, 0
    %p164 = por %p162, %p163
    %p165 = scmp.ne.s32.totalorder %s157, %s159
    %p166 = scmp.eq.s32.totalorder %s23, 1
    %p167 = por %p165, %p166
    %p168 = scmp.ne.s32.totalorder %s159, %s160
    %p169 = scmp.eq.s32.totalorder %s23, 0
    %p170 = por %p168, %p169
    %p171 = scmp.ne.s32.totalorder %s159, %s160
    %p172 = scmp.eq.s32.totalorder %s24, 1
    %p173 = por %p171, %p172
    %p175 = scmp.ne.s32.totalorder %s160, %s174
    %p176 = scmp.eq.s32.totalorder %s24, 0
    %p177 = por %p175, %p176
    %s179 = sadd.s32 %s178, 1
    %p182 = scmp.eq.s32.totalorder %s18, 1
    %p183 = scmp.ne.s32.totalorder %s178, %s180
    %p184 = scmp.eq.s32.totalorder %s18, 0
    %p185 = por %p183, %p184
    %p186 = scmp.ne.s32.totalorder %s178, %s180
    %p187 = scmp.eq.s32.totalorder %s23, 1
    %p188 = por %p186, %p187
    %p189 = scmp.ne.s32.totalorder %s180, %s181
    %p190 = scmp.eq.s32.totalorder %s23, 0
    %p191 = por %p189, %p190
    %p192 = scmp.ne.s32.totalorder %s180, %s181
    %p193 = scmp.eq.s32.totalorder %s24, 1
    %p194 = por %p192, %p193
    %p196 = scmp.ne.s32.totalorder %s181, %s195
    %p197 = scmp.eq.s32.totalorder %s24, 0
    %p198 = por %p196, %p197
    %s200 = sadd.s32 %s199, 1
    %p203 = scmp.eq.s32.totalorder %s18, 1
    %p204 = scmp.ne.s32.totalorder %s199, %s201
    %p205 = scmp.eq.s32.totalorder %s18, 0
    %p206 = por %p204, %p205
    %p207 = scmp.ne.s32.totalorder %s199, %s201
    %p208 = scmp.eq.s32.totalorder %s23, 1
    %p209 = por %p207, %p208
    %p210 = scmp.ne.s32.totalorder %s201, %s202
    %p211 = scmp.eq.s32.totalorder %s23, 0
    %p212 = por %p210, %p211
    %p213 = scmp.ne.s32.totalorder %s201, %s202
    %p214 = scmp.eq.s32.totalorder %s24, 1
    %p215 = por %p213, %p214
    %p217 = scmp.ne.s32.totalorder %s202, %s216
    %p218 = scmp.eq.s32.totalorder %s24, 0
    %p219 = por %p217, %p218
    %s221 = sadd.s32 %s220, 1
    %p224 = scmp.eq.s32.totalorder %s18, 1
    %p225 = scmp.ne.s32.totalorder %s220, %s222
    %p226 = scmp.eq.s32.totalorder %s18, 0
    %p227 = por %p225, %p226
    %p228 = scmp.ne.s32.totalorder %s220, %s222
    %p229 = scmp.eq.s32.totalorder %s23, 1
    %p230 = por %p228, %p229
    %p231 = scmp.ne.s32.totalorder %s222, %s223
    %p232 = scmp.eq.s32.totalorder %s23, 0
    %p233 = por %p231, %p232
    %p234 = scmp.ne.s32.totalorder %s222, %s223
    %p235 = scmp.eq.s32.totalorder %s24, 1
    %p236 = por %p234, %p235
    %p238 = scmp.ne.s32.totalorder %s223, %s237
    %p239 = scmp.eq.s32.totalorder %s24, 0
    %p240 = por %p238, %p239
    %s242 = sadd.s32 %s241, 1
    %p245 = scmp.eq.s32.totalorder %s18, 1
    %p246 = scmp.ne.s32.totalorder %s241, %s243
    %p247 = scmp.eq.s32.totalorder %s18, 0
    %p248 = por %p246, %p247
    %p249 = scmp.ne.s32.totalorder %s241, %s243
    %p250 = scmp.eq.s32.totalorder %s23, 1
    %p251 = por %p249, %p250
    %p252 = scmp.ne.s32.totalorder %s243, %s244
    %p253 = scmp.eq.s32.totalorder %s23, 0
    %p254 = por %p252, %p253
    %p255 = scmp.ne.s32.totalorder %s243, %s244
    %p256 = scmp.eq.s32.totalorder %s24, 1
    %p257 = por %p255, %p256
    %p259 = scmp.ne.s32.totalorder %s244, %s258
    %p260 = scmp.eq.s32.totalorder %s24, 0
    %p261 = por %p259, %p260
    %s263 = sadd.s32 %s262, 1
    %p266 = scmp.eq.s32.totalorder %s18, 1
    %p267 = scmp.ne.s32.totalorder %s262, %s264
    %p268 = scmp.eq.s32.totalorder %s18, 0
    %p269 = por %p267, %p268
    %p270 = scmp.ne.s32.totalorder %s262, %s264
    %p271 = scmp.eq.s32.totalorder %s23, 1
    %p272 = por %p270, %p271
    %p273 = scmp.ne.s32.totalorder %s264, %s265
    %p274 = scmp.eq.s32.totalorder %s23, 0
    %p275 = por %p273, %p274
    %p276 = scmp.ne.s32.totalorder %s264, %s265
    %p277 = scmp.eq.s32.totalorder %s24, 1
    %p278 = por %p276, %p277
    %p280 = scmp.ne.s32.totalorder %s265, %s279
    %p281 = scmp.eq.s32.totalorder %s24, 0
    %p282 = por %p280, %p281
    %s283 = ssub.s32 %s18, %s25
    %p284 = scmp.eq.s32.totalorder %s283, 0
    %s286 = sadd.s32 %s285, 1
    %s287 = scalar_select %p284, %s285, %s286
    %p290 = pneg %p284
    %p291 = scmp.eq.s32.totalorder %s18, 1
    %p292 = por %p290, %p291
    %p293 = scmp.ne.s32.totalorder %s285, %s288
    %p294 = scmp.eq.s32.totalorder %s18, 0
    %p295 = por %p293, %p294
    %p296 = scmp.ne.s32.totalorder %s285, %s288
    %p297 = scmp.eq.s32.totalorder %s23, 1
    %p298 = por %p296, %p297
    %p299 = scmp.ne.s32.totalorder %s288, %s289
    %p300 = scmp.eq.s32.totalorder %s23, 0
    %p301 = por %p299, %p300
    %p302 = scmp.ne.s32.totalorder %s288, %s289
    %p303 = scmp.eq.s32.totalorder %s24, 1
    %p304 = por %p302, %p303
    %p306 = scmp.ne.s32.totalorder %s289, %s305
    %p307 = scmp.eq.s32.totalorder %s24, 0
    %p308 = por %p306, %p307
    %p309 = scmp.le.s32.totalorder 1, %s18
    %p310 = scmp.lt.s32.totalorder %s18, 3
    %p311 = pnand %p309, %p310
    %p312 = pneg %p311
    // Predicated region
    $region9: #{_lambda_.2} parent=5 // pred_check
      _
    $region10: #{_lambda_.2} parent=5 // pred_check_branch
      %314 = sbr.rel (%p311) target = $region12
    $region11: #{_lambda_.2} parent=5 // pred_region
      %s315 = ssub.s32 %s18, 1
      // Predicated region
      $region13: #{_lambda_.2} parent=11 // pred_check
        %p316 = pneg %p65
      $region14: #{_lambda_.2} parent=11 // pred_check_branch
        %318 = sbr.rel (%p316) target = $region16
      $region15: #{_lambda_.2} parent=11 // pred_region
        _
      $region16: #{_lambda_.2} parent=11 // pred_fallthru
        _
      // Predicated region
      $region17: #{_lambda_.2} parent=11 // pred_check
        %p319 = pneg %p86
      $region18: #{_lambda_.2} parent=11 // pred_check_branch
        %321 = sbr.rel (%p319) target = $region20
      $region19: #{_lambda_.2} parent=11 // pred_region
        _
      $region20: #{_lambda_.2} parent=11 // pred_fallthru
        _
      // Predicated region
      $region21: #{_lambda_.2} parent=11 // pred_check
        %p322 = pneg %p107
      $region22: #{_lambda_.2} parent=11 // pred_check_branch
        %324 = sbr.rel (%p322) target = $region24
      $region23: #{_lambda_.2} parent=11 // pred_region
        _
      $region24: #{_lambda_.2} parent=11 // pred_fallthru
        _
      // Predicated region
      $region25: #{_lambda_.2} parent=11 // pred_check
        %p325 = pneg %p128
      $region26: #{_lambda_.2} parent=11 // pred_check_branch
        %327 = sbr.rel (%p325) target = $region28
      $region27: #{_lambda_.2} parent=11 // pred_region
        _
      $region28: #{_lambda_.2} parent=11 // pred_fallthru
        _
      // Predicated region
      $region29: #{_lambda_.2} parent=11 // pred_check
        %p328 = pneg %p149
      $region30: #{_lambda_.2} parent=11 // pred_check_branch
        %330 = sbr.rel (%p328) target = $region32
      $region31: #{_lambda_.2} parent=11 // pred_region
        _
      $region32: #{_lambda_.2} parent=11 // pred_fallthru
        _
      // Predicated region
      $region33: #{_lambda_.2} parent=11 // pred_check
        %p331 = pneg %p170
      $region34: #{_lambda_.2} parent=11 // pred_check_branch
        %333 = sbr.rel (%p331) target = $region36
      $region35: #{_lambda_.2} parent=11 // pred_region
        _
      $region36: #{_lambda_.2} parent=11 // pred_fallthru
        _
      // Predicated region
      $region37: #{_lambda_.2} parent=11 // pred_check
        %p334 = pneg %p191
      $region38: #{_lambda_.2} parent=11 // pred_check_branch
        %336 = sbr.rel (%p334) target = $region40
      $region39: #{_lambda_.2} parent=11 // pred_region
        _
      $region40: #{_lambda_.2} parent=11 // pred_fallthru
        _
      // Predicated region
      $region41: #{_lambda_.2} parent=11 // pred_check
        %p337 = pneg %p212
      $region42: #{_lambda_.2} parent=11 // pred_check_branch
        %339 = sbr.rel (%p337) target = $region44
      $region43: #{_lambda_.2} parent=11 // pred_region
        _
      $region44: #{_lambda_.2} parent=11 // pred_fallthru
        _
      // Predicated region
      $region45: #{_lambda_.2} parent=11 // pred_check
        %p340 = pneg %p233
      $region46: #{_lambda_.2} parent=11 // pred_check_branch
        %342 = sbr.rel (%p340) target = $region48
      $region47: #{_lambda_.2} parent=11 // pred_region
        _
      $region48: #{_lambda_.2} parent=11 // pred_fallthru
        _
      // Predicated region
      $region49: #{_lambda_.2} parent=11 // pred_check
        %p343 = pneg %p254
      $region50: #{_lambda_.2} parent=11 // pred_check_branch
        %345 = sbr.rel (%p343) target = $region52
      $region51: #{_lambda_.2} parent=11 // pred_region
        _
      $region52: #{_lambda_.2} parent=11 // pred_fallthru
        _
      // Predicated region
      $region53: #{_lambda_.2} parent=11 // pred_check
        %p346 = pneg %p275
      $region54: #{_lambda_.2} parent=11 // pred_check_branch
        %348 = sbr.rel (%p346) target = $region56
      $region55: #{_lambda_.2} parent=11 // pred_region
        _
      $region56: #{_lambda_.2} parent=11 // pred_fallthru
        _
    $region12: #{_lambda_.2} parent=5 // pred_fallthru
      _
    %p349 = scmp.lt.s32.totalorder %s18, 2
    // Predicated region
    $region57: #{_lambda_.2} parent=5 // pred_check
      %p350 = pneg %p349
    $region58: #{_lambda_.2} parent=5 // pred_check_branch
      %352 = sbr.rel (%p350) target = $region60
    $region59: #{_lambda_.2} parent=5 // pred_region
      // Predicated region
      $region61: #{_lambda_.2} parent=59 // pred_check
        %p353 = pneg %p38
      $region62: #{_lambda_.2} parent=59 // pred_check_branch
        %355 = sbr.rel (%p353) target = $region64
      $region63: #{_lambda_.2} parent=59 // pred_region
        %p356 = scmp.lt.s32.totalorder %s18, 1
        %s357 = scalar_select %p356, %s18, 1
        %s358 = smul.addr %s357, 72
        %s359 = smul.addr %s358, 8
        %s360 = scalar_lea.vmem %s0, %s359
      $region64: #{_lambda_.2} parent=59 // pred_fallthru
        _
    $region60: #{_lambda_.2} parent=5 // pred_fallthru
      _
    %p361 = scmp.le.s32.totalorder 1, %s18
    %p362 = scmp.lt.s32.totalorder %s18, 3
    %p363 = pnand %p361, %p362
    %p364 = pneg %p363
    // Predicated region
    $region65: #{_lambda_.2} parent=5 // pred_check
      _
    $region66: #{_lambda_.2} parent=5 // pred_check_branch
      %366 = sbr.rel (%p363) target = $region68
    $region67: #{_lambda_.2} parent=5 // pred_region
      %s367 = ssub.s32 %s18, 1
      %p368 = scmp.lt.s32.totalorder %s23, 1
      %s369 = scalar_select %p368, %s23, 1
      %s370 = smul.addr %s369, 72
      %s371 = smul.addr %s370, 8
      %s372 = scalar_lea.vmem %s0, %s371
      %p373 = pneg %p44
      %p374 = pneg %p41
      %p375 = pneg %p65
      %p376 = pneg %p62
      %p377 = pneg %p86
      %p378 = pneg %p83
      %p379 = pneg %p107
      %p380 = pneg %p104
      %p381 = pneg %p128
      %p382 = pneg %p125
      %p383 = pneg %p149
      %p384 = pneg %p146
      %p385 = pneg %p170
      %p386 = pneg %p167
      %p387 = pneg %p191
      %p388 = pneg %p188
      %p389 = pneg %p212
      %p390 = pneg %p209
      %p391 = pneg %p233
      %p392 = pneg %p230
      %p393 = pneg %p254
      %p394 = pneg %p251
      %p395 = pneg %p275
      %p396 = pneg %p272
      %p397 = pneg %p301
      %p398 = pneg %p298
      %p399 = scmp.lt.s32.totalorder %s23, 1
      %s400 = scalar_select %p399, %s23, 1
      %s401 = smul.addr %s400, 8
      %s402 = smul.addr %s401, 8
      %s403 = scalar_lea.vmem %s12, %s402
      %p404 = scmp.lt.s32.totalorder %s23, 1
      %s405 = scalar_select %p404, %s23, 1
      %s406 = smul.addr %s405, 72
      %s407 = smul.addr %s406, 8
      %s408 = scalar_lea.vmem %s0, %s407
      %p409 = scmp.lt.s32.totalorder %s23, 1
      %s410 = scalar_select %p409, %s23, 1
      %s411 = smul.addr %s410, 8
      %s412 = smul.addr %s411, 8
      %s413 = scalar_lea.vmem %s12, %s412
      %v414 = vld [vmem:[%s408] sm:$0xff]
      %v415 = vld [vmem:[%s408 + $0x8] sm:$0xff]
      %v416 = vld [vmem:[%s408 + $0x10] sm:$0xff]
      %v417 = vld [vmem:[%s408 + $0x18] sm:$0xff]
      %v418 = vld [vmem:[%s408 + $0x20] sm:$0xff]
      %v419 = vld [vmem:[%s408 + $0x28] sm:$0xff]
      %v420 = vld [vmem:[%s408 + $0x30] sm:$0xff]
      %v421 = vld [vmem:[%s408 + $0x38] sm:$0xff]
      %v422 = vld [vmem:[%s408 + $0x40] sm:$0xff]
      %v423 = vld [vmem:[%s408 + $0x48] sm:$0xff]
      %v424 = vld [vmem:[%s408 + $0x50] sm:$0xff]
      %v425 = vld [vmem:[%s408 + $0x58] sm:$0xff]
      %v426 = vld [vmem:[%s408 + $0x60] sm:$0xff]
      %v427 = vld [vmem:[%s408 + $0x68] sm:$0xff]
      %v428 = vld [vmem:[%s408 + $0x70] sm:$0xff]
      %v429 = vld [vmem:[%s408 + $0x78] sm:$0xff]
      %v430 = vld [vmem:[%s408 + $0x80] sm:$0xff]
      %v431 = vld [vmem:[%s408 + $0x88] sm:$0xff]
      %v432 = vld [vmem:[%s408 + $0x90] sm:$0xff]
      %v433 = vld [vmem:[%s408 + $0x98] sm:$0xff]
      %v434 = vld [vmem:[%s408 + $0xa0] sm:$0xff]
      %v435 = vld [vmem:[%s408 + $0xa8] sm:$0xff]
      %v436 = vld [vmem:[%s408 + $0xb0] sm:$0xff]
      %v437 = vld [vmem:[%s408 + $0xb8] sm:$0xff]
      %v438 = vld [vmem:[%s408 + $0xc0] sm:$0xff]
      %v439 = vld [vmem:[%s408 + $0xc8] sm:$0xff]
      %v440 = vld [vmem:[%s408 + $0xd0] sm:$0xff]
      %v441 = vld [vmem:[%s408 + $0xd8] sm:$0xff]
      %v442 = vld [vmem:[%s408 + $0xe0] sm:$0xff]
      %v443 = vld [vmem:[%s408 + $0xe8] sm:$0xff]
      %v444 = vld [vmem:[%s408 + $0xf0] sm:$0xff]
      %v445 = vld [vmem:[%s408 + $0xf8] sm:$0xff]
      %v446 = vld [vmem:[%s408 + $0x100] sm:$0xff]
      %v447 = vld [vmem:[%s408 + $0x108] sm:$0xff]
      %v448 = vld [vmem:[%s408 + $0x110] sm:$0xff]
      %v449 = vld [vmem:[%s408 + $0x118] sm:$0xff]
      %v450 = vld [vmem:[%s408 + $0x120] sm:$0xff]
      %v451 = vld [vmem:[%s408 + $0x128] sm:$0xff]
      %v452 = vld [vmem:[%s408 + $0x130] sm:$0xff]
      %v453 = vld [vmem:[%s408 + $0x138] sm:$0xff]
      %v454 = vld [vmem:[%s408 + $0x140] sm:$0xff]
      %v455 = vld [vmem:[%s408 + $0x148] sm:$0xff]
      %v456 = vld [vmem:[%s408 + $0x150] sm:$0xff]
      %v457 = vld [vmem:[%s408 + $0x158] sm:$0xff]
      %v458 = vld [vmem:[%s408 + $0x160] sm:$0xff]
      %v459 = vld [vmem:[%s408 + $0x168] sm:$0xff]
      %v460 = vld [vmem:[%s408 + $0x170] sm:$0xff]
      %v461 = vld [vmem:[%s408 + $0x178] sm:$0xff]
      %v462 = vld [vmem:[%s408 + $0x180] sm:$0xff]
      %v463 = vld [vmem:[%s408 + $0x188] sm:$0xff]
      %v464 = vld [vmem:[%s408 + $0x190] sm:$0xff]
      %v465 = vld [vmem:[%s408 + $0x198] sm:$0xff]
      %v466 = vld [vmem:[%s408 + $0x1a0] sm:$0xff]
      %v467 = vld [vmem:[%s408 + $0x1a8] sm:$0xff]
      %v468 = vld [vmem:[%s408 + $0x1b0] sm:$0xff]
      %v469 = vld [vmem:[%s408 + $0x1b8] sm:$0xff]
      %v470 = vld [vmem:[%s408 + $0x1c0] sm:$0xff]
      %v471 = vld [vmem:[%s408 + $0x1c8] sm:$0xff]
      %v472 = vld [vmem:[%s408 + $0x1d0] sm:$0xff]
      %v473 = vld [vmem:[%s408 + $0x1d8] sm:$0xff]
      %v474 = vld [vmem:[%s408 + $0x1e0] sm:$0xff]
      %v475 = vld [vmem:[%s408 + $0x1e8] sm:$0xff]
      %v476 = vld [vmem:[%s408 + $0x1f0] sm:$0xff]
      %v477 = vld [vmem:[%s408 + $0x1f8] sm:$0xff]
      %v478 = vld [vmem:[%s408 + $0x200] sm:$0xff]
      %v479 = vld [vmem:[%s408 + $0x208] sm:$0xff]
      %v480 = vld [vmem:[%s408 + $0x210] sm:$0xff]
      %v481 = vld [vmem:[%s408 + $0x218] sm:$0xff]
      %v482 = vld [vmem:[%s408 + $0x220] sm:$0xff]
      %v483 = vld [vmem:[%s408 + $0x228] sm:$0xff]
      %v484 = vld [vmem:[%s408 + $0x230] sm:$0xff]
      %v485 = vld [vmem:[%s408 + $0x238] sm:$0xff]
      %v486 = vld [vmem:[%s2] sm:$0xff]
      %v487 = vld [vmem:[%s3] sm:$0x1]
      %v489 = vlaneseq
      %v490 = vshrl.u32 %v489, 7
      %v491 = vsub.s32 0, %v490
      %v492 = vrot.slane %v487, %v491
      %vm494 = vcmask 64512
      %v496 = vsel %vm494, %v414, 0
      %v499 = vsel %vm494, %v415, 0
      %v502 = vsel %vm494, %v416, 0
      %v505 = vsel %vm494, %v417, 0
      %v508 = vsel %vm494, %v418, 0
      %v511 = vsel %vm494, %v419, 0
      %v514 = vsel %vm494, %v420, 0
      %v517 = vsel %vm494, %v421, 0
      %v520 = vsel %vm494, %v422, 0
      %v523 = vsel %vm494, %v423, 0
      %v526 = vsel %vm494, %v424, 0
      %v529 = vsel %vm494, %v425, 0
      %v532 = vsel %vm494, %v426, 0
      %v535 = vsel %vm494, %v427, 0
      %v538 = vsel %vm494, %v428, 0
      %v541 = vsel %vm494, %v429, 0
      %v544 = vsel %vm494, %v430, 0
      %v547 = vsel %vm494, %v431, 0
      %v550 = vsel %vm494, %v432, 0
      %v553 = vsel %vm494, %v433, 0
      %v556 = vsel %vm494, %v434, 0
      %v559 = vsel %vm494, %v435, 0
      %v562 = vsel %vm494, %v436, 0
      %v565 = vsel %vm494, %v437, 0
      %v568 = vsel %vm494, %v438, 0
      %v571 = vsel %vm494, %v439, 0
      %v574 = vsel %vm494, %v440, 0
      %v577 = vsel %vm494, %v441, 0
      %v580 = vsel %vm494, %v442, 0
      %v583 = vsel %vm494, %v443, 0
      %v586 = vsel %vm494, %v444, 0
      %v589 = vsel %vm494, %v445, 0
      %v592 = vsel %vm494, %v446, 0
      %v595 = vsel %vm494, %v447, 0
      %v598 = vsel %vm494, %v448, 0
      %v601 = vsel %vm494, %v449, 0
      %v604 = vsel %vm494, %v450, 0
      %v607 = vsel %vm494, %v451, 0
      %v610 = vsel %vm494, %v452, 0
      %v613 = vsel %vm494, %v453, 0
      %v616 = vsel %vm494, %v454, 0
      %v619 = vsel %vm494, %v455, 0
      %v622 = vsel %vm494, %v456, 0
      %v625 = vsel %vm494, %v457, 0
      %v628 = vsel %vm494, %v458, 0
      %v631 = vsel %vm494, %v459, 0
      %v634 = vsel %vm494, %v460, 0
      %v637 = vsel %vm494, %v461, 0
      %v640 = vsel %vm494, %v462, 0
      %v643 = vsel %vm494, %v463, 0
      %v646 = vsel %vm494, %v464, 0
      %v649 = vsel %vm494, %v465, 0
      %v652 = vsel %vm494, %v466, 0
      %v655 = vsel %vm494, %v467, 0
      %v658 = vsel %vm494, %v468, 0
      %v661 = vsel %vm494, %v469, 0
      %v664 = vsel %vm494, %v470, 0
      %v667 = vsel %vm494, %v471, 0
      %v670 = vsel %vm494, %v472, 0
      %v673 = vsel %vm494, %v473, 0
      %v676 = vsel %vm494, %v474, 0
      %v679 = vsel %vm494, %v475, 0
      %v682 = vsel %vm494, %v476, 0
      %v685 = vsel %vm494, %v477, 0
      %v688 = vsel %vm494, %v478, 0
      %v691 = vsel %vm494, %v479, 0
      %v694 = vsel %vm494, %v480, 0
      %v697 = vsel %vm494, %v481, 0
      %v700 = vsel %vm494, %v482, 0
      %v703 = vsel %vm494, %v483, 0
      %v706 = vsel %vm494, %v484, 0
      %v709 = vsel %vm494, %v485, 0
      %711 = vmatprep.subr.mxu0 0.0
      %712 = vmatpush1.msra.mxu0 0.0
      %713 = vmatprep.subr.mxu0 0.0
      %714 = vmatpush1.msra.mxu0 0.0
      %715 = vmatprep.subr.mxu0 0.0
      %716 = vmatpush1.msra.mxu0 0.0
      %717 = vmatprep.subr.mxu0 0.0
      %718 = vmatpush1.msra.mxu0 0.0
      %719 = vmatprep.subr.mxu0 0.0
      %720 = vmatpush1.msra.mxu0 0.0
      %721 = vmatprep.subr.mxu0 0.0
      %722 = vmatpush1.msra.mxu0 0.0
      %723 = vmatprep.subr.mxu0 0.0
      %724 = vmatpush1.msra.mxu0 0.0
      %725 = vmatprep.subr.mxu0 0.0
      %726 = vmatpush1.msra.mxu0 0.0
      %727 = vmatprep.subr.mxu0 0.0
      %728 = vmatpush1.msra.mxu0 0.0
      %729 = vmatprep.subr.mxu0 0.0
      %730 = vmatpush1.msra.mxu0 0.0
      %731 = vmatprep.subr.mxu0 0.0
      %732 = vmatpush1.msra.mxu0 0.0
      %733 = vmatprep.subr.mxu0 0.0
      %734 = vmatpush1.msra.mxu0 0.0
      %735 = vmatprep.subr.mxu0 0.0
      %736 = vmatpush1.msra.mxu0 0.0
      %737 = vmatprep.subr.mxu0 0.0
      %738 = vmatpush1.msra.mxu0 0.0
      %739 = vmatprep.subr.mxu0 0.0
      %740 = vmatpush1.msra.mxu0 0.0
      %741 = vmatprep.subr.mxu0 0.0
      %742 = vmatpush1.msra.mxu0 %v486
      %743 = vmatprep.subr.mxu0 0.0
      %744 = vmatpush2.msra.mxu0 0.0
      %745 = vmatprep.subr.mxu0 0.0
      %746 = vmatpush2.msra.mxu0 0.0
      %747 = vmatprep.subr.mxu0 0.0
      %748 = vmatpush2.msra.mxu0 0.0
      %749 = vmatprep.subr.mxu0 0.0
      %750 = vmatpush2.msra.mxu0 0.0
      %751 = vmatprep.subr.mxu0 0.0
      %752 = vmatpush2.msra.mxu0 0.0
      %753 = vmatprep.subr.mxu0 0.0
      %754 = vmatpush2.msra.mxu0 0.0
      %755 = vmatprep.subr.mxu0 0.0
      %756 = vmatpush2.msra.mxu0 0.0
      %757 = vmatprep.subr.mxu0 0.0
      %758 = vmatpush2.msra.mxu0 0.0
      %759 = vmatprep.subr.mxu0 0.0
      %760 = vmatpush2.msra.mxu0 0.0
      %761 = vmatprep.subr.mxu0 0.0
      %762 = vmatpush2.msra.mxu0 0.0
      %763 = vmatprep.subr.mxu0 0.0
      %764 = vmatpush2.msra.mxu0 0.0
      %765 = vmatprep.subr.mxu0 0.0
      %766 = vmatpush2.msra.mxu0 0.0
      %767 = vmatprep.subr.mxu0 0.0
      %768 = vmatpush2.msra.mxu0 0.0
      %769 = vmatprep.subr.mxu0 0.0
      %770 = vmatpush2.msra.mxu0 0.0
      %771 = vmatprep.subr.mxu0 0.0
      %772 = vmatpush2.msra.mxu0 0.0
      %773 = vmatprep.subr.mxu0 0.0
      %774 = vmatpush2.msra.mxu0 0.0
      %775 = vmatprep.mubr.f32.mxu0 0.0
      %776 = vmatmul.mubr.f32.gmra.mxu0 %v496
      %v777 = vpop.f32.mrf.mxu0
      %v778 = vadd.f32 %v492, %v777
      %v779 = vpop.f32.mrf.mxu0
      %780 = vmatprep.mubr.f32.mxu0 0.0
      %781 = vmatmul.mubr.f32.gmra.mxu0 %v499
      %v782 = vpop.f32.mrf.mxu0
      %v783 = vadd.f32 %v492, %v782
      %v784 = vpop.f32.mrf.mxu0
      %785 = vmatprep.mubr.f32.mxu0 0.0
      %786 = vmatmul.mubr.f32.gmra.mxu0 %v502
      %v787 = vpop.f32.mrf.mxu0
      %v788 = vadd.f32 %v492, %v787
      %v789 = vpop.f32.mrf.mxu0
      %790 = vmatprep.mubr.f32.mxu0 0.0
      %791 = vmatmul.mubr.f32.gmra.mxu0 %v505
      %v792 = vpop.f32.mrf.mxu0
      %v793 = vadd.f32 %v492, %v792
      %v794 = vpop.f32.mrf.mxu0
      %795 = vmatprep.mubr.f32.mxu0 0.0
      %796 = vmatmul.mubr.f32.gmra.mxu0 %v508
      %v797 = vpop.f32.mrf.mxu0
      %v798 = vadd.f32 %v492, %v797
      %v799 = vpop.f32.mrf.mxu0
      %800 = vmatprep.mubr.f32.mxu0 0.0
      %801 = vmatmul.mubr.f32.gmra.mxu0 %v511
      %v802 = vpop.f32.mrf.mxu0
      %v803 = vadd.f32 %v492, %v802
      %v804 = vpop.f32.mrf.mxu0
      %805 = vmatprep.mubr.f32.mxu0 0.0
      %806 = vmatmul.mubr.f32.gmra.mxu0 %v514
      %v807 = vpop.f32.mrf.mxu0
      %v808 = vadd.f32 %v492, %v807
      %v809 = vpop.f32.mrf.mxu0
      %810 = vmatprep.mubr.f32.mxu0 0.0
      %811 = vmatmul.mubr.f32.gmra.mxu0 %v517
      %v812 = vpop.f32.mrf.mxu0
      %v813 = vadd.f32 %v492, %v812
      %v814 = vpop.f32.mrf.mxu0
      %815 = vmatprep.mubr.f32.mxu0 0.0
      %816 = vmatmul.mubr.f32.gmra.mxu0 %v520
      %v817 = vpop.f32.mrf.mxu0
      %v818 = vadd.f32 %v492, %v817
      %v819 = vpop.f32.mrf.mxu0
      %820 = vmatprep.mubr.f32.mxu0 0.0
      %821 = vmatmul.mubr.f32.gmra.mxu0 %v523
      %v822 = vpop.f32.mrf.mxu0
      %v823 = vadd.f32 %v492, %v822
      %v824 = vpop.f32.mrf.mxu0
      %825 = vmatprep.mubr.f32.mxu0 0.0
      %826 = vmatmul.mubr.f32.gmra.mxu0 %v526
      %v827 = vpop.f32.mrf.mxu0
      %v828 = vadd.f32 %v492, %v827
      %v829 = vpop.f32.mrf.mxu0
      %830 = vmatprep.mubr.f32.mxu0 0.0
      %831 = vmatmul.mubr.f32.gmra.mxu0 %v529
      %v832 = vpop.f32.mrf.mxu0
      %v833 = vadd.f32 %v492, %v832
      %v834 = vpop.f32.mrf.mxu0
      %835 = vmatprep.mubr.f32.mxu0 0.0
      %836 = vmatmul.mubr.f32.gmra.mxu0 %v532
      %v837 = vpop.f32.mrf.mxu0
      %v838 = vadd.f32 %v492, %v837
      %v839 = vpop.f32.mrf.mxu0
      %840 = vmatprep.mubr.f32.mxu0 0.0
      %841 = vmatmul.mubr.f32.gmra.mxu0 %v535
      %v842 = vpop.f32.mrf.mxu0
      %v843 = vadd.f32 %v492, %v842
      %v844 = vpop.f32.mrf.mxu0
      %845 = vmatprep.mubr.f32.mxu0 0.0
      %846 = vmatmul.mubr.f32.gmra.mxu0 %v538
      %v847 = vpop.f32.mrf.mxu0
      %v848 = vadd.f32 %v492, %v847
      %v849 = vpop.f32.mrf.mxu0
      %850 = vmatprep.mubr.f32.mxu0 0.0
      %851 = vmatmul.mubr.f32.gmra.mxu0 %v541
      %v852 = vpop.f32.mrf.mxu0
      %v853 = vadd.f32 %v492, %v852
      %v854 = vpop.f32.mrf.mxu0
      %855 = vmatprep.mubr.f32.mxu0 0.0
      %856 = vmatmul.mubr.f32.gmra.mxu0 %v544
      %v857 = vpop.f32.mrf.mxu0
      %v858 = vadd.f32 %v492, %v857
      %v859 = vpop.f32.mrf.mxu0
      %860 = vmatprep.mubr.f32.mxu0 0.0
      %861 = vmatmul.mubr.f32.gmra.mxu0 %v547
      %v862 = vpop.f32.mrf.mxu0
      %v863 = vadd.f32 %v492, %v862
      %v864 = vpop.f32.mrf.mxu0
      %865 = vmatprep.mubr.f32.mxu0 0.0
      %866 = vmatmul.mubr.f32.gmra.mxu0 %v550
      %v867 = vpop.f32.mrf.mxu0
      %v868 = vadd.f32 %v492, %v867
      %v869 = vpop.f32.mrf.mxu0
      %870 = vmatprep.mubr.f32.mxu0 0.0
      %871 = vmatmul.mubr.f32.gmra.mxu0 %v553
      %v872 = vpop.f32.mrf.mxu0
      %v873 = vpop.f32.mrf.mxu0
      %874 = vmatprep.mubr.f32.mxu0 0.0
      %875 = vmatmul.mubr.f32.gmra.mxu0 %v556
      %v876 = vpop.f32.mrf.mxu0
      %v877 = vadd.f32 %v492, %v876
      %v878 = vpop.f32.mrf.mxu0
      %879 = vmatprep.mubr.f32.mxu0 0.0
      %880 = vmatmul.mubr.f32.gmra.mxu0 %v559
      %v881 = vpop.f32.mrf.mxu0
      %v882 = vpop.f32.mrf.mxu0
      %883 = vmatprep.mubr.f32.mxu0 0.0
      %884 = vmatmul.mubr.f32.gmra.mxu0 %v562
      %v885 = vpop.f32.mrf.mxu0
      %v886 = vadd.f32 %v492, %v885
      %v887 = vpop.f32.mrf.mxu0
      %888 = vmatprep.mubr.f32.mxu0 0.0
      %889 = vmatmul.mubr.f32.gmra.mxu0 %v565
      %v890 = vpop.f32.mrf.mxu0
      %v891 = vpop.f32.mrf.mxu0
      %892 = vmatprep.mubr.f32.mxu0 0.0
      %893 = vmatmul.mubr.f32.gmra.mxu0 %v568
      %v894 = vpop.f32.mrf.mxu0
      %v895 = vadd.f32 %v492, %v894
      %v896 = vpop.f32.mrf.mxu0
      %897 = vmatprep.mubr.f32.mxu0 0.0
      %898 = vmatmul.mubr.f32.gmra.mxu0 %v571
      %v899 = vpop.f32.mrf.mxu0
      %v900 = vpop.f32.mrf.mxu0
      %901 = vmatprep.mubr.f32.mxu0 0.0
      %902 = vmatmul.mubr.f32.gmra.mxu0 %v574
      %v903 = vpop.f32.mrf.mxu0
      %v904 = vadd.f32 %v492, %v903
      %v905 = vpop.f32.mrf.mxu0
      %906 = vmatprep.mubr.f32.mxu0 0.0
      %907 = vmatmul.mubr.f32.gmra.mxu0 %v577
      %v908 = vpop.f32.mrf.mxu0
      %v909 = vpop.f32.mrf.mxu0
      %910 = vmatprep.mubr.f32.mxu0 0.0
      %911 = vmatmul.mubr.f32.gmra.mxu0 %v580
      %v912 = vpop.f32.mrf.mxu0
      %v913 = vadd.f32 %v492, %v912
      %v914 = vpop.f32.mrf.mxu0
      %915 = vmatprep.mubr.f32.mxu0 0.0
      %916 = vmatmul.mubr.f32.gmra.mxu0 %v583
      %v917 = vpop.f32.mrf.mxu0
      %v918 = vpop.f32.mrf.mxu0
      %919 = vmatprep.mubr.f32.mxu0 0.0
      %920 = vmatmul.mubr.f32.gmra.mxu0 %v586
      %v921 = vpop.f32.mrf.mxu0
      %v922 = vadd.f32 %v492, %v921
      %v923 = vpop.f32.mrf.mxu0
      %924 = vmatprep.mubr.f32.mxu0 0.0
      %925 = vmatmul.mubr.f32.gmra.mxu0 %v589
      %v926 = vpop.f32.mrf.mxu0
      %v927 = vpop.f32.mrf.mxu0
      %928 = vmatprep.mubr.f32.mxu0 0.0
      %929 = vmatmul.mubr.f32.gmra.mxu0 %v592
      %v930 = vpop.f32.mrf.mxu0
      %v931 = vadd.f32 %v492, %v930
      %v932 = vpop.f32.mrf.mxu0
      %933 = vmatprep.mubr.f32.mxu0 0.0
      %934 = vmatmul.mubr.f32.gmra.mxu0 %v595
      %v935 = vpop.f32.mrf.mxu0
      %v936 = vpop.f32.mrf.mxu0
      %937 = vmatprep.mubr.f32.mxu0 0.0
      %938 = vmatmul.mubr.f32.gmra.mxu0 %v598
      %v939 = vpop.f32.mrf.mxu0
      %v940 = vadd.f32 %v492, %v939
      %v941 = vpop.f32.mrf.mxu0
      %942 = vmatprep.mubr.f32.mxu0 0.0
      %943 = vmatmul.mubr.f32.gmra.mxu0 %v601
      %v944 = vpop.f32.mrf.mxu0
      %v945 = vpop.f32.mrf.mxu0
      %946 = vmatprep.mubr.f32.mxu0 0.0
      %947 = vmatmul.mubr.f32.gmra.mxu0 %v604
      %v948 = vpop.f32.mrf.mxu0
      %v949 = vadd.f32 %v492, %v948
      %v950 = vpop.f32.mrf.mxu0
      %951 = vmatprep.mubr.f32.mxu0 0.0
      %952 = vmatmul.mubr.f32.gmra.mxu0 %v607
      %v953 = vpop.f32.mrf.mxu0
      %v954 = vadd.f32 %v492, %v953
      %v955 = vpop.f32.mrf.mxu0
      %956 = vmatprep.mubr.f32.mxu0 0.0
      %957 = vmatmul.mubr.f32.gmra.mxu0 %v610
      %v958 = vpop.f32.mrf.mxu0
      %v959 = vadd.f32 %v492, %v958
      %v960 = vpop.f32.mrf.mxu0
      %961 = vmatprep.mubr.f32.mxu0 0.0
      %962 = vmatmul.mubr.f32.gmra.mxu0 %v613
      %v963 = vpop.f32.mrf.mxu0
      %v964 = vadd.f32 %v492, %v963
      %v965 = vpop.f32.mrf.mxu0
      %966 = vmatprep.mubr.f32.mxu0 0.0
      %967 = vmatmul.mubr.f32.gmra.mxu0 %v616
      %v968 = vpop.f32.mrf.mxu0
      %v969 = vadd.f32 %v492, %v968
      %v970 = vpop.f32.mrf.mxu0
      %971 = vmatprep.mubr.f32.mxu0 0.0
      %972 = vmatmul.mubr.f32.gmra.mxu0 %v619
      %v973 = vpop.f32.mrf.mxu0
      %v974 = vadd.f32 %v492, %v973
      %v975 = vpop.f32.mrf.mxu0
      %976 = vmatprep.mubr.f32.mxu0 0.0
      %977 = vmatmul.mubr.f32.gmra.mxu0 %v622
      %v978 = vpop.f32.mrf.mxu0
      %v979 = vadd.f32 %v492, %v978
      %v980 = vpop.f32.mrf.mxu0
      %981 = vmatprep.mubr.f32.mxu0 0.0
      %982 = vmatmul.mubr.f32.gmra.mxu0 %v625
      %v983 = vpop.f32.mrf.mxu0
      %v984 = vadd.f32 %v492, %v983
      %v985 = vpop.f32.mrf.mxu0
      %986 = vmatprep.mubr.f32.mxu0 0.0
      %987 = vmatmul.mubr.f32.gmra.mxu0 %v628
      %v988 = vpop.f32.mrf.mxu0
      %v989 = vadd.f32 %v492, %v988
      %v990 = vpop.f32.mrf.mxu0
      %991 = vmatprep.mubr.f32.mxu0 0.0
      %992 = vmatmul.mubr.f32.gmra.mxu0 %v631
      %v993 = vpop.f32.mrf.mxu0
      %v994 = vadd.f32 %v492, %v993
      %v995 = vpop.f32.mrf.mxu0
      %996 = vmatprep.mubr.f32.mxu0 0.0
      %997 = vmatmul.mubr.f32.gmra.mxu0 %v634
      %v998 = vpop.f32.mrf.mxu0
      %v999 = vadd.f32 %v492, %v998
      %v1000 = vpop.f32.mrf.mxu0
      %1001 = vmatprep.mubr.f32.mxu0 0.0
      %1002 = vmatmul.mubr.f32.gmra.mxu0 %v637
      %v1003 = vpop.f32.mrf.mxu0
      %v1004 = vadd.f32 %v492, %v1003
      %v1005 = vpop.f32.mrf.mxu0
      %1006 = vmatprep.mubr.f32.mxu0 0.0
      %1007 = vmatmul.mubr.f32.gmra.mxu0 %v640
      %v1008 = vpop.f32.mrf.mxu0
      %v1009 = vadd.f32 %v492, %v1008
      %v1010 = vpop.f32.mrf.mxu0
      %1011 = vmatprep.mubr.f32.mxu0 0.0
      %1012 = vmatmul.mubr.f32.gmra.mxu0 %v643
      %v1013 = vpop.f32.mrf.mxu0
      %v1014 = vadd.f32 %v492, %v1013
      %v1015 = vpop.f32.mrf.mxu0
      %1016 = vmatprep.mubr.f32.mxu0 0.0
      %1017 = vmatmul.mubr.f32.gmra.mxu0 %v646
      %v1018 = vpop.f32.mrf.mxu0
      %v1019 = vadd.f32 %v492, %v1018
      %v1020 = vpop.f32.mrf.mxu0
      %1021 = vmatprep.mubr.f32.mxu0 0.0
      %1022 = vmatmul.mubr.f32.gmra.mxu0 %v649
      %v1023 = vpop.f32.mrf.mxu0
      %v1024 = vadd.f32 %v492, %v1023
      %v1025 = vpop.f32.mrf.mxu0
      %1026 = vmatprep.mubr.f32.mxu0 0.0
      %1027 = vmatmul.mubr.f32.gmra.mxu0 %v652
      %v1028 = vpop.f32.mrf.mxu0
      %v1029 = vpop.f32.mrf.mxu0
      %1030 = vmatprep.mubr.f32.mxu0 0.0
      %1031 = vmatmul.mubr.f32.gmra.mxu0 %v655
      %v1032 = vpop.f32.mrf.mxu0
      %v1033 = vpop.f32.mrf.mxu0
      %1034 = vmatprep.mubr.f32.mxu0 0.0
      %1035 = vmatmul.mubr.f32.gmra.mxu0 %v658
      %v1036 = vpop.f32.mrf.mxu0
      %v1037 = vadd.f32 %v492, %v1036
      %v1038 = vpop.f32.mrf.mxu0
      %1039 = vmatprep.mubr.f32.mxu0 0.0
      %1040 = vmatmul.mubr.f32.gmra.mxu0 %v661
      %v1041 = vpop.f32.mrf.mxu0
      %v1042 = vpop.f32.mrf.mxu0
      %1043 = vmatprep.mubr.f32.mxu0 0.0
      %1044 = vmatmul.mubr.f32.gmra.mxu0 %v664
      %v1045 = vpop.f32.mrf.mxu0
      %v1046 = vadd.f32 %v492, %v1045
      %v1047 = vpop.f32.mrf.mxu0
      %1048 = vmatprep.mubr.f32.mxu0 0.0
      %1049 = vmatmul.mubr.f32.gmra.mxu0 %v667
      %v1050 = vpop.f32.mrf.mxu0
      %v1051 = vpop.f32.mrf.mxu0
      %1052 = vmatprep.mubr.f32.mxu0 0.0
      %1053 = vmatmul.mubr.f32.gmra.mxu0 %v670
      %v1054 = vpop.f32.mrf.mxu0
      %v1055 = vadd.f32 %v492, %v1054
      %v1056 = vpop.f32.mrf.mxu0
      %1057 = vmatprep.mubr.f32.mxu0 0.0
      %1058 = vmatmul.mubr.f32.gmra.mxu0 %v673
      %v1059 = vpop.f32.mrf.mxu0
      %v1060 = vpop.f32.mrf.mxu0
      %1061 = vmatprep.mubr.f32.mxu0 0.0
      %1062 = vmatmul.mubr.f32.gmra.mxu0 %v676
      %v1063 = vpop.f32.mrf.mxu0
      %v1064 = vadd.f32 %v492, %v1063
      %v1065 = vpop.f32.mrf.mxu0
      %1066 = vmatprep.mubr.f32.mxu0 0.0
      %1067 = vmatmul.mubr.f32.gmra.mxu0 %v679
      %v1068 = vpop.f32.mrf.mxu0
      %v1069 = vpop.f32.mrf.mxu0
      %1070 = vmatprep.mubr.f32.mxu0 0.0
      %1071 = vmatmul.mubr.f32.gmra.mxu0 %v682
      %v1072 = vpop.f32.mrf.mxu0
      %v1073 = vadd.f32 %v492, %v1072
      %v1074 = vpop.f32.mrf.mxu0
      %1075 = vmatprep.mubr.f32.mxu0 0.0
      %1076 = vmatmul.mubr.f32.gmra.mxu0 %v685
      %v1077 = vpop.f32.mrf.mxu0
      %v1078 = vpop.f32.mrf.mxu0
      %1079 = vmatprep.mubr.f32.mxu0 0.0
      %1080 = vmatmul.mubr.f32.gmra.mxu0 %v688
      %v1081 = vpop.f32.mrf.mxu0
      %v1082 = vadd.f32 %v492, %v1081
      %v1083 = vpop.f32.mrf.mxu0
      %1084 = vmatprep.mubr.f32.mxu0 0.0
      %1085 = vmatmul.mubr.f32.gmra.mxu0 %v691
      %v1086 = vpop.f32.mrf.mxu0
      %v1087 = vpop.f32.mrf.mxu0
      %1088 = vmatprep.mubr.f32.mxu0 0.0
      %1089 = vmatmul.mubr.f32.gmra.mxu0 %v694
      %v1090 = vpop.f32.mrf.mxu0
      %v1091 = vadd.f32 %v492, %v1090
      %v1092 = vpop.f32.mrf.mxu0
      %1093 = vmatprep.mubr.f32.mxu0 0.0
      %1094 = vmatmul.mubr.f32.gmra.mxu0 %v697
      %v1095 = vpop.f32.mrf.mxu0
      %v1096 = vpop.f32.mrf.mxu0
      %1097 = vmatprep.mubr.f32.mxu0 0.0
      %1098 = vmatmul.mubr.f32.gmra.mxu0 %v700
      %v1099 = vpop.f32.mrf.mxu0
      %v1100 = vadd.f32 %v492, %v1099
      %v1101 = vpop.f32.mrf.mxu0
      %1102 = vmatprep.mubr.f32.mxu0 0.0
      %1103 = vmatmul.mubr.f32.gmra.mxu0 %v703
      %v1104 = vpop.f32.mrf.mxu0
      %v1105 = vpop.f32.mrf.mxu0
      %1106 = vmatprep.mubr.f32.mxu0 0.0
      %1107 = vmatmul.mubr.f32.gmra.mxu0 %v706
      %v1108 = vpop.f32.mrf.mxu0
      %v1109 = vpop.f32.mrf.mxu0
      %1110 = vmatprep.mubr.f32.mxu0 0.0
      %1111 = vmatmul.mubr.f32.gmra.mxu0 %v709
      %v1112 = vpop.f32.mrf.mxu0
      %v1113 = vpop.f32.mrf.mxu0
      %1114 = vdwg.mxu0
      %v1115 = vxor.u32 %v778, 2147483648
      %v1116 = vxor.u32 %v783, 2147483648
      %v1117 = vxor.u32 %v788, 2147483648
      %v1118 = vxor.u32 %v793, 2147483648
      %v1119 = vxor.u32 %v798, 2147483648
      %v1120 = vxor.u32 %v803, 2147483648
      %v1121 = vxor.u32 %v808, 2147483648
      %v1122 = vxor.u32 %v813, 2147483648
      %v1123 = vxor.u32 %v818, 2147483648
      %v1124 = vxor.u32 %v823, 2147483648
      %v1125 = vxor.u32 %v828, 2147483648
      %v1126 = vxor.u32 %v833, 2147483648
      %v1127 = vxor.u32 %v838, 2147483648
      %v1128 = vxor.u32 %v843, 2147483648
      %v1129 = vxor.u32 %v848, 2147483648
      %v1130 = vxor.u32 %v853, 2147483648
      %v1131 = vxor.u32 %v858, 2147483648
      %v1132 = vxor.u32 %v863, 2147483648
      %v1133 = vxor.u32 %v868, 2147483648
      %v1134 = vxor.u32 %v877, 2147483648
      %v1135 = vxor.u32 %v886, 2147483648
      %v1136 = vxor.u32 %v895, 2147483648
      %v1137 = vxor.u32 %v904, 2147483648
      %v1138 = vxor.u32 %v913, 2147483648
      %v1139 = vxor.u32 %v922, 2147483648
      %v1140 = vxor.u32 %v931, 2147483648
      %v1141 = vxor.u32 %v940, 2147483648
      %v1142 = vxor.u32 %v949, 2147483648
      %v1143 = vxor.u32 %v954, 2147483648
      %v1144 = vxor.u32 %v959, 2147483648
      %v1145 = vxor.u32 %v964, 2147483648
      %v1146 = vxor.u32 %v969, 2147483648
      %v1147 = vxor.u32 %v974, 2147483648
      %v1148 = vxor.u32 %v979, 2147483648
      %v1149 = vxor.u32 %v984, 2147483648
      %v1150 = vxor.u32 %v989, 2147483648
      %v1151 = vxor.u32 %v994, 2147483648
      %v1152 = vxor.u32 %v999, 2147483648
      %v1153 = vxor.u32 %v1004, 2147483648
      %v1154 = vxor.u32 %v1009, 2147483648
      %v1155 = vxor.u32 %v1014, 2147483648
      %v1156 = vxor.u32 %v1019, 2147483648
      %v1157 = vxor.u32 %v1024, 2147483648
      %v1158 = vxor.u32 %v1037, 2147483648
      %v1159 = vxor.u32 %v1046, 2147483648
      %v1160 = vxor.u32 %v1055, 2147483648
      %v1161 = vxor.u32 %v1064, 2147483648
      %v1162 = vxor.u32 %v1073, 2147483648
      %v1163 = vxor.u32 %v1082, 2147483648
      %v1164 = vxor.u32 %v1091, 2147483648
      %v1165 = vxor.u32 %v1100, 2147483648
      %v1166 = vmul.f32 %v1115, 1.442695
      %v1167 = vpow.pop %v1166
      %v1168 = vmul.f32 %v1116, 1.442695
      %v1169 = vpow.pop %v1168
      %v1170 = vmul.f32 %v1117, 1.442695
      %v1171 = vpow.pop %v1170
      %v1172 = vmul.f32 %v1118, 1.442695
      %v1173 = vpow.pop %v1172
      %v1174 = vmul.f32 %v1119, 1.442695
      %v1175 = vpow.pop %v1174
      %v1176 = vmul.f32 %v1120, 1.442695
      %v1177 = vpow.pop %v1176
      %v1178 = vmul.f32 %v1121, 1.442695
      %v1179 = vpow.pop %v1178
      %v1180 = vmul.f32 %v1122, 1.442695
      %v1181 = vpow.pop %v1180
      %v1182 = vmul.f32 %v1123, 1.442695
      %v1183 = vpow.pop %v1182
      %v1184 = vmul.f32 %v1124, 1.442695
      %v1185 = vpow.pop %v1184
      %v1186 = vmul.f32 %v1125, 1.442695
      %v1187 = vpow.pop %v1186
      %v1188 = vmul.f32 %v1126, 1.442695
      %v1189 = vpow.pop %v1188
      %v1190 = vmul.f32 %v1127, 1.442695
      %v1191 = vpow.pop %v1190
      %v1192 = vmul.f32 %v1128, 1.442695
      %v1193 = vpow.pop %v1192
      %v1194 = vmul.f32 %v1129, 1.442695
      %v1195 = vpow.pop %v1194
      %v1196 = vmul.f32 %v1130, 1.442695
      %v1197 = vpow.pop %v1196
      %v1198 = vmul.f32 %v1131, 1.442695
      %v1199 = vpow.pop %v1198
      %v1200 = vmul.f32 %v1132, 1.442695
      %v1201 = vpow.pop %v1200
      %v1202 = vmul.f32 %v1133, 1.442695
      %v1203 = vpow.pop %v1202
      %v1204 = vmul.f32 %v1134, 1.442695
      %v1205 = vpow.pop %v1204
      %v1206 = vmul.f32 %v1135, 1.442695
      %v1207 = vpow.pop %v1206
      %v1208 = vmul.f32 %v1136, 1.442695
      %v1209 = vpow.pop %v1208
      %v1210 = vmul.f32 %v1137, 1.442695
      %v1211 = vpow.pop %v1210
      %v1212 = vmul.f32 %v1138, 1.442695
      %v1213 = vpow.pop %v1212
      %v1214 = vmul.f32 %v1139, 1.442695
      %v1215 = vpow.pop %v1214
      %v1216 = vmul.f32 %v1140, 1.442695
      %v1217 = vpow.pop %v1216
      %v1218 = vmul.f32 %v1141, 1.442695
      %v1219 = vpow.pop %v1218
      %v1220 = vmul.f32 %v1142, 1.442695
      %v1221 = vpow.pop %v1220
      %v1222 = vmul.f32 %v1143, 1.442695
      %v1223 = vpow.pop %v1222
      %v1224 = vmul.f32 %v1144, 1.442695
      %v1225 = vpow.pop %v1224
      %v1226 = vmul.f32 %v1145, 1.442695
      %v1227 = vpow.pop %v1226
      %v1228 = vmul.f32 %v1146, 1.442695
      %v1229 = vpow.pop %v1228
      %v1230 = vmul.f32 %v1147, 1.442695
      %v1231 = vpow.pop %v1230
      %v1232 = vmul.f32 %v1148, 1.442695
      %v1233 = vpow.pop %v1232
      %v1234 = vmul.f32 %v1149, 1.442695
      %v1235 = vpow.pop %v1234
      %v1236 = vmul.f32 %v1150, 1.442695
      %v1237 = vpow.pop %v1236
      %v1238 = vmul.f32 %v1151, 1.442695
      %v1239 = vpow.pop %v1238
      %v1240 = vmul.f32 %v1152, 1.442695
      %v1241 = vpow.pop %v1240
      %v1242 = vmul.f32 %v1153, 1.442695
      %v1243 = vpow.pop %v1242
      %v1244 = vmul.f32 %v1154, 1.442695
      %v1245 = vpow.pop %v1244
      %v1246 = vmul.f32 %v1155, 1.442695
      %v1247 = vpow.pop %v1246
      %v1248 = vmul.f32 %v1156, 1.442695
      %v1249 = vpow.pop %v1248
      %v1250 = vmul.f32 %v1157, 1.442695
      %v1251 = vpow.pop %v1250
      %v1252 = vmul.f32 %v1158, 1.442695
      %v1253 = vpow.pop %v1252
      %v1254 = vmul.f32 %v1159, 1.442695
      %v1255 = vpow.pop %v1254
      %v1256 = vmul.f32 %v1160, 1.442695
      %v1257 = vpow.pop %v1256
      %v1258 = vmul.f32 %v1161, 1.442695
      %v1259 = vpow.pop %v1258
      %v1260 = vmul.f32 %v1162, 1.442695
      %v1261 = vpow.pop %v1260
      %v1262 = vmul.f32 %v1163, 1.442695
      %v1263 = vpow.pop %v1262
      %v1264 = vmul.f32 %v1164, 1.442695
      %v1265 = vpow.pop %v1264
      %v1266 = vmul.f32 %v1165, 1.442695
      %v1267 = vpow.pop %v1266
      %v1268 = vadd.f32 %v1167, 1.0
      %v1269 = vadd.f32 %v1169, 1.0
      %v1270 = vadd.f32 %v1171, 1.0
      %v1271 = vadd.f32 %v1173, 1.0
      %v1272 = vadd.f32 %v1175, 1.0
      %v1273 = vadd.f32 %v1177, 1.0
      %v1274 = vadd.f32 %v1179, 1.0
      %v1275 = vadd.f32 %v1181, 1.0
      %v1276 = vadd.f32 %v1183, 1.0
      %v1277 = vadd.f32 %v1185, 1.0
      %v1278 = vadd.f32 %v1187, 1.0
      %v1279 = vadd.f32 %v1189, 1.0
      %v1280 = vadd.f32 %v1191, 1.0
      %v1281 = vadd.f32 %v1193, 1.0
      %v1282 = vadd.f32 %v1195, 1.0
      %v1283 = vadd.f32 %v1197, 1.0
      %v1284 = vadd.f32 %v1199, 1.0
      %v1285 = vadd.f32 %v1201, 1.0
      %v1286 = vadd.f32 %v1203, 1.0
      %v1287 = vadd.f32 %v1205, 1.0
      %v1288 = vadd.f32 %v1207, 1.0
      %v1289 = vadd.f32 %v1209, 1.0
      %v1290 = vadd.f32 %v1211, 1.0
      %v1291 = vadd.f32 %v1213, 1.0
      %v1292 = vadd.f32 %v1215, 1.0
      %v1293 = vadd.f32 %v1217, 1.0
      %v1294 = vadd.f32 %v1219, 1.0
      %v1295 = vadd.f32 %v1221, 1.0
      %v1296 = vadd.f32 %v1223, 1.0
      %v1297 = vadd.f32 %v1225, 1.0
      %v1298 = vadd.f32 %v1227, 1.0
      %v1299 = vadd.f32 %v1229, 1.0
      %v1300 = vadd.f32 %v1231, 1.0
      %v1301 = vadd.f32 %v1233, 1.0
      %v1302 = vadd.f32 %v1235, 1.0
      %v1303 = vadd.f32 %v1237, 1.0
      %v1304 = vadd.f32 %v1239, 1.0
      %v1305 = vadd.f32 %v1241, 1.0
      %v1306 = vadd.f32 %v1243, 1.0
      %v1307 = vadd.f32 %v1245, 1.0
      %v1308 = vadd.f32 %v1247, 1.0
      %v1309 = vadd.f32 %v1249, 1.0
      %v1310 = vadd.f32 %v1251, 1.0
      %v1311 = vadd.f32 %v1253, 1.0
      %v1312 = vadd.f32 %v1255, 1.0
      %v1313 = vadd.f32 %v1257, 1.0
      %v1314 = vadd.f32 %v1259, 1.0
      %v1315 = vadd.f32 %v1261, 1.0
      %v1316 = vadd.f32 %v1263, 1.0
      %v1317 = vadd.f32 %v1265, 1.0
      %v1318 = vadd.f32 %v1267, 1.0
      %v1319 = vrcp.pop %v1268
      %v1320 = vmul.f32 1.0, %v1319
      %v1321 = vrcp.pop %v1269
      %v1322 = vmul.f32 1.0, %v1321
      %v1323 = vrcp.pop %v1270
      %v1324 = vmul.f32 1.0, %v1323
      %v1325 = vrcp.pop %v1271
      %v1326 = vmul.f32 1.0, %v1325
      %v1327 = vrcp.pop %v1272
      %v1328 = vmul.f32 1.0, %v1327
      %v1329 = vrcp.pop %v1273
      %v1330 = vmul.f32 1.0, %v1329
      %v1331 = vrcp.pop %v1274
      %v1332 = vmul.f32 1.0, %v1331
      %v1333 = vrcp.pop %v1275
      %v1334 = vmul.f32 1.0, %v1333
      %v1335 = vrcp.pop %v1276
      %v1336 = vmul.f32 1.0, %v1335
      %v1337 = vrcp.pop %v1277
      %v1338 = vmul.f32 1.0, %v1337
      %v1339 = vrcp.pop %v1278
      %v1340 = vmul.f32 1.0, %v1339
      %v1341 = vrcp.pop %v1279
      %v1342 = vmul.f32 1.0, %v1341
      %v1343 = vrcp.pop %v1280
      %v1344 = vmul.f32 1.0, %v1343
      %v1345 = vrcp.pop %v1281
      %v1346 = vmul.f32 1.0, %v1345
      %v1347 = vrcp.pop %v1282
      %v1348 = vmul.f32 1.0, %v1347
      %v1349 = vrcp.pop %v1283
      %v1350 = vmul.f32 1.0, %v1349
      %v1351 = vrcp.pop %v1284
      %v1352 = vmul.f32 1.0, %v1351
      %v1353 = vrcp.pop %v1285
      %v1354 = vmul.f32 1.0, %v1353
      %v1355 = vrcp.pop %v1286
      %v1356 = vmul.f32 1.0, %v1355
      %v1357 = vrcp.pop %v1287
      %v1358 = vmul.f32 1.0, %v1357
      %v1359 = vrcp.pop %v1288
      %v1360 = vmul.f32 1.0, %v1359
      %v1361 = vrcp.pop %v1289
      %v1362 = vmul.f32 1.0, %v1361
      %v1363 = vrcp.pop %v1290
      %v1364 = vmul.f32 1.0, %v1363
      %v1365 = vrcp.pop %v1291
      %v1366 = vmul.f32 1.0, %v1365
      %v1367 = vrcp.pop %v1292
      %v1368 = vmul.f32 1.0, %v1367
      %v1369 = vrcp.pop %v1293
      %v1370 = vmul.f32 1.0, %v1369
      %v1371 = vrcp.pop %v1294
      %v1372 = vmul.f32 1.0, %v1371
      %v1373 = vrcp.pop %v1295
      %v1374 = vmul.f32 1.0, %v1373
      %v1375 = vrcp.pop %v1296
      %v1376 = vmul.f32 1.0, %v1375
      %v1377 = vrcp.pop %v1297
      %v1378 = vmul.f32 1.0, %v1377
      %v1379 = vrcp.pop %v1298
      %v1380 = vmul.f32 1.0, %v1379
      %v1381 = vrcp.pop %v1299
      %v1382 = vmul.f32 1.0, %v1381
      %v1383 = vrcp.pop %v1300
      %v1384 = vmul.f32 1.0, %v1383
      %v1385 = vrcp.pop %v1301
      %v1386 = vmul.f32 1.0, %v1385
      %v1387 = vrcp.pop %v1302
      %v1388 = vmul.f32 1.0, %v1387
      %v1389 = vrcp.pop %v1303
      %v1390 = vmul.f32 1.0, %v1389
      %v1391 = vrcp.pop %v1304
      %v1392 = vmul.f32 1.0, %v1391
      %v1393 = vrcp.pop %v1305
      %v1394 = vmul.f32 1.0, %v1393
      %v1395 = vrcp.pop %v1306
      %v1396 = vmul.f32 1.0, %v1395
      %v1397 = vrcp.pop %v1307
      %v1398 = vmul.f32 1.0, %v1397
      %v1399 = vrcp.pop %v1308
      %v1400 = vmul.f32 1.0, %v1399
      %v1401 = vrcp.pop %v1309
      %v1402 = vmul.f32 1.0, %v1401
      %v1403 = vrcp.pop %v1310
      %v1404 = vmul.f32 1.0, %v1403
      %v1405 = vrcp.pop %v1311
      %v1406 = vmul.f32 1.0, %v1405
      %v1407 = vrcp.pop %v1312
      %v1408 = vmul.f32 1.0, %v1407
      %v1409 = vrcp.pop %v1313
      %v1410 = vmul.f32 1.0, %v1409
      %v1411 = vrcp.pop %v1314
      %v1412 = vmul.f32 1.0, %v1411
      %v1413 = vrcp.pop %v1315
      %v1414 = vmul.f32 1.0, %v1413
      %v1415 = vrcp.pop %v1316
      %v1416 = vmul.f32 1.0, %v1415
      %v1417 = vrcp.pop %v1317
      %v1418 = vmul.f32 1.0, %v1417
      %v1419 = vrcp.pop %v1318
      %v1420 = vmul.f32 1.0, %v1419
      %v1421 = vmul.f32 %v778, %v1320
      %v1422 = vmul.f32 %v783, %v1322
      %v1423 = vmul.f32 %v788, %v1324
      %v1424 = vmul.f32 %v793, %v1326
      %v1425 = vmul.f32 %v798, %v1328
      %v1426 = vmul.f32 %v803, %v1330
      %v1427 = vmul.f32 %v808, %v1332
      %v1428 = vmul.f32 %v813, %v1334
      %v1429 = vmul.f32 %v818, %v1336
      %v1430 = vmul.f32 %v823, %v1338
      %v1431 = vmul.f32 %v828, %v1340
      %v1432 = vmul.f32 %v833, %v1342
      %v1433 = vmul.f32 %v838, %v1344
      %v1434 = vmul.f32 %v843, %v1346
      %v1435 = vmul.f32 %v848, %v1348
      %v1436 = vmul.f32 %v853, %v1350
      %v1437 = vmul.f32 %v858, %v1352
      %v1438 = vmul.f32 %v863, %v1354
      %v1439 = vmul.f32 %v868, %v1356
      %v1440 = vmul.f32 %v877, %v1358
      %v1441 = vmul.f32 %v886, %v1360
      %v1442 = vmul.f32 %v895, %v1362
      %v1443 = vmul.f32 %v904, %v1364
      %v1444 = vmul.f32 %v913, %v1366
      %v1445 = vmul.f32 %v922, %v1368
      %v1446 = vmul.f32 %v931, %v1370
      %v1447 = vmul.f32 %v940, %v1372
      %v1448 = vmul.f32 %v949, %v1374
      %v1449 = vmul.f32 %v954, %v1376
      %v1450 = vmul.f32 %v959, %v1378
      %v1451 = vmul.f32 %v964, %v1380
      %v1452 = vmul.f32 %v969, %v1382
      %v1453 = vmul.f32 %v974, %v1384
      %v1454 = vmul.f32 %v979, %v1386
      %v1455 = vmul.f32 %v984, %v1388
      %v1456 = vmul.f32 %v989, %v1390
      %v1457 = vmul.f32 %v994, %v1392
      %v1458 = vmul.f32 %v999, %v1394
      %v1459 = vmul.f32 %v1004, %v1396
      %v1460 = vmul.f32 %v1009, %v1398
      %v1461 = vmul.f32 %v1014, %v1400
      %v1462 = vmul.f32 %v1019, %v1402
      %v1463 = vmul.f32 %v1024, %v1404
      %v1464 = vmul.f32 %v1037, %v1406
      %v1465 = vmul.f32 %v1046, %v1408
      %v1466 = vmul.f32 %v1055, %v1410
      %v1467 = vmul.f32 %v1064, %v1412
      %v1468 = vmul.f32 %v1073, %v1414
      %v1469 = vmul.f32 %v1082, %v1416
      %v1470 = vmul.f32 %v1091, %v1418
      %v1471 = vmul.f32 %v1100, %v1420
      %v1472 = vld [vmem:[%s1] sm:$0xff]
      %v1473 = vld [vmem:[%s1 + $0x8] sm:$0xff]
      %v1474 = vld [vmem:[%s1 + $0x10] sm:$0xff]
      %v1475 = vld [vmem:[%s1 + $0x18] sm:$0xff]
      %v1476 = vld [vmem:[%s1 + $0x20] sm:$0xff]
      %v1477 = vld [vmem:[%s1 + $0x28] sm:$0xff]
      %v1478 = vld [vmem:[%s1 + $0x30] sm:$0xff]
      %v1479 = vld [vmem:[%s1 + $0x38] sm:$0xff]
      %v1480 = vld [vmem:[%s1 + $0x40] sm:$0xff]
      %v1481 = vld [vmem:[%s1 + $0x48] sm:$0xff]
      %v1482 = vld [vmem:[%s1 + $0x50] sm:$0xff]
      %v1483 = vld [vmem:[%s1 + $0x58] sm:$0xff]
      %v1484 = vld [vmem:[%s1 + $0x60] sm:$0xff]
      %v1485 = vld [vmem:[%s1 + $0x68] sm:$0xff]
      %v1486 = vld [vmem:[%s1 + $0x70] sm:$0xff]
      %v1487 = vld [vmem:[%s1 + $0x78] sm:$0xff]
      %v1488 = vld [vmem:[%s1 + $0x80] sm:$0xff]
      %v1489 = vld [vmem:[%s1 + $0x88] sm:$0xff]
      %v1490 = vld [vmem:[%s1 + $0x90] sm:$0xff]
      %v1491 = vld [vmem:[%s1 + $0xa0] sm:$0xff]
      %v1492 = vld [vmem:[%s1 + $0xb0] sm:$0xff]
      %v1493 = vld [vmem:[%s1 + $0xc0] sm:$0xff]
      %v1494 = vld [vmem:[%s1 + $0xd0] sm:$0xff]
      %v1495 = vld [vmem:[%s1 + $0xe0] sm:$0xff]
      %v1496 = vld [vmem:[%s1 + $0xf0] sm:$0xff]
      %v1497 = vld [vmem:[%s1 + $0x100] sm:$0xff]
      %v1498 = vld [vmem:[%s1 + $0x110] sm:$0xff]
      %v1499 = vld [vmem:[%s1 + $0x120] sm:$0xff]
      %v1500 = vld [vmem:[%s1 + $0x128] sm:$0xff]
      %v1501 = vld [vmem:[%s1 + $0x130] sm:$0xff]
      %v1502 = vld [vmem:[%s1 + $0x138] sm:$0xff]
      %v1503 = vld [vmem:[%s1 + $0x140] sm:$0xff]
      %v1504 = vld [vmem:[%s1 + $0x148] sm:$0xff]
      %v1505 = vld [vmem:[%s1 + $0x150] sm:$0xff]
      %v1506 = vld [vmem:[%s1 + $0x158] sm:$0xff]
      %v1507 = vld [vmem:[%s1 + $0x160] sm:$0xff]
      %v1508 = vld [vmem:[%s1 + $0x168] sm:$0xff]
      %v1509 = vld [vmem:[%s1 + $0x170] sm:$0xff]
      %v1510 = vld [vmem:[%s1 + $0x178] sm:$0xff]
      %v1511 = vld [vmem:[%s1 + $0x180] sm:$0xff]
      %v1512 = vld [vmem:[%s1 + $0x188] sm:$0xff]
      %v1513 = vld [vmem:[%s1 + $0x190] sm:$0xff]
      %v1514 = vld [vmem:[%s1 + $0x198] sm:$0xff]
      %v1515 = vld [vmem:[%s1 + $0x1b0] sm:$0xff]
      %v1516 = vld [vmem:[%s1 + $0x1c0] sm:$0xff]
      %v1517 = vld [vmem:[%s1 + $0x1d0] sm:$0xff]
      %v1518 = vld [vmem:[%s1 + $0x1e0] sm:$0xff]
      %v1519 = vld [vmem:[%s1 + $0x1f0] sm:$0xff]
      %v1520 = vld [vmem:[%s1 + $0x200] sm:$0xff]
      %v1521 = vld [vmem:[%s1 + $0x210] sm:$0xff]
      %v1522 = vld [vmem:[%s1 + $0x220] sm:$0xff]
      %1524 = vset.pattern.permute.xlu0 0
      %1525 = vperm.xlu0 %1524, %v1472
      %v1526 = vpop.permute.xlu0 %1525
      %1529 = vset.pattern.permute.xlu0 0
      %1530 = vperm.xlu0 %1529, %v1473
      %v1531 = vpop.permute.xlu0 %1530
      %1534 = vset.pattern.permute.xlu0 0
      %1535 = vperm.xlu0 %1534, %v1474
      %v1536 = vpop.permute.xlu0 %1535
      %1539 = vset.pattern.permute.xlu0 0
      %1540 = vperm.xlu0 %1539, %v1475
      %v1541 = vpop.permute.xlu0 %1540
      %1544 = vset.pattern.permute.xlu0 0
      %1545 = vperm.xlu0 %1544, %v1476
      %v1546 = vpop.permute.xlu0 %1545
      %1549 = vset.pattern.permute.xlu0 0
      %1550 = vperm.xlu0 %1549, %v1477
      %v1551 = vpop.permute.xlu0 %1550
      %1554 = vset.pattern.permute.xlu0 0
      %1555 = vperm.xlu0 %1554, %v1478
      %v1556 = vpop.permute.xlu0 %1555
      %1559 = vset.pattern.permute.xlu0 0
      %1560 = vperm.xlu0 %1559, %v1479
      %v1561 = vpop.permute.xlu0 %1560
      %1564 = vset.pattern.permute.xlu0 0
      %1565 = vperm.xlu0 %1564, %v1480
      %v1566 = vpop.permute.xlu0 %1565
      %1569 = vset.pattern.permute.xlu0 0
      %1570 = vperm.xlu0 %1569, %v1481
      %v1571 = vpop.permute.xlu0 %1570
      %1574 = vset.pattern.permute.xlu0 0
      %1575 = vperm.xlu0 %1574, %v1482
      %v1576 = vpop.permute.xlu0 %1575
      %1579 = vset.pattern.permute.xlu0 0
      %1580 = vperm.xlu0 %1579, %v1483
      %v1581 = vpop.permute.xlu0 %1580
      %1584 = vset.pattern.permute.xlu0 0
      %1585 = vperm.xlu0 %1584, %v1484
      %v1586 = vpop.permute.xlu0 %1585
      %1589 = vset.pattern.permute.xlu0 0
      %1590 = vperm.xlu0 %1589, %v1485
      %v1591 = vpop.permute.xlu0 %1590
      %1594 = vset.pattern.permute.xlu0 0
      %1595 = vperm.xlu0 %1594, %v1486
      %v1596 = vpop.permute.xlu0 %1595
      %1599 = vset.pattern.permute.xlu0 0
      %1600 = vperm.xlu0 %1599, %v1487
      %v1601 = vpop.permute.xlu0 %1600
      %1604 = vset.pattern.permute.xlu0 0
      %1605 = vperm.xlu0 %1604, %v1488
      %v1606 = vpop.permute.xlu0 %1605
      %1609 = vset.pattern.permute.xlu0 0
      %1610 = vperm.xlu0 %1609, %v1489
      %v1611 = vpop.permute.xlu0 %1610
      %1614 = vset.pattern.permute.xlu0 0
      %1615 = vperm.xlu0 %1614, %v1490
      %v1616 = vpop.permute.xlu0 %1615
      %1619 = vset.pattern.permute.xlu0 0
      %1620 = vperm.xlu0 %1619, %v1491
      %v1621 = vpop.permute.xlu0 %1620
      %1624 = vset.pattern.permute.xlu0 0
      %1625 = vperm.xlu0 %1624, %v1492
      %v1626 = vpop.permute.xlu0 %1625
      %1629 = vset.pattern.permute.xlu0 0
      %1630 = vperm.xlu0 %1629, %v1493
      %v1631 = vpop.permute.xlu0 %1630
      %1634 = vset.pattern.permute.xlu0 0
      %1635 = vperm.xlu0 %1634, %v1494
      %v1636 = vpop.permute.xlu0 %1635
      %1639 = vset.pattern.permute.xlu0 0
      %1640 = vperm.xlu0 %1639, %v1495
      %v1641 = vpop.permute.xlu0 %1640
      %1644 = vset.pattern.permute.xlu0 0
      %1645 = vperm.xlu0 %1644, %v1496
      %v1646 = vpop.permute.xlu0 %1645
      %1649 = vset.pattern.permute.xlu0 0
      %1650 = vperm.xlu0 %1649, %v1497
      %v1651 = vpop.permute.xlu0 %1650
      %1654 = vset.pattern.permute.xlu0 0
      %1655 = vperm.xlu0 %1654, %v1498
      %v1656 = vpop.permute.xlu0 %1655
      %1659 = vset.pattern.permute.xlu0 0
      %1660 = vperm.xlu0 %1659, %v1499
      %v1661 = vpop.permute.xlu0 %1660
      %1664 = vset.pattern.permute.xlu0 0
      %1665 = vperm.xlu0 %1664, %v1500
      %v1666 = vpop.permute.xlu0 %1665
      %1669 = vset.pattern.permute.xlu0 0
      %1670 = vperm.xlu0 %1669, %v1501
      %v1671 = vpop.permute.xlu0 %1670
      %1674 = vset.pattern.permute.xlu0 0
      %1675 = vperm.xlu0 %1674, %v1502
      %v1676 = vpop.permute.xlu0 %1675
      %1679 = vset.pattern.permute.xlu0 0
      %1680 = vperm.xlu0 %1679, %v1503
      %v1681 = vpop.permute.xlu0 %1680
      %1684 = vset.pattern.permute.xlu0 0
      %1685 = vperm.xlu0 %1684, %v1504
      %v1686 = vpop.permute.xlu0 %1685
      %1689 = vset.pattern.permute.xlu0 0
      %1690 = vperm.xlu0 %1689, %v1505
      %v1691 = vpop.permute.xlu0 %1690
      %1694 = vset.pattern.permute.xlu0 0
      %1695 = vperm.xlu0 %1694, %v1506
      %v1696 = vpop.permute.xlu0 %1695
      %1699 = vset.pattern.permute.xlu0 0
      %1700 = vperm.xlu0 %1699, %v1507
      %v1701 = vpop.permute.xlu0 %1700
      %1704 = vset.pattern.permute.xlu0 0
      %1705 = vperm.xlu0 %1704, %v1508
      %v1706 = vpop.permute.xlu0 %1705
      %1709 = vset.pattern.permute.xlu0 0
      %1710 = vperm.xlu0 %1709, %v1509
      %v1711 = vpop.permute.xlu0 %1710
      %1714 = vset.pattern.permute.xlu0 0
      %1715 = vperm.xlu0 %1714, %v1510
      %v1716 = vpop.permute.xlu0 %1715
      %1719 = vset.pattern.permute.xlu0 0
      %1720 = vperm.xlu0 %1719, %v1511
      %v1721 = vpop.permute.xlu0 %1720
      %1724 = vset.pattern.permute.xlu0 0
      %1725 = vperm.xlu0 %1724, %v1512
      %v1726 = vpop.permute.xlu0 %1725
      %1729 = vset.pattern.permute.xlu0 0
      %1730 = vperm.xlu0 %1729, %v1513
      %v1731 = vpop.permute.xlu0 %1730
      %1734 = vset.pattern.permute.xlu0 0
      %1735 = vperm.xlu0 %1734, %v1514
      %v1736 = vpop.permute.xlu0 %1735
      %1739 = vset.pattern.permute.xlu0 0
      %1740 = vperm.xlu0 %1739, %v1515
      %v1741 = vpop.permute.xlu0 %1740
      %1744 = vset.pattern.permute.xlu0 0
      %1745 = vperm.xlu0 %1744, %v1516
      %v1746 = vpop.permute.xlu0 %1745
      %1749 = vset.pattern.permute.xlu0 0
      %1750 = vperm.xlu0 %1749, %v1517
      %v1751 = vpop.permute.xlu0 %1750
      %1754 = vset.pattern.permute.xlu0 0
      %1755 = vperm.xlu0 %1754, %v1518
      %v1756 = vpop.permute.xlu0 %1755
      %1759 = vset.pattern.permute.xlu0 0
      %1760 = vperm.xlu0 %1759, %v1519
      %v1761 = vpop.permute.xlu0 %1760
      %1764 = vset.pattern.permute.xlu0 0
      %1765 = vperm.xlu0 %1764, %v1520
      %v1766 = vpop.permute.xlu0 %1765
      %1769 = vset.pattern.permute.xlu0 0
      %1770 = vperm.xlu0 %1769, %v1521
      %v1771 = vpop.permute.xlu0 %1770
      %1774 = vset.pattern.permute.xlu0 0
      %1775 = vperm.xlu0 %1774, %v1522
      %v1776 = vpop.permute.xlu0 %1775
      %v1778 = vmul.f32 %v1421, %v1526
      %v1779 = vmul.f32 %v1422, %v1531
      %v1780 = vmul.f32 %v1423, %v1536
      %v1781 = vmul.f32 %v1424, %v1541
      %v1782 = vmul.f32 %v1425, %v1546
      %v1783 = vmul.f32 %v1426, %v1551
      %v1784 = vmul.f32 %v1427, %v1556
      %v1785 = vmul.f32 %v1428, %v1561
      %v1786 = vmul.f32 %v1429, %v1566
      %v1787 = vmul.f32 %v1430, %v1571
      %v1788 = vmul.f32 %v1431, %v1576
      %v1789 = vmul.f32 %v1432, %v1581
      %v1790 = vmul.f32 %v1433, %v1586
      %v1791 = vmul.f32 %v1434, %v1591
      %v1792 = vmul.f32 %v1435, %v1596
      %v1793 = vmul.f32 %v1436, %v1601
      %v1794 = vmul.f32 %v1437, %v1606
      %v1795 = vmul.f32 %v1438, %v1611
      %v1796 = vmul.f32 %v1439, %v1616
      %v1797 = vmul.f32 %v1440, %v1621
      %v1798 = vmul.f32 %v1441, %v1626
      %v1799 = vmul.f32 %v1442, %v1631
      %v1800 = vmul.f32 %v1443, %v1636
      %v1801 = vmul.f32 %v1444, %v1641
      %v1802 = vmul.f32 %v1445, %v1646
      %v1803 = vmul.f32 %v1446, %v1651
      %v1804 = vmul.f32 %v1447, %v1656
      %v1805 = vmul.f32 %v1448, %v1661
      %v1806 = vmul.f32 %v1449, %v1666
      %v1807 = vmul.f32 %v1450, %v1671
      %v1808 = vmul.f32 %v1451, %v1676
      %v1809 = vmul.f32 %v1452, %v1681
      %v1810 = vmul.f32 %v1453, %v1686
      %v1811 = vmul.f32 %v1454, %v1691
      %v1812 = vmul.f32 %v1455, %v1696
      %v1813 = vmul.f32 %v1456, %v1701
      %v1814 = vmul.f32 %v1457, %v1706
      %v1815 = vmul.f32 %v1458, %v1711
      %v1816 = vmul.f32 %v1459, %v1716
      %v1817 = vmul.f32 %v1460, %v1721
      %v1818 = vmul.f32 %v1461, %v1726
      %v1819 = vmul.f32 %v1462, %v1731
      %v1820 = vmul.f32 %v1463, %v1736
      %v1821 = vmul.f32 %v1464, %v1741
      %v1822 = vmul.f32 %v1465, %v1746
      %v1823 = vmul.f32 %v1466, %v1751
      %v1824 = vmul.f32 %v1467, %v1756
      %v1825 = vmul.f32 %v1468, %v1761
      %v1826 = vmul.f32 %v1469, %v1766
      %v1827 = vmul.f32 %v1470, %v1771
      %v1828 = vmul.f32 %v1471, %v1776
      %v1829 = vld [vmem:[%s4] sm:$0x1]
      %v1830 = vlaneseq
      %v1831 = vshrl.u32 %v1830, 7
      %v1832 = vsub.s32 0, %v1831
      %v1833 = vrot.slane %v1829, %v1832
      %v1834 = vmul.f32 %v1778, %v1833
      %v1835 = vmul.f32 %v1780, %v1833
      %v1836 = vmul.f32 %v1782, %v1833
      %v1837 = vmul.f32 %v1784, %v1833
      %v1838 = vmul.f32 %v1786, %v1833
      %v1839 = vmul.f32 %v1788, %v1833
      %v1840 = vmul.f32 %v1790, %v1833
      %v1841 = vmul.f32 %v1792, %v1833
      %v1842 = vadd.f32 %v1834, 0.0
      %v1843 = vadd.f32 %v1835, 0.0
      %v1844 = vadd.f32 %v1836, 0.0
      %v1845 = vadd.f32 %v1837, 0.0
      %v1846 = vadd.f32 %v1838, 0.0
      %v1847 = vadd.f32 %v1839, 0.0
      %v1848 = vadd.f32 %v1840, 0.0
      %v1849 = vadd.f32 %v1841, 0.0
      %v1850 = vld [vmem:[%s4 + $0x1] sm:$0x1]
      %v1851 = vlaneseq
      %v1852 = vshrl.u32 %v1851, 7
      %v1853 = vsub.s32 0, %v1852
      %v1854 = vrot.slane %v1850, %v1853
      %v1855 = vmul.f32 %v1796, %v1854
      %v1856 = vmul.f32 %v1797, %v1854
      %v1857 = vmul.f32 %v1798, %v1854
      %v1858 = vmul.f32 %v1799, %v1854
      %v1859 = vmul.f32 %v1800, %v1854
      %v1860 = vmul.f32 %v1801, %v1854
      %v1861 = vmul.f32 %v1802, %v1854
      %v1862 = vmul.f32 %v1803, %v1854
      %v1863 = vadd.f32 %v1842, %v1855
      %v1864 = vadd.f32 %v1843, %v1856
      %v1865 = vadd.f32 %v1844, %v1857
      %v1866 = vadd.f32 %v1845, %v1858
      %v1867 = vadd.f32 %v1846, %v1859
      %v1868 = vadd.f32 %v1847, %v1860
      %v1869 = vadd.f32 %v1848, %v1861
      %v1870 = vadd.f32 %v1849, %v1862
      %v1871 = vld [vmem:[%s4 + $0x2] sm:$0x1]
      %v1872 = vlaneseq
      %v1873 = vshrl.u32 %v1872, 7
      %v1874 = vsub.s32 0, %v1873
      %v1875 = vrot.slane %v1871, %v1874
      %v1876 = vmul.f32 %v1778, %v1875
      %v1877 = vmul.f32 %v1779, %v1875
      %v1878 = vmul.f32 %v1780, %v1875
      %v1879 = vmul.f32 %v1781, %v1875
      %v1880 = vmul.f32 %v1782, %v1875
      %v1881 = vmul.f32 %v1783, %v1875
      %v1882 = vmul.f32 %v1784, %v1875
      %v1883 = vmul.f32 %v1785, %v1875
      %v1884 = vmul.f32 %v1786, %v1875
      %v1885 = vmul.f32 %v1787, %v1875
      %v1886 = vmul.f32 %v1788, %v1875
      %v1887 = vmul.f32 %v1789, %v1875
      %v1888 = vmul.f32 %v1790, %v1875
      %v1889 = vmul.f32 %v1791, %v1875
      %v1890 = vmul.f32 %v1792, %v1875
      %v1891 = vmul.f32 %v1793, %v1875
      %vm1908 = vcmask 1046528
      %v1909 = vrot.slane %v1876, 1
      %v1910 = vrot.slane %v1877, 1
      %v1911 = vsel %vm1908, %v1909, %v1910
      %v1912 = vrot.slane %v1878, 1
      %v1913 = vrot.slane %v1879, 1
      %v1914 = vsel %vm1908, %v1912, %v1913
      %v1915 = vrot.slane %v1880, 1
      %v1916 = vrot.slane %v1881, 1
      %v1917 = vsel %vm1908, %v1915, %v1916
      %v1918 = vrot.slane %v1882, 1
      %v1919 = vrot.slane %v1883, 1
      %v1920 = vsel %vm1908, %v1918, %v1919
      %v1921 = vrot.slane %v1884, 1
      %v1922 = vrot.slane %v1885, 1
      %v1923 = vsel %vm1908, %v1921, %v1922
      %v1924 = vrot.slane %v1886, 1
      %v1925 = vrot.slane %v1887, 1
      %v1926 = vsel %vm1908, %v1924, %v1925
      %v1927 = vrot.slane %v1888, 1
      %v1928 = vrot.slane %v1889, 1
      %v1929 = vsel %vm1908, %v1927, %v1928
      %v1930 = vrot.slane %v1890, 1
      %v1931 = vrot.slane %v1891, 1
      %v1932 = vsel %vm1908, %v1930, %v1931
      %v1941 = vadd.f32 %v1863, %v1911
      %v1942 = vadd.f32 %v1864, %v1914
      %v1943 = vadd.f32 %v1865, %v1917
      %v1944 = vadd.f32 %v1866, %v1920
      %v1945 = vadd.f32 %v1867, %v1923
      %v1946 = vadd.f32 %v1868, %v1926
      %v1947 = vadd.f32 %v1869, %v1929
      %v1948 = vadd.f32 %v1870, %v1932
      %v1949 = vld [vmem:[%s4 + $0x3] sm:$0x1]
      %v1950 = vlaneseq
      %v1951 = vshrl.u32 %v1950, 7
      %v1952 = vsub.s32 0, %v1951
      %v1953 = vrot.slane %v1949, %v1952
      %v1954 = vmul.f32 %v1805, %v1953
      %v1955 = vmul.f32 %v1807, %v1953
      %v1956 = vmul.f32 %v1809, %v1953
      %v1957 = vmul.f32 %v1811, %v1953
      %v1958 = vmul.f32 %v1813, %v1953
      %v1959 = vmul.f32 %v1815, %v1953
      %v1960 = vmul.f32 %v1817, %v1953
      %v1961 = vmul.f32 %v1819, %v1953
      %v1962 = vadd.f32 %v1941, %v1954
      %v1963 = vadd.f32 %v1942, %v1955
      %v1964 = vadd.f32 %v1943, %v1956
      %v1965 = vadd.f32 %v1944, %v1957
      %v1966 = vadd.f32 %v1945, %v1958
      %v1967 = vadd.f32 %v1946, %v1959
      %v1968 = vadd.f32 %v1947, %v1960
      %v1969 = vadd.f32 %v1948, %v1961
      %v1970 = vld [vmem:[%s4 + $0x4] sm:$0x1]
      %v1971 = vlaneseq
      %v1972 = vshrl.u32 %v1971, 7
      %v1973 = vsub.s32 0, %v1972
      %v1974 = vrot.slane %v1970, %v1973
      %v1975 = vmul.f32 %v1821, %v1974
      %v1976 = vmul.f32 %v1822, %v1974
      %v1977 = vmul.f32 %v1823, %v1974
      %v1978 = vmul.f32 %v1824, %v1974
      %v1979 = vmul.f32 %v1825, %v1974
      %v1980 = vmul.f32 %v1826, %v1974
      %v1981 = vmul.f32 %v1827, %v1974
      %v1982 = vmul.f32 %v1828, %v1974
      %v1983 = vadd.f32 %v1962, %v1975
      %v1984 = vadd.f32 %v1963, %v1976
      %v1985 = vadd.f32 %v1964, %v1977
      %v1986 = vadd.f32 %v1965, %v1978
      %v1987 = vadd.f32 %v1966, %v1979
      %v1988 = vadd.f32 %v1967, %v1980
      %v1989 = vadd.f32 %v1968, %v1981
      %v1990 = vadd.f32 %v1969, %v1982
      %v1991 = vld [vmem:[%s4 + $0x5] sm:$0x1]
      %v1992 = vlaneseq
      %v1993 = vshrl.u32 %v1992, 7
      %v1994 = vsub.s32 0, %v1993
      %v1995 = vrot.slane %v1991, %v1994
      %v1996 = vmul.f32 %v1805, %v1995
      %v1997 = vmul.f32 %v1806, %v1995
      %v1998 = vmul.f32 %v1807, %v1995
      %v1999 = vmul.f32 %v1808, %v1995
      %v2000 = vmul.f32 %v1809, %v1995
      %v2001 = vmul.f32 %v1810, %v1995
      %v2002 = vmul.f32 %v1811, %v1995
      %v2003 = vmul.f32 %v1812, %v1995
      %v2004 = vmul.f32 %v1813, %v1995
      %v2005 = vmul.f32 %v1814, %v1995
      %v2006 = vmul.f32 %v1815, %v1995
      %v2007 = vmul.f32 %v1816, %v1995
      %v2008 = vmul.f32 %v1817, %v1995
      %v2009 = vmul.f32 %v1818, %v1995
      %v2010 = vmul.f32 %v1819, %v1995
      %v2011 = vmul.f32 %v1820, %v1995
      %v2028 = vrot.slane %v1996, 1
      %v2029 = vrot.slane %v1997, 1
      %v2030 = vsel %vm1908, %v2028, %v2029
      %v2031 = vrot.slane %v1998, 1
      %v2032 = vrot.slane %v1999, 1
      %v2033 = vsel %vm1908, %v2031, %v2032
      %v2034 = vrot.slane %v2000, 1
      %v2035 = vrot.slane %v2001, 1
      %v2036 = vsel %vm1908, %v2034, %v2035
      %v2037 = vrot.slane %v2002, 1
      %v2038 = vrot.slane %v2003, 1
      %v2039 = vsel %vm1908, %v2037, %v2038
      %v2040 = vrot.slane %v2004, 1
      %v2041 = vrot.slane %v2005, 1
      %v2042 = vsel %vm1908, %v2040, %v2041
      %v2043 = vrot.slane %v2006, 1
      %v2044 = vrot.slane %v2007, 1
      %v2045 = vsel %vm1908, %v2043, %v2044
      %v2046 = vrot.slane %v2008, 1
      %v2047 = vrot.slane %v2009, 1
      %v2048 = vsel %vm1908, %v2046, %v2047
      %v2049 = vrot.slane %v2010, 1
      %v2050 = vrot.slane %v2011, 1
      %v2051 = vsel %vm1908, %v2049, %v2050
      %v2060 = vadd.f32 %v1983, %v2030
      %v2061 = vadd.f32 %v1984, %v2033
      %v2062 = vadd.f32 %v1985, %v2036
      %v2063 = vadd.f32 %v1986, %v2039
      %v2064 = vadd.f32 %v1987, %v2042
      %v2065 = vadd.f32 %v1988, %v2045
      %v2066 = vadd.f32 %v1989, %v2048
      %v2067 = vadd.f32 %v1990, %v2051
      %v2068 = vld [vmem:[%s4 + $0x6] sm:$0x1]
      %v2069 = vlaneseq
      %v2070 = vshrl.u32 %v2069, 7
      %v2071 = vsub.s32 0, %v2070
      %v2072 = vrot.slane %v2068, %v2071
      %v2073 = vmul.f32 %v1780, %v2072
      %v2074 = vmul.f32 %v1782, %v2072
      %v2075 = vmul.f32 %v1784, %v2072
      %v2076 = vmul.f32 %v1786, %v2072
      %v2077 = vmul.f32 %v1788, %v2072
      %v2078 = vmul.f32 %v1790, %v2072
      %v2079 = vmul.f32 %v1792, %v2072
      %v2080 = vmul.f32 %v1794, %v2072
      %v2081 = vadd.f32 %v2060, %v2073
      %v2082 = vadd.f32 %v2061, %v2074
      %v2083 = vadd.f32 %v2062, %v2075
      %v2084 = vadd.f32 %v2063, %v2076
      %v2085 = vadd.f32 %v2064, %v2077
      %v2086 = vadd.f32 %v2065, %v2078
      %v2087 = vadd.f32 %v2066, %v2079
      %v2088 = vadd.f32 %v2067, %v2080
      %v2089 = vld [vmem:[%s4 + $0x7] sm:$0x1]
      %v2090 = vlaneseq
      %v2091 = vshrl.u32 %v2090, 7
      %v2092 = vsub.s32 0, %v2091
      %v2093 = vrot.slane %v2089, %v2092
      %v2094 = vmul.f32 %v1797, %v2093
      %v2095 = vmul.f32 %v1798, %v2093
      %v2096 = vmul.f32 %v1799, %v2093
      %v2097 = vmul.f32 %v1800, %v2093
      %v2098 = vmul.f32 %v1801, %v2093
      %v2099 = vmul.f32 %v1802, %v2093
      %v2100 = vmul.f32 %v1803, %v2093
      %v2101 = vmul.f32 %v1804, %v2093
      %v2102 = vadd.f32 %v2081, %v2094
      %v2103 = vadd.f32 %v2082, %v2095
      %v2104 = vadd.f32 %v2083, %v2096
      %v2105 = vadd.f32 %v2084, %v2097
      %v2106 = vadd.f32 %v2085, %v2098
      %v2107 = vadd.f32 %v2086, %v2099
      %v2108 = vadd.f32 %v2087, %v2100
      %v2109 = vadd.f32 %v2088, %v2101
      %v2110 = vld [vmem:[%s4 + $0x8] sm:$0x1]
      %v2111 = vlaneseq
      %v2112 = vshrl.u32 %v2111, 7
      %v2113 = vsub.s32 0, %v2112
      %v2114 = vrot.slane %v2110, %v2113
      %v2115 = vmul.f32 %v1780, %v2114
      %v2116 = vmul.f32 %v1781, %v2114
      %v2117 = vmul.f32 %v1782, %v2114
      %v2118 = vmul.f32 %v1783, %v2114
      %v2119 = vmul.f32 %v1784, %v2114
      %v2120 = vmul.f32 %v1785, %v2114
      %v2121 = vmul.f32 %v1786, %v2114
      %v2122 = vmul.f32 %v1787, %v2114
      %v2123 = vmul.f32 %v1788, %v2114
      %v2124 = vmul.f32 %v1789, %v2114
      %v2125 = vmul.f32 %v1790, %v2114
      %v2126 = vmul.f32 %v1791, %v2114
      %v2127 = vmul.f32 %v1792, %v2114
      %v2128 = vmul.f32 %v1793, %v2114
      %v2129 = vmul.f32 %v1794, %v2114
      %v2130 = vmul.f32 %v1795, %v2114
      %v2147 = vrot.slane %v2115, 1
      %v2148 = vrot.slane %v2116, 1
      %v2149 = vsel %vm1908, %v2147, %v2148
      %v2150 = vrot.slane %v2117, 1
      %v2151 = vrot.slane %v2118, 1
      %v2152 = vsel %vm1908, %v2150, %v2151
      %v2153 = vrot.slane %v2119, 1
      %v2154 = vrot.slane %v2120, 1
      %v2155 = vsel %vm1908, %v2153, %v2154
      %v2156 = vrot.slane %v2121, 1
      %v2157 = vrot.slane %v2122, 1
      %v2158 = vsel %vm1908, %v2156, %v2157
      %v2159 = vrot.slane %v2123, 1
      %v2160 = vrot.slane %v2124, 1
      %v2161 = vsel %vm1908, %v2159, %v2160
      %v2162 = vrot.slane %v2125, 1
      %v2163 = vrot.slane %v2126, 1
      %v2164 = vsel %vm1908, %v2162, %v2163
      %v2165 = vrot.slane %v2127, 1
      %v2166 = vrot.slane %v2128, 1
      %v2167 = vsel %vm1908, %v2165, %v2166
      %v2168 = vrot.slane %v2129, 1
      %v2169 = vrot.slane %v2130, 1
      %v2170 = vsel %vm1908, %v2168, %v2169
      %v2179 = vadd.f32 %v2102, %v2149
      %v2180 = vadd.f32 %v2103, %v2152
      %v2181 = vadd.f32 %v2104, %v2155
      %v2182 = vadd.f32 %v2105, %v2158
      %v2183 = vadd.f32 %v2106, %v2161
      %v2184 = vadd.f32 %v2107, %v2164
      %v2185 = vadd.f32 %v2108, %v2167
      %v2186 = vadd.f32 %v2109, %v2170
      %v2187 = vld [vmem:[%s5] sm:$0x1]
      %v2189 = vlaneseq
      %v2190 = vshrl.u32 %v2189, 7
      %v2191 = vsub.s32 0, %v2190
      %v2192 = vrot.slane %v2187, %v2191
      %v2194 = vadd.f32 %v2179, %v2192
      %v2195 = vadd.f32 %v2180, %v2192
      %v2196 = vadd.f32 %v2181, %v2192
      %v2197 = vadd.f32 %v2182, %v2192
      %v2198 = vadd.f32 %v2183, %v2192
      %v2199 = vadd.f32 %v2184, %v2192
      %v2200 = vadd.f32 %v2185, %v2192
      %v2201 = vadd.f32 %v2186, %v2192
      %v2202 = vxor.u32 %v2194, 2147483648
      %v2203 = vxor.u32 %v2195, 2147483648
      %v2204 = vxor.u32 %v2196, 2147483648
      %v2205 = vxor.u32 %v2197, 2147483648
      %v2206 = vxor.u32 %v2198, 2147483648
      %v2207 = vxor.u32 %v2199, 2147483648
      %v2208 = vxor.u32 %v2200, 2147483648
      %v2209 = vxor.u32 %v2201, 2147483648
      %v2210 = vmul.f32 %v2202, 1.442695
      %v2211 = vpow.pop %v2210
      %v2212 = vmul.f32 %v2203, 1.442695
      %v2213 = vpow.pop %v2212
      %v2214 = vmul.f32 %v2204, 1.442695
      %v2215 = vpow.pop %v2214
      %v2216 = vmul.f32 %v2205, 1.442695
      %v2217 = vpow.pop %v2216
      %v2218 = vmul.f32 %v2206, 1.442695
      %v2219 = vpow.pop %v2218
      %v2220 = vmul.f32 %v2207, 1.442695
      %v2221 = vpow.pop %v2220
      %v2222 = vmul.f32 %v2208, 1.442695
      %v2223 = vpow.pop %v2222
      %v2224 = vmul.f32 %v2209, 1.442695
      %v2225 = vpow.pop %v2224
      %v2226 = vadd.f32 %v2211, 1.0
      %v2227 = vadd.f32 %v2213, 1.0
      %v2228 = vadd.f32 %v2215, 1.0
      %v2229 = vadd.f32 %v2217, 1.0
      %v2230 = vadd.f32 %v2219, 1.0
      %v2231 = vadd.f32 %v2221, 1.0
      %v2232 = vadd.f32 %v2223, 1.0
      %v2233 = vadd.f32 %v2225, 1.0
      %v2234 = vrcp.pop %v2226
      %v2235 = vmul.f32 1.0, %v2234
      %v2236 = vrcp.pop %v2227
      %v2237 = vmul.f32 1.0, %v2236
      %v2238 = vrcp.pop %v2228
      %v2239 = vmul.f32 1.0, %v2238
      %v2240 = vrcp.pop %v2229
      %v2241 = vmul.f32 1.0, %v2240
      %v2242 = vrcp.pop %v2230
      %v2243 = vmul.f32 1.0, %v2242
      %v2244 = vrcp.pop %v2231
      %v2245 = vmul.f32 1.0, %v2244
      %v2246 = vrcp.pop %v2232
      %v2247 = vmul.f32 1.0, %v2246
      %v2248 = vrcp.pop %v2233
      %v2249 = vmul.f32 1.0, %v2248
      %v2250 = vmul.f32 %v2194, %v2235
      %v2251 = vmul.f32 %v2195, %v2237
      %v2252 = vmul.f32 %v2196, %v2239
      %v2253 = vmul.f32 %v2197, %v2241
      %v2254 = vmul.f32 %v2198, %v2243
      %v2255 = vmul.f32 %v2199, %v2245
      %v2256 = vmul.f32 %v2200, %v2247
      %v2257 = vmul.f32 %v2201, %v2249
      %vm2258 = vcmask 130048
      %v2259 = vsel %vm2258, %v2250, 0.0
      %v2260 = vsel %vm2258, %v2251, 0.0
      %v2261 = vadd.f32 %v2259, %v2260
      %v2262 = vsel %vm2258, %v2252, 0.0
      %v2263 = vadd.f32 %v2261, %v2262
      %v2264 = vsel %vm2258, %v2253, 0.0
      %v2265 = vadd.f32 %v2263, %v2264
      %v2266 = vsel %vm2258, %v2254, 0.0
      %v2267 = vadd.f32 %v2265, %v2266
      %v2268 = vsel %vm2258, %v2255, 0.0
      %v2269 = vadd.f32 %v2267, %v2268
      %v2270 = vsel %vm2258, %v2256, 0.0
      %v2271 = vadd.f32 %v2269, %v2270
      %v2272 = vsel %vm2258, %v2257, 0.0
      %v2273 = vadd.f32 %v2271, %v2272
      %v2274 = vrot.slane %v2273, 4
      %v2275 = vadd.f32 %v2273, %v2274
      %v2276 = vrot.slane %v2275, 2
      %v2277 = vadd.f32 %v2275, %v2276
      %v2278 = vrot.slane %v2277, 1
      %v2279 = vadd.f32 %v2277, %v2278
      %v2280 = vrcp.pop 64.0
      %v2281 = vmul.f32 %v2279, %v2280
      %v2282 = vld [vmem:[%s6] sm:$0xff]
      %v2283 = vld [vmem:[%s6 + $0x8] sm:$0xff]
      %v2284 = vld [vmem:[%s7] sm:$0x1]
      %v2286 = vsel %vm2258, %v2281, 0
      %2288 = vmatprep.subr.mxu0 0.0
      %2289 = vmatpush1.msra.mxu0 0.0
      %2290 = vmatprep.subr.mxu0 0.0
      %2291 = vmatpush1.msra.mxu0 0.0
      %2292 = vmatprep.subr.mxu0 0.0
      %2293 = vmatpush1.msra.mxu0 0.0
      %2294 = vmatprep.subr.mxu0 0.0
      %2295 = vmatpush1.msra.mxu0 0.0
      %2296 = vmatprep.subr.mxu0 0.0
      %2297 = vmatpush1.msra.mxu0 0.0
      %2298 = vmatprep.subr.mxu0 0.0
      %2299 = vmatpush1.msra.mxu0 0.0
      %2300 = vmatprep.subr.mxu0 0.0
      %2301 = vmatpush1.msra.mxu0 0.0
      %2302 = vmatprep.subr.mxu0 0.0
      %2303 = vmatpush1.msra.mxu0 0.0
      %2304 = vmatprep.subr.mxu0 0.0
      %2305 = vmatpush1.msra.mxu0 0.0
      %2306 = vmatprep.subr.mxu0 0.0
      %2307 = vmatpush1.msra.mxu0 0.0
      %2308 = vmatprep.subr.mxu0 0.0
      %2309 = vmatpush1.msra.mxu0 0.0
      %2310 = vmatprep.subr.mxu0 0.0
      %2311 = vmatpush1.msra.mxu0 0.0
      %2312 = vmatprep.subr.mxu0 0.0
      %2313 = vmatpush1.msra.mxu0 0.0
      %2314 = vmatprep.subr.mxu0 0.0
      %2315 = vmatpush1.msra.mxu0 0.0
      %2316 = vmatprep.subr.mxu0 0.0
      %2317 = vmatpush1.msra.mxu0 %v2283
      %2318 = vmatprep.subr.mxu0 0.0
      %2319 = vmatpush1.msra.mxu0 %v2282
      %2320 = vmatprep.subr.mxu0 0.0
      %2321 = vmatpush2.msra.mxu0 0.0
      %2322 = vmatprep.subr.mxu0 0.0
      %2323 = vmatpush2.msra.mxu0 0.0
      %2324 = vmatprep.subr.mxu0 0.0
      %2325 = vmatpush2.msra.mxu0 0.0
      %2326 = vmatprep.subr.mxu0 0.0
      %2327 = vmatpush2.msra.mxu0 0.0
      %2328 = vmatprep.subr.mxu0 0.0
      %2329 = vmatpush2.msra.mxu0 0.0
      %2330 = vmatprep.subr.mxu0 0.0
      %2331 = vmatpush2.msra.mxu0 0.0
      %2332 = vmatprep.subr.mxu0 0.0
      %2333 = vmatpush2.msra.mxu0 0.0
      %2334 = vmatprep.subr.mxu0 0.0
      %2335 = vmatpush2.msra.mxu0 0.0
      %2336 = vmatprep.subr.mxu0 0.0
      %2337 = vmatpush2.msra.mxu0 0.0
      %2338 = vmatprep.subr.mxu0 0.0
      %2339 = vmatpush2.msra.mxu0 0.0
      %2340 = vmatprep.subr.mxu0 0.0
      %2341 = vmatpush2.msra.mxu0 0.0
      %2342 = vmatprep.subr.mxu0 0.0
      %2343 = vmatpush2.msra.mxu0 0.0
      %2344 = vmatprep.subr.mxu0 0.0
      %2345 = vmatpush2.msra.mxu0 0.0
      %2346 = vmatprep.subr.mxu0 0.0
      %2347 = vmatpush2.msra.mxu0 0.0
      %2348 = vmatprep.subr.mxu0 0.0
      %2349 = vmatpush2.msra.mxu0 0.0
      %2350 = vmatprep.subr.mxu0 0.0
      %2351 = vmatpush2.msra.mxu0 0.0
      %2352 = vmatprep.mubr.f32.mxu0 0.0
      %2353 = vmatmul.mubr.f32.gmra.mxu0 %v2286
      %v2354 = vpop.f32.mrf.mxu0
      %v2355 = vadd.f32 %v2284, %v2354
      %v2356 = vpop.f32.mrf.mxu0
      %2357 = vdwg.mxu0
      %v2358 = vxor.u32 %v2355, 2147483648
      %v2359 = vmul.f32 %v2358, 1.442695
      %v2360 = vpow.pop %v2359
      %v2361 = vadd.f32 %v2360, 1.0
      %v2362 = vrcp.pop %v2361
      %v2363 = vmul.f32 1.0, %v2362
      %v2364 = vmul.f32 %v2355, %v2363
      %v2365 = vld [vmem:[%s8] sm:$0x3]
      %v2366 = vld [vmem:[%s9] sm:$0x1]
      %vm2367 = vcmask 15360
      %v2369 = vsel %vm2367, %v2364, 0
      %vm2371 = vcmask 1041408
      %v2373 = vsel %vm2371, %v2365, 0
      %2375 = vmatprep.subr.mxu0 0.0
      %2376 = vmatpush1.msra.mxu0 0.0
      %2377 = vmatprep.subr.mxu0 0.0
      %2378 = vmatpush1.msra.mxu0 0.0
      %2379 = vmatprep.subr.mxu0 0.0
      %2380 = vmatpush1.msra.mxu0 0.0
      %2381 = vmatprep.subr.mxu0 0.0
      %2382 = vmatpush1.msra.mxu0 0.0
      %2383 = vmatprep.subr.mxu0 0.0
      %2384 = vmatpush1.msra.mxu0 0.0
      %2385 = vmatprep.subr.mxu0 0.0
      %2386 = vmatpush1.msra.mxu0 0.0
      %2387 = vmatprep.subr.mxu0 0.0
      %2388 = vmatpush1.msra.mxu0 0.0
      %2389 = vmatprep.subr.mxu0 0.0
      %2390 = vmatpush1.msra.mxu0 0.0
      %2391 = vmatprep.subr.mxu0 0.0
      %2392 = vmatpush1.msra.mxu0 0.0
      %2393 = vmatprep.subr.mxu0 0.0
      %2394 = vmatpush1.msra.mxu0 0.0
      %2395 = vmatprep.subr.mxu0 0.0
      %2396 = vmatpush1.msra.mxu0 0.0
      %2397 = vmatprep.subr.mxu0 0.0
      %2398 = vmatpush1.msra.mxu0 0.0
      %2399 = vmatprep.subr.mxu0 0.0
      %2400 = vmatpush1.msra.mxu0 0.0
      %2401 = vmatprep.subr.mxu0 0.0
      %2402 = vmatpush1.msra.mxu0 0.0
      %2403 = vmatprep.subr.mxu0 0.0
      %2404 = vmatpush1.msra.mxu0 0.0
      %2405 = vmatprep.subr.mxu0 0.0
      %2406 = vmatpush1.msra.mxu0 %v2373
      %2407 = vmatprep.subr.mxu0 0.0
      %2408 = vmatpush2.msra.mxu0 0.0
      %2409 = vmatprep.subr.mxu0 0.0
      %2410 = vmatpush2.msra.mxu0 0.0
      %2411 = vmatprep.subr.mxu0 0.0
      %2412 = vmatpush2.msra.mxu0 0.0
      %2413 = vmatprep.subr.mxu0 0.0
      %2414 = vmatpush2.msra.mxu0 0.0
      %2415 = vmatprep.subr.mxu0 0.0
      %2416 = vmatpush2.msra.mxu0 0.0
      %2417 = vmatprep.subr.mxu0 0.0
      %2418 = vmatpush2.msra.mxu0 0.0
      %2419 = vmatprep.subr.mxu0 0.0
      %2420 = vmatpush2.msra.mxu0 0.0
      %2421 = vmatprep.subr.mxu0 0.0
      %2422 = vmatpush2.msra.mxu0 0.0
      %2423 = vmatprep.subr.mxu0 0.0
      %2424 = vmatpush2.msra.mxu0 0.0
      %2425 = vmatprep.subr.mxu0 0.0
      %2426 = vmatpush2.msra.mxu0 0.0
      %2427 = vmatprep.subr.mxu0 0.0
      %2428 = vmatpush2.msra.mxu0 0.0
      %2429 = vmatprep.subr.mxu0 0.0
      %2430 = vmatpush2.msra.mxu0 0.0
      %2431 = vmatprep.subr.mxu0 0.0
      %2432 = vmatpush2.msra.mxu0 0.0
      %2433 = vmatprep.subr.mxu0 0.0
      %2434 = vmatpush2.msra.mxu0 0.0
      %2435 = vmatprep.subr.mxu0 0.0
      %2436 = vmatpush2.msra.mxu0 0.0
      %2437 = vmatprep.subr.mxu0 0.0
      %2438 = vmatpush2.msra.mxu0 0.0
      %2439 = vmatprep.mubr.f32.mxu0 0.0
      %2440 = vmatmul.mubr.f32.gmra.mxu0 %v2369
      %v2441 = vpop.f32.mrf.mxu0
      %v2442 = vadd.f32 %v2366, %v2441
      %v2443 = vpop.f32.mrf.mxu0
      %2444 = vdwg.mxu0
      %v2445 = vxor.u32 %v2442, 2147483648
      %v2446 = vmul.f32 %v2445, 1.442695
      %v2447 = vpow.pop %v2446
      %v2448 = vadd.f32 %v2447, 1.0
      %v2449 = vrcp.pop %v2448
      %v2450 = vmul.f32 1.0, %v2449
      %v2451 = vlaneseq
      %v2452 = vshrl.u32 %v2451, 7
      %v2453 = vsub.s32 0, %v2452
      %v2454 = vrot.slane %v2450, %v2453
      %v2455 = vmul.f32 %v2250, %v2454
      %v2456 = vmul.f32 %v2251, %v2454
      %v2457 = vmul.f32 %v2252, %v2454
      %v2458 = vmul.f32 %v2253, %v2454
      %v2459 = vmul.f32 %v2254, %v2454
      %v2460 = vmul.f32 %v2255, %v2454
      %v2461 = vmul.f32 %v2256, %v2454
      %v2462 = vmul.f32 %v2257, %v2454
      %v2463 = vld [vmem:[%s10] sm:$0xff]
      %v2464 = vld [vmem:[%s10 + $0x8] sm:$0xff]
      %v2465 = vld [vmem:[%s11] sm:$0x1]
      %v2467 = vlaneseq
      %v2468 = vshrl.u32 %v2467, 7
      %v2469 = vsub.s32 0, %v2468
      %v2470 = vrot.slane %v2465, %v2469
      %v2473 = vsel %vm2258, %v2455, 0
      %v2476 = vsel %vm2258, %v2456, 0
      %v2479 = vsel %vm2258, %v2457, 0
      %v2482 = vsel %vm2258, %v2458, 0
      %v2485 = vsel %vm2258, %v2459, 0
      %v2488 = vsel %vm2258, %v2460, 0
      %v2491 = vsel %vm2258, %v2461, 0
      %v2494 = vsel %vm2258, %v2462, 0
      %2496 = vmatprep.subr.mxu0 0.0
      %2497 = vmatpush1.msra.mxu0 0.0
      %2498 = vmatprep.subr.mxu0 0.0
      %2499 = vmatpush1.msra.mxu0 0.0
      %2500 = vmatprep.subr.mxu0 0.0
      %2501 = vmatpush1.msra.mxu0 0.0
      %2502 = vmatprep.subr.mxu0 0.0
      %2503 = vmatpush1.msra.mxu0 0.0
      %2504 = vmatprep.subr.mxu0 0.0
      %2505 = vmatpush1.msra.mxu0 0.0
      %2506 = vmatprep.subr.mxu0 0.0
      %2507 = vmatpush1.msra.mxu0 0.0
      %2508 = vmatprep.subr.mxu0 0.0
      %2509 = vmatpush1.msra.mxu0 0.0
      %2510 = vmatprep.subr.mxu0 0.0
      %2511 = vmatpush1.msra.mxu0 0.0
      %2512 = vmatprep.subr.mxu0 0.0
      %2513 = vmatpush1.msra.mxu0 0.0
      %2514 = vmatprep.subr.mxu0 0.0
      %2515 = vmatpush1.msra.mxu0 0.0
      %2516 = vmatprep.subr.mxu0 0.0
      %2517 = vmatpush1.msra.mxu0 0.0
      %2518 = vmatprep.subr.mxu0 0.0
      %2519 = vmatpush1.msra.mxu0 0.0
      %2520 = vmatprep.subr.mxu0 0.0
      %2521 = vmatpush1.msra.mxu0 0.0
      %2522 = vmatprep.subr.mxu0 0.0
      %2523 = vmatpush1.msra.mxu0 0.0
      %2524 = vmatprep.subr.mxu0 0.0
      %2525 = vmatpush1.msra.mxu0 %v2464
      %2526 = vmatprep.subr.mxu0 0.0
      %2527 = vmatpush1.msra.mxu0 %v2463
      %2528 = vmatprep.subr.mxu0 0.0
      %2529 = vmatpush2.msra.mxu0 0.0
      %2530 = vmatprep.subr.mxu0 0.0
      %2531 = vmatpush2.msra.mxu0 0.0
      %2532 = vmatprep.subr.mxu0 0.0
      %2533 = vmatpush2.msra.mxu0 0.0
      %2534 = vmatprep.subr.mxu0 0.0
      %2535 = vmatpush2.msra.mxu0 0.0
      %2536 = vmatprep.subr.mxu0 0.0
      %2537 = vmatpush2.msra.mxu0 0.0
      %2538 = vmatprep.subr.mxu0 0.0
      %2539 = vmatpush2.msra.mxu0 0.0
      %2540 = vmatprep.subr.mxu0 0.0
      %2541 = vmatpush2.msra.mxu0 0.0
      %2542 = vmatprep.subr.mxu0 0.0
      %2543 = vmatpush2.msra.mxu0 0.0
      %2544 = vmatprep.subr.mxu0 0.0
      %2545 = vmatpush2.msra.mxu0 0.0
      %2546 = vmatprep.subr.mxu0 0.0
      %2547 = vmatpush2.msra.mxu0 0.0
      %2548 = vmatprep.subr.mxu0 0.0
      %2549 = vmatpush2.msra.mxu0 0.0
      %2550 = vmatprep.subr.mxu0 0.0
      %2551 = vmatpush2.msra.mxu0 0.0
      %2552 = vmatprep.subr.mxu0 0.0
      %2553 = vmatpush2.msra.mxu0 0.0
      %2554 = vmatprep.subr.mxu0 0.0
      %2555 = vmatpush2.msra.mxu0 0.0
      %2556 = vmatprep.subr.mxu0 0.0
      %2557 = vmatpush2.msra.mxu0 0.0
      %2558 = vmatprep.subr.mxu0 0.0
      %2559 = vmatpush2.msra.mxu0 0.0
      %2560 = vmatprep.mubr.f32.mxu0 0.0
      %2561 = vmatmul.mubr.f32.gmra.mxu0 %v2473
      %v2562 = vpop.f32.mrf.mxu0
      %v2563 = vadd.f32 %v2470, %v2562
      %v2564 = vpop.f32.mrf.mxu0
      %2565 = vmatprep.mubr.f32.mxu0 0.0
      %2566 = vmatmul.mubr.f32.gmra.mxu0 %v2476
      %v2567 = vpop.f32.mrf.mxu0
      %v2568 = vadd.f32 %v2470, %v2567
      %v2569 = vpop.f32.mrf.mxu0
      %2570 = vmatprep.mubr.f32.mxu0 0.0
      %2571 = vmatmul.mubr.f32.gmra.mxu0 %v2479
      %v2572 = vpop.f32.mrf.mxu0
      %v2573 = vadd.f32 %v2470, %v2572
      %v2574 = vpop.f32.mrf.mxu0
      %2575 = vmatprep.mubr.f32.mxu0 0.0
      %2576 = vmatmul.mubr.f32.gmra.mxu0 %v2482
      %v2577 = vpop.f32.mrf.mxu0
      %v2578 = vadd.f32 %v2470, %v2577
      %v2579 = vpop.f32.mrf.mxu0
      %2580 = vmatprep.mubr.f32.mxu0 0.0
      %2581 = vmatmul.mubr.f32.gmra.mxu0 %v2485
      %v2582 = vpop.f32.mrf.mxu0
      %v2583 = vadd.f32 %v2470, %v2582
      %v2584 = vpop.f32.mrf.mxu0
      %2585 = vmatprep.mubr.f32.mxu0 0.0
      %2586 = vmatmul.mubr.f32.gmra.mxu0 %v2488
      %v2587 = vpop.f32.mrf.mxu0
      %v2588 = vadd.f32 %v2470, %v2587
      %v2589 = vpop.f32.mrf.mxu0
      %2590 = vmatprep.mubr.f32.mxu0 0.0
      %2591 = vmatmul.mubr.f32.gmra.mxu0 %v2491
      %v2592 = vpop.f32.mrf.mxu0
      %v2593 = vadd.f32 %v2470, %v2592
      %v2594 = vpop.f32.mrf.mxu0
      %2595 = vmatprep.mubr.f32.mxu0 0.0
      %2596 = vmatmul.mubr.f32.gmra.mxu0 %v2494
      %v2597 = vpop.f32.mrf.mxu0
      %v2598 = vadd.f32 %v2470, %v2597
      %v2599 = vpop.f32.mrf.mxu0
      %2600 = vdwg.mxu0
      %2601 = vst.msk [vmem:[%s413] sm:$0xff] %vm494, %v2563
      %2602 = vst.msk [vmem:[%s413 + $0x8] sm:$0xff] %vm494, %v2568
      %2603 = vst.msk [vmem:[%s413 + $0x10] sm:$0xff] %vm494, %v2573
      %2604 = vst.msk [vmem:[%s413 + $0x18] sm:$0xff] %vm494, %v2578
      %2605 = vst.msk [vmem:[%s413 + $0x20] sm:$0xff] %vm494, %v2583
      %2606 = vst.msk [vmem:[%s413 + $0x28] sm:$0xff] %vm494, %v2588
      %2607 = vst.msk [vmem:[%s413 + $0x30] sm:$0xff] %vm494, %v2593
      %2608 = vst.msk [vmem:[%s413 + $0x38] sm:$0xff] %vm494, %v2598
      %p2609 = scmp.lt.s32.totalorder %s23, 1
      %s2610 = scalar_select %p2609, %s23, 1
      %s2611 = smul.addr %s2610, 8
      %s2612 = smul.addr %s2611, 8
      %s2613 = scalar_lea.vmem %s12, %s2612
      // Predicated region
      $region69: #{_lambda_.2} parent=67 // pred_check
        %p2614 = pneg %p298
      $region70: #{_lambda_.2} parent=67 // pred_check_branch
        %2616 = sbr.rel (%p2614) target = $region72
      $region71: #{_lambda_.2} parent=67 // pred_region
        _
      $region72: #{_lambda_.2} parent=67 // pred_fallthru
        _
    $region68: #{_lambda_.2} parent=5 // pred_fallthru
      _
    %p2617 = scmp.le.s32.totalorder 2, %s18
    // Predicated region
    $region73: #{_lambda_.2} parent=5 // pred_check
      %p2618 = pneg %p2617
    $region74: #{_lambda_.2} parent=5 // pred_check_branch
      %2620 = sbr.rel (%p2618) target = $region76
    $region75: #{_lambda_.2} parent=5 // pred_region
      %s2621 = ssub.s32 %s18, 2
      // Predicated region
      $region77: #{_lambda_.2} parent=75 // pred_check
        %p2622 = pneg %p304
      $region78: #{_lambda_.2} parent=75 // pred_check_branch
        %2624 = sbr.rel (%p2622) target = $region80
      $region79: #{_lambda_.2} parent=75 // pred_region
        %p2625 = scmp.lt.s32.totalorder %s24, 1
        %s2626 = scalar_select %p2625, %s24, 1
        %s2627 = smul.addr %s2626, 8
        %s2628 = smul.addr %s2627, 8
        %s2629 = scalar_lea.vmem %s12, %s2628
      $region80: #{_lambda_.2} parent=75 // pred_fallthru
        _
    $region76: #{_lambda_.2} parent=5 // pred_fallthru
      _
  $region6: #{_lambda_.2} parent=0 // loop_footer
    %s22 = sadd.s32 1, %s18
  $region7: #{_lambda_.2} parent=0 // loop_footer_branch
    %17 = sbr.rel target = $region3
  $region8: #{_lambda_.2} parent=0 // loop_exit
    _

</llo_original>
